<compile_context>
chip_gen: v5e
topology: v5e:2x2
jax: 0.10.0
libtpu: 0.0.40
codegen_flags: <defaults>
</compile_context>

<pallas_src>
import math
import jax
import jax.numpy as jnp
from jax.experimental import pallas as pl
from jax.experimental.pallas import tpu as pltpu

# ----------------------------- hyper-parameters -----------------------------
D_MODEL = 32
N_HEADS = 4
D_K = D_MODEL // N_HEADS
D_FF = 64
N_LAYERS = 2
SRC_VOCAB = 16
TGT_VOCAB = 16
LN_EPS = 1e-6       # eps added to std (not var) — Annotated Transformer
NEG_BIG = 1e9


# --------------------------- in-kernel building blocks -----------------------
def _ln(x, g, b):
    # Annotated-Transformer LayerNorm: a2*(x-mean)/(std+eps)+b2, unbiased std.
    d = x.shape[-1]
    mean = jnp.mean(x, axis=-1, keepdims=True)
    xc = x - mean
    var = jnp.sum(xc * xc, axis=-1, keepdims=True) * (1.0 / (d - 1))
    inv = pl.reciprocal(jnp.sqrt(var) + LN_EPS, approx=True)   # EUP slot
    return g * (xc * inv) + b


def _split_heads(x):                      # [T, D] -> [H, T, Dk]
    return jnp.stack([x[:, h * D_K:(h + 1) * D_K] for h in range(N_HEADS)],
                     axis=0)


def _merge_heads(x):                      # [H, T, Dk] -> [T, D]
    return jnp.concatenate([x[h] for h in range(N_HEADS)], axis=-1)


def _attention(q, k, v, mask_add):
    # q: [Tq, D]  k/v: [Tk, D]  mask_add: [Tq, Tk] additive (0 keep / -1e9 mask)
    qh, kh, vh = _split_heads(q), _split_heads(k), _split_heads(v)
    s = jnp.einsum('hqd,hkd->hqk', qh, kh,
                   preferred_element_type=jnp.float32) * (1.0 / math.sqrt(D_K))
    s = s + mask_add                                   # broadcast over heads
    m = jnp.max(s, axis=-1, keepdims=True)
    e = jnp.exp(s - m)
    p = e * pl.reciprocal(jnp.sum(e, axis=-1, keepdims=True), approx=True)
    ctx = jnp.einsum('hqk,hkd->hqd', p, vh, preferred_element_type=jnp.float32)
    return _merge_heads(ctx)


def _proj(x, w, b):
    return jnp.dot(x, w, preferred_element_type=jnp.float32) + b


# ------------------------------ fused kernel ---------------------------------
def _fused_enc_dec_kernel(*refs):
    (src_ref, tgt_ref, menc_ref, mds_ref, mdc_ref) = refs[:5]
    o_ref = refs[-1]
    (e_ln1_g, e_ln1_b, e_wqkv, e_bqkv, e_wo, e_bo, e_ln2_g, e_ln2_b,
     e_w1, e_b1, e_w2, e_b2, e_ng, e_nb,
     d_ln1_g, d_ln1_b, ds_wqkv, ds_bqkv, ds_wo, ds_bo, d_ln2_g, d_ln2_b,
     dc_wq, dc_bq, dc_wkv, dc_bkv, dc_wo, dc_bo, d_ln3_g, d_ln3_b,
     d_w1, d_b1, d_w2, d_b2, d_ng, d_nb) = refs[5:-1]

    D = D_MODEL
    m_enc = menc_ref[0]        # [Ts, Ts]
    m_ds = mds_ref[0]          # [Tt, Tt]
    m_dc = mdc_ref[0]          # [Tt, Ts]

    # --------------------------- encoder stack ---------------------------
    x = src_ref[0]                                   # [Ts, D]
    for l in range(N_LAYERS):                        # static unroll
        xn = _ln(x, e_ln1_g[l], e_ln1_b[l])
        qkv = _proj(xn, e_wqkv[l], e_bqkv[l])        # fused QKV projection
        a = _attention(qkv[:, :D], qkv[:, D:2 * D], qkv[:, 2 * D:], m_enc)
        x = x + _proj(a, e_wo[l], e_bo[l])           # residual in-kernel
        xn = _ln(x, e_ln2_g[l], e_ln2_b[l])
        h = jnp.maximum(_proj(xn, e_w1[l], e_b1[l]), 0.0)
        x = x + _proj(h, e_w2[l], e_b2[l])
    memory = _ln(x, e_ng[...], e_nb[...])            # encoder final norm

    # --------------------------- decoder stack ---------------------------
    y = tgt_ref[0]                                   # [Tt, D]
    for l in range(N_LAYERS):
        yn = _ln(y, d_ln1_g[l], d_ln1_b[l])
        qkv = _proj(yn, ds_wqkv[l], ds_bqkv[l])
        a = _attention(qkv[:, :D], qkv[:, D:2 * D], qkv[:, 2 * D:], m_ds)
        y = y + _proj(a, ds_wo[l], ds_bo[l])

        yn = _ln(y, d_ln2_g[l], d_ln2_b[l])
        q = _proj(yn, dc_wq[l], dc_bq[l])
        kv = _proj(memory, dc_wkv[l], dc_bkv[l])     # fused K/V projection
        a = _attention(q, kv[:, :D], kv[:, D:], m_dc)
        y = y + _proj(a, dc_wo[l], dc_bo[l])

        yn = _ln(y, d_ln3_g[l], d_ln3_b[l])
        h = jnp.maximum(_proj(yn, d_w1[l], d_b1[l]), 0.0)
        y = y + _proj(h, d_w2[l], d_b2[l])

    o_ref[0] = _ln(y, d_ng[...], d_nb[...])          # decoder final norm


# -------------------------------- wrapper ------------------------------------
_ENC_KEYS = ("ln1_g", "ln1_b", "wqkv", "bqkv", "wo", "bo", "ln2_g", "ln2_b",
             "w1", "b1", "w2", "b2", "norm_g", "norm_b")
_DEC_KEYS = ("ln1_g", "ln1_b", "s_wqkv", "s_bqkv", "s_wo", "s_bo",
             "ln2_g", "ln2_b", "c_wq", "c_bq", "c_wkv", "c_bkv", "c_wo", "c_bo",
             "ln3_g", "ln3_b", "w1", "b1", "w2", "b2", "norm_g", "norm_b")


def fused_encoder_decoder(src_x, tgt_x, m_enc, m_ds, m_dc, enc_p, dec_p):
    B, Ts, D = src_x.shape
    Tt = tgt_x.shape[1]

    def batched(shape):
        nd = len(shape)
        return pl.BlockSpec((1,) + tuple(shape[1:]),
                            lambda b, _nd=nd: (b,) + (0,) * (_nd - 1))

    def resident(arr):             # same block for every grid step -> no re-DMA
        nd = arr.ndim
        return pl.BlockSpec(arr.shape, lambda b, _nd=nd: (0,) * _nd)

    param_arrays = [enc_p[k] for k in _ENC_KEYS] + [dec_p[k] for k in _DEC_KEYS]
    in_specs = [batched(src_x.shape), batched(tgt_x.shape),
                batched(m_enc.shape), batched(m_ds.shape), batched(m_dc.shape)]
    in_specs += [resident(a) for a in param_arrays]

    return pl.pallas_call(
        _fused_enc_dec_kernel,
        out_shape=jax.ShapeDtypeStruct((B, Tt, D), jnp.float32),
        grid=(B,),
        in_specs=in_specs,
        out_specs=pl.BlockSpec((1, Tt, D), lambda b: (b, 0, 0)),
        compiler_params=pltpu.CompilerParams(
            dimension_semantics=("parallel",)),       # v7x megacore over batch
    )(src_x, tgt_x, m_enc, m_ds, m_dc, *param_arrays)


def encoder_decoder_forward(params, src, tgt, src_mask, tgt_mask):
    B, Ts = src.shape
    _, Tt = tgt.shape
    pe = params["pe"]
    scale = math.sqrt(D_MODEL)

    src_x = jnp.take(params["src_emb"], src, axis=0) * scale + pe[None, :Ts, :]
    tgt_x = jnp.take(params["tgt_emb"], tgt, axis=0) * scale + pe[None, :Tt, :]

    # Additive masks (0 keep / -1e9 mask) == masked_fill(mask == 0, -1e9).
    m_enc = (jnp.broadcast_to(src_mask, (B, Ts, Ts)).astype(jnp.float32) - 1.0) * NEG_BIG
    m_ds = (jnp.broadcast_to(tgt_mask, (B, Tt, Tt)).astype(jnp.float32) - 1.0) * NEG_BIG
    m_dc = (jnp.broadcast_to(src_mask, (B, Tt, Ts)).astype(jnp.float32) - 1.0) * NEG_BIG

    return fused_encoder_decoder(src_x, tgt_x, m_enc, m_ds, m_dc,
                                 params["enc"], params["dec"])


# ------------------------------ initialization -------------------------------
def positional_encoding(max_len, d_model):
    position = jnp.arange(max_len, dtype=jnp.float32)[:, None]
    div_term = jnp.exp(jnp.arange(0, d_model, 2, dtype=jnp.float32)
                       * (-math.log(10000.0) / d_model))
    pe = jnp.zeros((max_len, d_model), jnp.float32)
    pe = pe.at[:, 0::2].set(jnp.sin(position * div_term))
    pe = pe.at[:, 1::2].set(jnp.cos(position * div_term))
    return pe


def _dense_init(key, din, dout):
    limit = math.sqrt(6.0 / (din + dout))        # xavier-uniform like nn.Linear
    w = jax.random.uniform(key, (din, dout), jnp.float32, -limit, limit)
    b = jnp.zeros((1, dout), jnp.float32)
    return w, b


def _attn_init(key):
    ks = jax.random.split(key, 4)
    return [_dense_init(k, D_MODEL, D_MODEL) for k in ks]


def _stack(xs):
    return jnp.stack(xs, axis=0)


def init_params(key):
    keys = jax.random.split(key, 64)
    ki = iter(keys)
    params = {
        "src_emb": jax.random.normal(next(ki), (SRC_VOCAB, D_MODEL), jnp.float32),
        "tgt_emb": jax.random.normal(next(ki), (TGT_VOCAB, D_MODEL), jnp.float32),
    }
    ones = jnp.ones((1, D_MODEL), jnp.float32)
    zeros = jnp.zeros((1, D_MODEL), jnp.float32)

    # ---- encoder ----
    wqkv, bqkv, wo, bo = [], [], [], []
    w1s, b1s, w2s, b2s = [], [], [], []
    for _ in range(N_LAYERS):
        (wq, bq), (wk, bk), (wv, bv), (wout, bout) = _attn_init(next(ki))
        wqkv.append(jnp.concatenate([wq, wk, wv], axis=1))
        bqkv.append(jnp.concatenate([bq, bk, bv], axis=1))
        wo.append(wout); bo.append(bout)
        w1, b1 = _dense_init(next(ki), D_MODEL, D_FF)
        w2, b2 = _dense_init(next(ki), D_FF, D_MODEL)
        w1s.append(w1); b1s.append(b1); w2s.append(w2); b2s.append(b2)
    params["enc"] = {
        "ln1_g": _stack([ones] * N_LAYERS), "ln1_b": _stack([zeros] * N_LAYERS),
        "wqkv": _stack(wqkv), "bqkv": _stack(bqkv),
        "wo": _stack(wo), "bo": _stack(bo),
        "ln2_g": _stack([ones] * N_LAYERS), "ln2_b": _stack([zeros] * N_LAYERS),
        "w1": _stack(w1s), "b1": _stack(b1s), "w2": _stack(w2s), "b2": _stack(b2s),
        "norm_g": ones, "norm_b": zeros,
    }

    # ---- decoder ----
    s_wqkv, s_bqkv, s_wo, s_bo = [], [], [], []
    c_wq, c_bq, c_wkv, c_bkv, c_wo, c_bo = [], [], [], [], [], []
    w1s, b1s, w2s, b2s = [], [], [], []
    for _ in range(N_LAYERS):
        (wq, bq), (wk, bk), (wv, bv), (wout, bout) = _attn_init(next(ki))
        s_wqkv.append(jnp.concatenate([wq, wk, wv], axis=1))
        s_bqkv.append(jnp.concatenate([bq, bk, bv], axis=1))
        s_wo.append(wout); s_bo.append(bout)
        (wq, bq), (wk, bk), (wv, bv), (wout, bout) = _attn_init(next(ki))
        c_wq.append(wq); c_bq.append(bq)
        c_wkv.append(jnp.concatenate([wk, wv], axis=1))
        c_bkv.append(jnp.concatenate([bk, bv], axis=1))
        c_wo.append(wout); c_bo.append(bout)
        w1, b1 = _dense_init(next(ki), D_MODEL, D_FF)
        w2, b2 = _dense_init(next(ki), D_FF, D_MODEL)
        w1s.append(w1); b1s.append(b1); w2s.append(w2); b2s.append(b2)
    params["dec"] = {
        "ln1_g": _stack([ones] * N_LAYERS), "ln1_b": _stack([zeros] * N_LAYERS),
        "s_wqkv": _stack(s_wqkv), "s_bqkv": _stack(s_bqkv),
        "s_wo": _stack(s_wo), "s_bo": _stack(s_bo),
        "ln2_g": _stack([ones] * N_LAYERS), "ln2_b": _stack([zeros] * N_LAYERS),
        "c_wq": _stack(c_wq), "c_bq": _stack(c_bq),
        "c_wkv": _stack(c_wkv), "c_bkv": _stack(c_bkv),
        "c_wo": _stack(c_wo), "c_bo": _stack(c_bo),
        "ln3_g": _stack([ones] * N_LAYERS), "ln3_b": _stack([zeros] * N_LAYERS),
        "w1": _stack(w1s), "b1": _stack(b1s), "w2": _stack(w2s), "b2": _stack(b2s),
        "norm_g": ones, "norm_b": zeros,
    }
    return params


# ----------------------------------- main ------------------------------------
if __name__ == "__main__":
    key = jax.random.PRNGKey(0)
    k_p, k_src, k_tgt = jax.random.split(key, 3)

    B, Ts, Tt = 2, 8, 8
    params = init_params(k_p)
    params["pe"] = positional_encoding(max(Ts, Tt), D_MODEL)

    src = jax.random.randint(k_src, (B, Ts), 0, SRC_VOCAB, dtype=jnp.int32)
    tgt = jax.random.randint(k_tgt, (B, Tt), 0, TGT_VOCAB, dtype=jnp.int32)
    src_mask = jnp.ones((B, 1, Ts), jnp.float32)                               # pad mask (all valid)
    tgt_mask = jnp.broadcast_to(jnp.tril(jnp.ones((Tt, Tt), jnp.float32))[None],
                                (B, Tt, Tt))                                   # causal mask

    fwd = jax.jit(encoder_decoder_forward)
    out = fwd(params, src, tgt, src_mask, tgt_mask)
    jax.block_until_ready(out)

    assert out.shape == (B, Tt, D_MODEL), out.shape
    assert bool(jnp.all(jnp.isfinite(out)))
    print("KERNEL_OK")
</pallas_src>

<mosaic_0001>
module attributes {stable_mosaic.version = 11 : i64} {
  func.func @_fused_enc_dec_kernel(%arg0: i32, %arg1: memref<1x8x32xf32, #tpu.memory_space<vmem>>, %arg2: memref<1x8x32xf32, #tpu.memory_space<vmem>>, %arg3: memref<1x8x8xf32, #tpu.memory_space<vmem>>, %arg4: memref<1x8x8xf32, #tpu.memory_space<vmem>>, %arg5: memref<1x8x8xf32, #tpu.memory_space<vmem>>, %arg6: memref<2x1x32xf32, #tpu.memory_space<vmem>>, %arg7: memref<2x1x32xf32, #tpu.memory_space<vmem>>, %arg8: memref<2x32x96xf32, #tpu.memory_space<vmem>>, %arg9: memref<2x1x96xf32, #tpu.memory_space<vmem>>, %arg10: memref<2x32x32xf32, #tpu.memory_space<vmem>>, %arg11: memref<2x1x32xf32, #tpu.memory_space<vmem>>, %arg12: memref<2x1x32xf32, #tpu.memory_space<vmem>>, %arg13: memref<2x1x32xf32, #tpu.memory_space<vmem>>, %arg14: memref<2x32x64xf32, #tpu.memory_space<vmem>>, %arg15: memref<2x1x64xf32, #tpu.memory_space<vmem>>, %arg16: memref<2x64x32xf32, #tpu.memory_space<vmem>>, %arg17: memref<2x1x32xf32, #tpu.memory_space<vmem>>, %arg18: memref<1x32xf32, #tpu.memory_space<vmem>>, %arg19: memref<1x32xf32, #tpu.memory_space<vmem>>, %arg20: memref<2x1x32xf32, #tpu.memory_space<vmem>>, %arg21: memref<2x1x32xf32, #tpu.memory_space<vmem>>, %arg22: memref<2x32x96xf32, #tpu.memory_space<vmem>>, %arg23: memref<2x1x96xf32, #tpu.memory_space<vmem>>, %arg24: memref<2x32x32xf32, #tpu.memory_space<vmem>>, %arg25: memref<2x1x32xf32, #tpu.memory_space<vmem>>, %arg26: memref<2x1x32xf32, #tpu.memory_space<vmem>>, %arg27: memref<2x1x32xf32, #tpu.memory_space<vmem>>, %arg28: memref<2x32x32xf32, #tpu.memory_space<vmem>>, %arg29: memref<2x1x32xf32, #tpu.memory_space<vmem>>, %arg30: memref<2x32x64xf32, #tpu.memory_space<vmem>>, %arg31: memref<2x1x64xf32, #tpu.memory_space<vmem>>, %arg32: memref<2x32x32xf32, #tpu.memory_space<vmem>>, %arg33: memref<2x1x32xf32, #tpu.memory_space<vmem>>, %arg34: memref<2x1x32xf32, #tpu.memory_space<vmem>>, %arg35: memref<2x1x32xf32, #tpu.memory_space<vmem>>, %arg36: memref<2x32x64xf32, #tpu.memory_space<vmem>>, %arg37: memref<2x1x64xf32, #tpu.memory_space<vmem>>, %arg38: memref<2x64x32xf32, #tpu.memory_space<vmem>>, %arg39: memref<2x1x32xf32, #tpu.memory_space<vmem>>, %arg40: memref<1x32xf32, #tpu.memory_space<vmem>>, %arg41: memref<1x32xf32, #tpu.memory_space<vmem>>, %arg42: memref<1x8x32xf32, #tpu.memory_space<vmem>>) attributes {dimension_semantics = [#tpu.dimension_semantics<parallel>], iteration_bounds = array<i64: 2>, scalar_prefetch = 0 : i64, scratch_operands = 0 : i64, tpu.core_type = #tpu.core_type<tc>, window_params = [{transform_indices = @transform_0, window_bounds = array<i64: 1, 8, 32>}, {transform_indices = @transform_1, window_bounds = array<i64: 1, 8, 32>}, {transform_indices = @transform_2, window_bounds = array<i64: 1, 8, 8>}, {transform_indices = @transform_3, window_bounds = array<i64: 1, 8, 8>}, {transform_indices = @transform_4, window_bounds = array<i64: 1, 8, 8>}, {pipeline_mode = #tpu.pipeline_mode<synchronous>, transform_indices = @transform_5, window_bounds = array<i64: 2, 1, 32>}, {pipeline_mode = #tpu.pipeline_mode<synchronous>, transform_indices = @transform_6, window_bounds = array<i64: 2, 1, 32>}, {pipeline_mode = #tpu.pipeline_mode<synchronous>, transform_indices = @transform_7, window_bounds = array<i64: 2, 32, 96>}, {pipeline_mode = #tpu.pipeline_mode<synchronous>, transform_indices = @transform_8, window_bounds = array<i64: 2, 1, 96>}, {pipeline_mode = #tpu.pipeline_mode<synchronous>, transform_indices = @transform_9, window_bounds = array<i64: 2, 32, 32>}, {pipeline_mode = #tpu.pipeline_mode<synchronous>, transform_indices = @transform_10, window_bounds = array<i64: 2, 1, 32>}, {pipeline_mode = #tpu.pipeline_mode<synchronous>, transform_indices = @transform_11, window_bounds = array<i64: 2, 1, 32>}, {pipeline_mode = #tpu.pipeline_mode<synchronous>, transform_indices = @transform_12, window_bounds = array<i64: 2, 1, 32>}, {pipeline_mode = #tpu.pipeline_mode<synchronous>, transform_indices = @transform_13, window_bounds = array<i64: 2, 32, 64>}, {pipeline_mode = #tpu.pipeline_mode<synchronous>, transform_indices = @transform_14, window_bounds = array<i64: 2, 1, 64>}, {pipeline_mode = #tpu.pipeline_mode<synchronous>, transform_indices = @transform_15, window_bounds = array<i64: 2, 64, 32>}, {pipeline_mode = #tpu.pipeline_mode<synchronous>, transform_indices = @transform_16, window_bounds = array<i64: 2, 1, 32>}, {pipeline_mode = #tpu.pipeline_mode<synchronous>, transform_indices = @transform_17, window_bounds = array<i64: 1, 32>}, {pipeline_mode = #tpu.pipeline_mode<synchronous>, transform_indices = @transform_18, window_bounds = array<i64: 1, 32>}, {pipeline_mode = #tpu.pipeline_mode<synchronous>, transform_indices = @transform_19, window_bounds = array<i64: 2, 1, 32>}, {pipeline_mode = #tpu.pipeline_mode<synchronous>, transform_indices = @transform_20, window_bounds = array<i64: 2, 1, 32>}, {pipeline_mode = #tpu.pipeline_mode<synchronous>, transform_indices = @transform_21, window_bounds = array<i64: 2, 32, 96>}, {pipeline_mode = #tpu.pipeline_mode<synchronous>, transform_indices = @transform_22, window_bounds = array<i64: 2, 1, 96>}, {pipeline_mode = #tpu.pipeline_mode<synchronous>, transform_indices = @transform_23, window_bounds = array<i64: 2, 32, 32>}, {pipeline_mode = #tpu.pipeline_mode<synchronous>, transform_indices = @transform_24, window_bounds = array<i64: 2, 1, 32>}, {pipeline_mode = #tpu.pipeline_mode<synchronous>, transform_indices = @transform_25, window_bounds = array<i64: 2, 1, 32>}, {pipeline_mode = #tpu.pipeline_mode<synchronous>, transform_indices = @transform_26, window_bounds = array<i64: 2, 1, 32>}, {pipeline_mode = #tpu.pipeline_mode<synchronous>, transform_indices = @transform_27, window_bounds = array<i64: 2, 32, 32>}, {pipeline_mode = #tpu.pipeline_mode<synchronous>, transform_indices = @transform_28, window_bounds = array<i64: 2, 1, 32>}, {pipeline_mode = #tpu.pipeline_mode<synchronous>, transform_indices = @transform_29, window_bounds = array<i64: 2, 32, 64>}, {pipeline_mode = #tpu.pipeline_mode<synchronous>, transform_indices = @transform_30, window_bounds = array<i64: 2, 1, 64>}, {pipeline_mode = #tpu.pipeline_mode<synchronous>, transform_indices = @transform_31, window_bounds = array<i64: 2, 32, 32>}, {pipeline_mode = #tpu.pipeline_mode<synchronous>, transform_indices = @transform_32, window_bounds = array<i64: 2, 1, 32>}, {pipeline_mode = #tpu.pipeline_mode<synchronous>, transform_indices = @transform_33, window_bounds = array<i64: 2, 1, 32>}, {pipeline_mode = #tpu.pipeline_mode<synchronous>, transform_indices = @transform_34, window_bounds = array<i64: 2, 1, 32>}, {pipeline_mode = #tpu.pipeline_mode<synchronous>, transform_indices = @transform_35, window_bounds = array<i64: 2, 32, 64>}, {pipeline_mode = #tpu.pipeline_mode<synchronous>, transform_indices = @transform_36, window_bounds = array<i64: 2, 1, 64>}, {pipeline_mode = #tpu.pipeline_mode<synchronous>, transform_indices = @transform_37, window_bounds = array<i64: 2, 64, 32>}, {pipeline_mode = #tpu.pipeline_mode<synchronous>, transform_indices = @transform_38, window_bounds = array<i64: 2, 1, 32>}, {pipeline_mode = #tpu.pipeline_mode<synchronous>, transform_indices = @transform_39, window_bounds = array<i64: 1, 32>}, {pipeline_mode = #tpu.pipeline_mode<synchronous>, transform_indices = @transform_40, window_bounds = array<i64: 1, 32>}, {transform_indices = @transform_41, window_bounds = array<i64: 1, 8, 32>}]} {
    %c0 = arith.constant 0 : index
    %c0_0 = arith.constant 0 : index
    %c0_1 = arith.constant 0 : index
    %0 = vector.load %arg3[%c0, %c0_0, %c0_1] : memref<1x8x8xf32, #tpu.memory_space<vmem>>, vector<1x8x8xf32>
    %1 = vector.shape_cast %0 : vector<1x8x8xf32> to vector<8x8xf32>
    %c0_2 = arith.constant 0 : index
    %c0_3 = arith.constant 0 : index
    %c0_4 = arith.constant 0 : index
    %2 = vector.load %arg4[%c0_2, %c0_3, %c0_4] : memref<1x8x8xf32, #tpu.memory_space<vmem>>, vector<1x8x8xf32>
    %3 = vector.shape_cast %2 : vector<1x8x8xf32> to vector<8x8xf32>
    %c0_5 = arith.constant 0 : index
    %c0_6 = arith.constant 0 : index
    %c0_7 = arith.constant 0 : index
    %4 = vector.load %arg5[%c0_5, %c0_6, %c0_7] : memref<1x8x8xf32, #tpu.memory_space<vmem>>, vector<1x8x8xf32>
    %5 = vector.shape_cast %4 : vector<1x8x8xf32> to vector<8x8xf32>
    %c0_8 = arith.constant 0 : index
    %c0_9 = arith.constant 0 : index
    %c0_10 = arith.constant 0 : index
    %6 = vector.load %arg1[%c0_8, %c0_9, %c0_10] : memref<1x8x32xf32, #tpu.memory_space<vmem>>, vector<1x8x32xf32>
    %7 = vector.shape_cast %6 : vector<1x8x32xf32> to vector<8x32xf32>
    %c0_11 = arith.constant 0 : index
    %c0_12 = arith.constant 0 : index
    %c0_13 = arith.constant 0 : index
    %8 = vector.load %arg6[%c0_11, %c0_12, %c0_13] : memref<2x1x32xf32, #tpu.memory_space<vmem>>, vector<1x1x32xf32>
    %9 = vector.shape_cast %8 : vector<1x1x32xf32> to vector<1x32xf32>
    %c0_14 = arith.constant 0 : index
    %c0_15 = arith.constant 0 : index
    %c0_16 = arith.constant 0 : index
    %10 = vector.load %arg7[%c0_14, %c0_15, %c0_16] : memref<2x1x32xf32, #tpu.memory_space<vmem>>, vector<1x1x32xf32>
    %11 = vector.shape_cast %10 : vector<1x1x32xf32> to vector<1x32xf32>
    %cst = arith.constant dense<0.000000e+00> : vector<8xf32>
    %12 = vector.multi_reduction <add>, %7, %cst [1] : vector<8x32xf32> to vector<8xf32>
    %13 = vector.shape_cast %12 : vector<8xf32> to vector<8x1xf32>
    %cst_17 = arith.constant 3.200000e+01 : f32
    %14 = vector.broadcast %cst_17 : f32 to vector<8x1xf32>
    %15 = arith.divf %13, %14 : vector<8x1xf32>
    %16 = vector.broadcast %15 : vector<8x1xf32> to vector<8x32xf32>
    %17 = arith.subf %7, %16 : vector<8x32xf32>
    %18 = arith.mulf %17, %17 : vector<8x32xf32>
    %cst_18 = arith.constant dense<0.000000e+00> : vector<8xf32>
    %19 = vector.multi_reduction <add>, %18, %cst_18 [1] : vector<8x32xf32> to vector<8xf32>
    %20 = vector.shape_cast %19 : vector<8xf32> to vector<8x1xf32>
    %cst_19 = arith.constant 0.0322580636 : f32
    %21 = vector.broadcast %cst_19 : f32 to vector<8x1xf32>
    %22 = arith.mulf %20, %21 : vector<8x1xf32>
    %23 = math.sqrt %22 : vector<8x1xf32>
    %cst_20 = arith.constant 9.99999997E-7 : f32
    %24 = vector.broadcast %cst_20 : f32 to vector<8x1xf32>
    %25 = arith.addf %23, %24 : vector<8x1xf32>
    %26 = tpu.reciprocal %25 {approx = true} : vector<8x1xf32> -> vector<8x1xf32>
    %27 = vector.broadcast %26 : vector<8x1xf32> to vector<8x32xf32>
    %28 = arith.mulf %17, %27 : vector<8x32xf32>
    %29 = vector.broadcast %9 : vector<1x32xf32> to vector<8x32xf32>
    %30 = arith.mulf %29, %28 : vector<8x32xf32>
    %31 = vector.broadcast %11 : vector<1x32xf32> to vector<8x32xf32>
    %32 = arith.addf %30, %31 : vector<8x32xf32>
    %c0_21 = arith.constant 0 : index
    %c0_22 = arith.constant 0 : index
    %c0_23 = arith.constant 0 : index
    %33 = vector.load %arg8[%c0_21, %c0_22, %c0_23] : memref<2x32x96xf32, #tpu.memory_space<vmem>>, vector<1x32x96xf32>
    %34 = vector.shape_cast %33 : vector<1x32x96xf32> to vector<32x96xf32>
    %c0_24 = arith.constant 0 : index
    %c0_25 = arith.constant 0 : index
    %c0_26 = arith.constant 0 : index
    %35 = vector.load %arg9[%c0_24, %c0_25, %c0_26] : memref<2x1x96xf32, #tpu.memory_space<vmem>>, vector<1x1x96xf32>
    %36 = vector.shape_cast %35 : vector<1x1x96xf32> to vector<1x96xf32>
    %cst_27 = arith.constant dense<0.000000e+00> : vector<8x96xf32>
    %37 = tpu.matmul %32, %34, %cst_27 {dimension_numbers = #tpu.dot_dimension_numbers<[1], [0], [0], [1], [0, 0, 1, 1], [], []>} : vector<8x32xf32>, vector<32x96xf32>, vector<8x96xf32> -> vector<8x96xf32>
    %38 = vector.broadcast %36 : vector<1x96xf32> to vector<8x96xf32>
    %39 = arith.addf %37, %38 : vector<8x96xf32>
    %40 = vector.extract_strided_slice %39 {offsets = [0, 0], sizes = [8, 32], strides = [1, 1]} : vector<8x96xf32> to vector<8x32xf32>
    %41 = vector.extract_strided_slice %39 {offsets = [0, 32], sizes = [8, 32], strides = [1, 1]} : vector<8x96xf32> to vector<8x32xf32>
    %42 = vector.extract_strided_slice %39 {offsets = [0, 64], sizes = [8, 32], strides = [1, 1]} : vector<8x96xf32> to vector<8x32xf32>
    %43 = vector.extract_strided_slice %40 {offsets = [0, 0], sizes = [8, 8], strides = [1, 1]} : vector<8x32xf32> to vector<8x8xf32>
    %44 = vector.extract_strided_slice %40 {offsets = [0, 8], sizes = [8, 8], strides = [1, 1]} : vector<8x32xf32> to vector<8x8xf32>
    %45 = vector.extract_strided_slice %40 {offsets = [0, 16], sizes = [8, 8], strides = [1, 1]} : vector<8x32xf32> to vector<8x8xf32>
    %46 = vector.extract_strided_slice %40 {offsets = [0, 24], sizes = [8, 8], strides = [1, 1]} : vector<8x32xf32> to vector<8x8xf32>
    %47 = vector.shape_cast %43 : vector<8x8xf32> to vector<1x8x8xf32>
    %48 = vector.shape_cast %44 : vector<8x8xf32> to vector<1x8x8xf32>
    %49 = vector.shape_cast %45 : vector<8x8xf32> to vector<1x8x8xf32>
    %50 = vector.shape_cast %46 : vector<8x8xf32> to vector<1x8x8xf32>
    %51 = tpu.concatenate %47, %48, %49, %50 in 0 : vector<1x8x8xf32>, vector<1x8x8xf32>, vector<1x8x8xf32>, vector<1x8x8xf32> -> vector<4x8x8xf32>
    %52 = vector.extract_strided_slice %41 {offsets = [0, 0], sizes = [8, 8], strides = [1, 1]} : vector<8x32xf32> to vector<8x8xf32>
    %53 = vector.extract_strided_slice %41 {offsets = [0, 8], sizes = [8, 8], strides = [1, 1]} : vector<8x32xf32> to vector<8x8xf32>
    %54 = vector.extract_strided_slice %41 {offsets = [0, 16], sizes = [8, 8], strides = [1, 1]} : vector<8x32xf32> to vector<8x8xf32>
    %55 = vector.extract_strided_slice %41 {offsets = [0, 24], sizes = [8, 8], strides = [1, 1]} : vector<8x32xf32> to vector<8x8xf32>
    %56 = vector.shape_cast %52 : vector<8x8xf32> to vector<1x8x8xf32>
    %57 = vector.shape_cast %53 : vector<8x8xf32> to vector<1x8x8xf32>
    %58 = vector.shape_cast %54 : vector<8x8xf32> to vector<1x8x8xf32>
    %59 = vector.shape_cast %55 : vector<8x8xf32> to vector<1x8x8xf32>
    %60 = tpu.concatenate %56, %57, %58, %59 in 0 : vector<1x8x8xf32>, vector<1x8x8xf32>, vector<1x8x8xf32>, vector<1x8x8xf32> -> vector<4x8x8xf32>
    %61 = vector.extract_strided_slice %42 {offsets = [0, 0], sizes = [8, 8], strides = [1, 1]} : vector<8x32xf32> to vector<8x8xf32>
    %62 = vector.extract_strided_slice %42 {offsets = [0, 8], sizes = [8, 8], strides = [1, 1]} : vector<8x32xf32> to vector<8x8xf32>
    %63 = vector.extract_strided_slice %42 {offsets = [0, 16], sizes = [8, 8], strides = [1, 1]} : vector<8x32xf32> to vector<8x8xf32>
    %64 = vector.extract_strided_slice %42 {offsets = [0, 24], sizes = [8, 8], strides = [1, 1]} : vector<8x32xf32> to vector<8x8xf32>
    %65 = vector.shape_cast %61 : vector<8x8xf32> to vector<1x8x8xf32>
    %66 = vector.shape_cast %62 : vector<8x8xf32> to vector<1x8x8xf32>
    %67 = vector.shape_cast %63 : vector<8x8xf32> to vector<1x8x8xf32>
    %68 = vector.shape_cast %64 : vector<8x8xf32> to vector<1x8x8xf32>
    %69 = tpu.concatenate %65, %66, %67, %68 in 0 : vector<1x8x8xf32>, vector<1x8x8xf32>, vector<1x8x8xf32>, vector<1x8x8xf32> -> vector<4x8x8xf32>
    "tpu.trace_start"() <{level = 10 : i32, message = "hqd,hkd->hqk"}> : () -> ()
    %cst_28 = arith.constant dense<0.000000e+00> : vector<4x8x8xf32>
    %70 = tpu.matmul %51, %60, %cst_28 {dimension_numbers = #tpu.dot_dimension_numbers<[2], [2], [1], [1], [0, 0, 0, 1, 1, 1], [0], [0]>} : vector<4x8x8xf32>, vector<4x8x8xf32>, vector<4x8x8xf32> -> vector<4x8x8xf32>
    "tpu.trace_stop"() : () -> ()
    %cst_29 = arith.constant 0.353553385 : f32
    %71 = vector.broadcast %cst_29 : f32 to vector<4x8x8xf32>
    %72 = arith.mulf %70, %71 : vector<4x8x8xf32>
    %73 = vector.shape_cast %1 : vector<8x8xf32> to vector<1x8x8xf32>
    %74 = vector.broadcast %73 : vector<1x8x8xf32> to vector<4x8x8xf32>
    %75 = arith.addf %72, %74 : vector<4x8x8xf32>
    %cst_30 = arith.constant dense<0xFF800000> : vector<4x8xf32>
    %76 = vector.multi_reduction <maximumf>, %75, %cst_30 [2] : vector<4x8x8xf32> to vector<4x8xf32>
    %77 = vector.shape_cast %76 : vector<4x8xf32> to vector<4x8x1xf32>
    %78 = vector.broadcast %77 : vector<4x8x1xf32> to vector<4x8x8xf32>
    %79 = arith.subf %75, %78 : vector<4x8x8xf32>
    %80 = math.exp %79 : vector<4x8x8xf32>
    %cst_31 = arith.constant dense<0.000000e+00> : vector<4x8xf32>
    %81 = vector.multi_reduction <add>, %80, %cst_31 [2] : vector<4x8x8xf32> to vector<4x8xf32>
    %82 = vector.shape_cast %81 : vector<4x8xf32> to vector<4x8x1xf32>
    %83 = tpu.reciprocal %82 {approx = true} : vector<4x8x1xf32> -> vector<4x8x1xf32>
    %84 = vector.broadcast %83 : vector<4x8x1xf32> to vector<4x8x8xf32>
    %85 = arith.mulf %80, %84 : vector<4x8x8xf32>
    "tpu.trace_start"() <{level = 10 : i32, message = "hqk,hkd->hqd"}> : () -> ()
    %cst_32 = arith.constant dense<0.000000e+00> : vector<4x8x8xf32>
    %86 = tpu.matmul %85, %69, %cst_32 {dimension_numbers = #tpu.dot_dimension_numbers<[2], [1], [1], [2], [0, 0, 0, 1, 1, 2], [0], [0]>} : vector<4x8x8xf32>, vector<4x8x8xf32>, vector<4x8x8xf32> -> vector<4x8x8xf32>
    "tpu.trace_stop"() : () -> ()
    %87 = vector.extract_strided_slice %86 {offsets = [0, 0, 0], sizes = [1, 8, 8], strides = [1, 1, 1]} : vector<4x8x8xf32> to vector<1x8x8xf32>
    %88 = vector.shape_cast %87 : vector<1x8x8xf32> to vector<8x8xf32>
    %89 = vector.extract_strided_slice %86 {offsets = [1, 0, 0], sizes = [1, 8, 8], strides = [1, 1, 1]} : vector<4x8x8xf32> to vector<1x8x8xf32>
    %90 = vector.shape_cast %89 : vector<1x8x8xf32> to vector<8x8xf32>
    %91 = vector.extract_strided_slice %86 {offsets = [2, 0, 0], sizes = [1, 8, 8], strides = [1, 1, 1]} : vector<4x8x8xf32> to vector<1x8x8xf32>
    %92 = vector.shape_cast %91 : vector<1x8x8xf32> to vector<8x8xf32>
    %93 = vector.extract_strided_slice %86 {offsets = [3, 0, 0], sizes = [1, 8, 8], strides = [1, 1, 1]} : vector<4x8x8xf32> to vector<1x8x8xf32>
    %94 = vector.shape_cast %93 : vector<1x8x8xf32> to vector<8x8xf32>
    %95 = tpu.concatenate %88, %90, %92, %94 in 1 : vector<8x8xf32>, vector<8x8xf32>, vector<8x8xf32>, vector<8x8xf32> -> vector<8x32xf32>
    %c0_33 = arith.constant 0 : index
    %c0_34 = arith.constant 0 : index
    %c0_35 = arith.constant 0 : index
    %96 = vector.load %arg10[%c0_33, %c0_34, %c0_35] : memref<2x32x32xf32, #tpu.memory_space<vmem>>, vector<1x32x32xf32>
    %97 = vector.shape_cast %96 : vector<1x32x32xf32> to vector<32x32xf32>
    %c0_36 = arith.constant 0 : index
    %c0_37 = arith.constant 0 : index
    %c0_38 = arith.constant 0 : index
    %98 = vector.load %arg11[%c0_36, %c0_37, %c0_38] : memref<2x1x32xf32, #tpu.memory_space<vmem>>, vector<1x1x32xf32>
    %99 = vector.shape_cast %98 : vector<1x1x32xf32> to vector<1x32xf32>
    %cst_39 = arith.constant dense<0.000000e+00> : vector<8x32xf32>
    %100 = tpu.matmul %95, %97, %cst_39 {dimension_numbers = #tpu.dot_dimension_numbers<[1], [0], [0], [1], [0, 0, 1, 1], [], []>} : vector<8x32xf32>, vector<32x32xf32>, vector<8x32xf32> -> vector<8x32xf32>
    %101 = vector.broadcast %99 : vector<1x32xf32> to vector<8x32xf32>
    %102 = arith.addf %100, %101 : vector<8x32xf32>
    %103 = arith.addf %7, %102 : vector<8x32xf32>
    %c0_40 = arith.constant 0 : index
    %c0_41 = arith.constant 0 : index
    %c0_42 = arith.constant 0 : index
    %104 = vector.load %arg12[%c0_40, %c0_41, %c0_42] : memref<2x1x32xf32, #tpu.memory_space<vmem>>, vector<1x1x32xf32>
    %105 = vector.shape_cast %104 : vector<1x1x32xf32> to vector<1x32xf32>
    %c0_43 = arith.constant 0 : index
    %c0_44 = arith.constant 0 : index
    %c0_45 = arith.constant 0 : index
    %106 = vector.load %arg13[%c0_43, %c0_44, %c0_45] : memref<2x1x32xf32, #tpu.memory_space<vmem>>, vector<1x1x32xf32>
    %107 = vector.shape_cast %106 : vector<1x1x32xf32> to vector<1x32xf32>
    %cst_46 = arith.constant dense<0.000000e+00> : vector<8xf32>
    %108 = vector.multi_reduction <add>, %103, %cst_46 [1] : vector<8x32xf32> to vector<8xf32>
    %109 = vector.shape_cast %108 : vector<8xf32> to vector<8x1xf32>
    %cst_47 = arith.constant 3.200000e+01 : f32
    %110 = vector.broadcast %cst_47 : f32 to vector<8x1xf32>
    %111 = arith.divf %109, %110 : vector<8x1xf32>
    %112 = vector.broadcast %111 : vector<8x1xf32> to vector<8x32xf32>
    %113 = arith.subf %103, %112 : vector<8x32xf32>
    %114 = arith.mulf %113, %113 : vector<8x32xf32>
    %cst_48 = arith.constant dense<0.000000e+00> : vector<8xf32>
    %115 = vector.multi_reduction <add>, %114, %cst_48 [1] : vector<8x32xf32> to vector<8xf32>
    %116 = vector.shape_cast %115 : vector<8xf32> to vector<8x1xf32>
    %cst_49 = arith.constant 0.0322580636 : f32
    %117 = vector.broadcast %cst_49 : f32 to vector<8x1xf32>
    %118 = arith.mulf %116, %117 : vector<8x1xf32>
    %119 = math.sqrt %118 : vector<8x1xf32>
    %cst_50 = arith.constant 9.99999997E-7 : f32
    %120 = vector.broadcast %cst_50 : f32 to vector<8x1xf32>
    %121 = arith.addf %119, %120 : vector<8x1xf32>
    %122 = tpu.reciprocal %121 {approx = true} : vector<8x1xf32> -> vector<8x1xf32>
    %123 = vector.broadcast %122 : vector<8x1xf32> to vector<8x32xf32>
    %124 = arith.mulf %113, %123 : vector<8x32xf32>
    %125 = vector.broadcast %105 : vector<1x32xf32> to vector<8x32xf32>
    %126 = arith.mulf %125, %124 : vector<8x32xf32>
    %127 = vector.broadcast %107 : vector<1x32xf32> to vector<8x32xf32>
    %128 = arith.addf %126, %127 : vector<8x32xf32>
    %c0_51 = arith.constant 0 : index
    %c0_52 = arith.constant 0 : index
    %c0_53 = arith.constant 0 : index
    %129 = vector.load %arg14[%c0_51, %c0_52, %c0_53] : memref<2x32x64xf32, #tpu.memory_space<vmem>>, vector<1x32x64xf32>
    %130 = vector.shape_cast %129 : vector<1x32x64xf32> to vector<32x64xf32>
    %c0_54 = arith.constant 0 : index
    %c0_55 = arith.constant 0 : index
    %c0_56 = arith.constant 0 : index
    %131 = vector.load %arg15[%c0_54, %c0_55, %c0_56] : memref<2x1x64xf32, #tpu.memory_space<vmem>>, vector<1x1x64xf32>
    %132 = vector.shape_cast %131 : vector<1x1x64xf32> to vector<1x64xf32>
    %cst_57 = arith.constant dense<0.000000e+00> : vector<8x64xf32>
    %133 = tpu.matmul %128, %130, %cst_57 {dimension_numbers = #tpu.dot_dimension_numbers<[1], [0], [0], [1], [0, 0, 1, 1], [], []>} : vector<8x32xf32>, vector<32x64xf32>, vector<8x64xf32> -> vector<8x64xf32>
    %134 = vector.broadcast %132 : vector<1x64xf32> to vector<8x64xf32>
    %135 = arith.addf %133, %134 : vector<8x64xf32>
    %cst_58 = arith.constant 0.000000e+00 : f32
    %136 = vector.broadcast %cst_58 : f32 to vector<8x64xf32>
    %137 = arith.maximumf %135, %136 : vector<8x64xf32>
    %c0_59 = arith.constant 0 : index
    %c0_60 = arith.constant 0 : index
    %c0_61 = arith.constant 0 : index
    %138 = vector.load %arg16[%c0_59, %c0_60, %c0_61] : memref<2x64x32xf32, #tpu.memory_space<vmem>>, vector<1x64x32xf32>
    %139 = vector.shape_cast %138 : vector<1x64x32xf32> to vector<64x32xf32>
    %c0_62 = arith.constant 0 : index
    %c0_63 = arith.constant 0 : index
    %c0_64 = arith.constant 0 : index
    %140 = vector.load %arg17[%c0_62, %c0_63, %c0_64] : memref<2x1x32xf32, #tpu.memory_space<vmem>>, vector<1x1x32xf32>
    %141 = vector.shape_cast %140 : vector<1x1x32xf32> to vector<1x32xf32>
    %cst_65 = arith.constant dense<0.000000e+00> : vector<8x32xf32>
    %142 = tpu.matmul %137, %139, %cst_65 {dimension_numbers = #tpu.dot_dimension_numbers<[1], [0], [0], [1], [0, 0, 1, 1], [], []>} : vector<8x64xf32>, vector<64x32xf32>, vector<8x32xf32> -> vector<8x32xf32>
    %143 = vector.broadcast %141 : vector<1x32xf32> to vector<8x32xf32>
    %144 = arith.addf %142, %143 : vector<8x32xf32>
    %145 = arith.addf %103, %144 : vector<8x32xf32>
    %c1 = arith.constant 1 : index
    %c0_66 = arith.constant 0 : index
    %c0_67 = arith.constant 0 : index
    %146 = vector.load %arg6[%c1, %c0_66, %c0_67] : memref<2x1x32xf32, #tpu.memory_space<vmem>>, vector<1x1x32xf32>
    %147 = vector.shape_cast %146 : vector<1x1x32xf32> to vector<1x32xf32>
    %c1_68 = arith.constant 1 : index
    %c0_69 = arith.constant 0 : index
    %c0_70 = arith.constant 0 : index
    %148 = vector.load %arg7[%c1_68, %c0_69, %c0_70] : memref<2x1x32xf32, #tpu.memory_space<vmem>>, vector<1x1x32xf32>
    %149 = vector.shape_cast %148 : vector<1x1x32xf32> to vector<1x32xf32>
    %cst_71 = arith.constant dense<0.000000e+00> : vector<8xf32>
    %150 = vector.multi_reduction <add>, %145, %cst_71 [1] : vector<8x32xf32> to vector<8xf32>
    %151 = vector.shape_cast %150 : vector<8xf32> to vector<8x1xf32>
    %cst_72 = arith.constant 3.200000e+01 : f32
    %152 = vector.broadcast %cst_72 : f32 to vector<8x1xf32>
    %153 = arith.divf %151, %152 : vector<8x1xf32>
    %154 = vector.broadcast %153 : vector<8x1xf32> to vector<8x32xf32>
    %155 = arith.subf %145, %154 : vector<8x32xf32>
    %156 = arith.mulf %155, %155 : vector<8x32xf32>
    %cst_73 = arith.constant dense<0.000000e+00> : vector<8xf32>
    %157 = vector.multi_reduction <add>, %156, %cst_73 [1] : vector<8x32xf32> to vector<8xf32>
    %158 = vector.shape_cast %157 : vector<8xf32> to vector<8x1xf32>
    %cst_74 = arith.constant 0.0322580636 : f32
    %159 = vector.broadcast %cst_74 : f32 to vector<8x1xf32>
    %160 = arith.mulf %158, %159 : vector<8x1xf32>
    %161 = math.sqrt %160 : vector<8x1xf32>
    %cst_75 = arith.constant 9.99999997E-7 : f32
    %162 = vector.broadcast %cst_75 : f32 to vector<8x1xf32>
    %163 = arith.addf %161, %162 : vector<8x1xf32>
    %164 = tpu.reciprocal %163 {approx = true} : vector<8x1xf32> -> vector<8x1xf32>
    %165 = vector.broadcast %164 : vector<8x1xf32> to vector<8x32xf32>
    %166 = arith.mulf %155, %165 : vector<8x32xf32>
    %167 = vector.broadcast %147 : vector<1x32xf32> to vector<8x32xf32>
    %168 = arith.mulf %167, %166 : vector<8x32xf32>
    %169 = vector.broadcast %149 : vector<1x32xf32> to vector<8x32xf32>
    %170 = arith.addf %168, %169 : vector<8x32xf32>
    %c1_76 = arith.constant 1 : index
    %c0_77 = arith.constant 0 : index
    %c0_78 = arith.constant 0 : index
    %171 = vector.load %arg8[%c1_76, %c0_77, %c0_78] : memref<2x32x96xf32, #tpu.memory_space<vmem>>, vector<1x32x96xf32>
    %172 = vector.shape_cast %171 : vector<1x32x96xf32> to vector<32x96xf32>
    %c1_79 = arith.constant 1 : index
    %c0_80 = arith.constant 0 : index
    %c0_81 = arith.constant 0 : index
    %173 = vector.load %arg9[%c1_79, %c0_80, %c0_81] : memref<2x1x96xf32, #tpu.memory_space<vmem>>, vector<1x1x96xf32>
    %174 = vector.shape_cast %173 : vector<1x1x96xf32> to vector<1x96xf32>
    %cst_82 = arith.constant dense<0.000000e+00> : vector<8x96xf32>
    %175 = tpu.matmul %170, %172, %cst_82 {dimension_numbers = #tpu.dot_dimension_numbers<[1], [0], [0], [1], [0, 0, 1, 1], [], []>} : vector<8x32xf32>, vector<32x96xf32>, vector<8x96xf32> -> vector<8x96xf32>
    %176 = vector.broadcast %174 : vector<1x96xf32> to vector<8x96xf32>
    %177 = arith.addf %175, %176 : vector<8x96xf32>
    %178 = vector.extract_strided_slice %177 {offsets = [0, 0], sizes = [8, 32], strides = [1, 1]} : vector<8x96xf32> to vector<8x32xf32>
    %179 = vector.extract_strided_slice %177 {offsets = [0, 32], sizes = [8, 32], strides = [1, 1]} : vector<8x96xf32> to vector<8x32xf32>
    %180 = vector.extract_strided_slice %177 {offsets = [0, 64], sizes = [8, 32], strides = [1, 1]} : vector<8x96xf32> to vector<8x32xf32>
    %181 = vector.extract_strided_slice %178 {offsets = [0, 0], sizes = [8, 8], strides = [1, 1]} : vector<8x32xf32> to vector<8x8xf32>
    %182 = vector.extract_strided_slice %178 {offsets = [0, 8], sizes = [8, 8], strides = [1, 1]} : vector<8x32xf32> to vector<8x8xf32>
    %183 = vector.extract_strided_slice %178 {offsets = [0, 16], sizes = [8, 8], strides = [1, 1]} : vector<8x32xf32> to vector<8x8xf32>
    %184 = vector.extract_strided_slice %178 {offsets = [0, 24], sizes = [8, 8], strides = [1, 1]} : vector<8x32xf32> to vector<8x8xf32>
    %185 = vector.shape_cast %181 : vector<8x8xf32> to vector<1x8x8xf32>
    %186 = vector.shape_cast %182 : vector<8x8xf32> to vector<1x8x8xf32>
    %187 = vector.shape_cast %183 : vector<8x8xf32> to vector<1x8x8xf32>
    %188 = vector.shape_cast %184 : vector<8x8xf32> to vector<1x8x8xf32>
    %189 = tpu.concatenate %185, %186, %187, %188 in 0 : vector<1x8x8xf32>, vector<1x8x8xf32>, vector<1x8x8xf32>, vector<1x8x8xf32> -> vector<4x8x8xf32>
    %190 = vector.extract_strided_slice %179 {offsets = [0, 0], sizes = [8, 8], strides = [1, 1]} : vector<8x32xf32> to vector<8x8xf32>
    %191 = vector.extract_strided_slice %179 {offsets = [0, 8], sizes = [8, 8], strides = [1, 1]} : vector<8x32xf32> to vector<8x8xf32>
    %192 = vector.extract_strided_slice %179 {offsets = [0, 16], sizes = [8, 8], strides = [1, 1]} : vector<8x32xf32> to vector<8x8xf32>
    %193 = vector.extract_strided_slice %179 {offsets = [0, 24], sizes = [8, 8], strides = [1, 1]} : vector<8x32xf32> to vector<8x8xf32>
    %194 = vector.shape_cast %190 : vector<8x8xf32> to vector<1x8x8xf32>
    %195 = vector.shape_cast %191 : vector<8x8xf32> to vector<1x8x8xf32>
    %196 = vector.shape_cast %192 : vector<8x8xf32> to vector<1x8x8xf32>
    %197 = vector.shape_cast %193 : vector<8x8xf32> to vector<1x8x8xf32>
    %198 = tpu.concatenate %194, %195, %196, %197 in 0 : vector<1x8x8xf32>, vector<1x8x8xf32>, vector<1x8x8xf32>, vector<1x8x8xf32> -> vector<4x8x8xf32>
    %199 = vector.extract_strided_slice %180 {offsets = [0, 0], sizes = [8, 8], strides = [1, 1]} : vector<8x32xf32> to vector<8x8xf32>
    %200 = vector.extract_strided_slice %180 {offsets = [0, 8], sizes = [8, 8], strides = [1, 1]} : vector<8x32xf32> to vector<8x8xf32>
    %201 = vector.extract_strided_slice %180 {offsets = [0, 16], sizes = [8, 8], strides = [1, 1]} : vector<8x32xf32> to vector<8x8xf32>
    %202 = vector.extract_strided_slice %180 {offsets = [0, 24], sizes = [8, 8], strides = [1, 1]} : vector<8x32xf32> to vector<8x8xf32>
    %203 = vector.shape_cast %199 : vector<8x8xf32> to vector<1x8x8xf32>
    %204 = vector.shape_cast %200 : vector<8x8xf32> to vector<1x8x8xf32>
    %205 = vector.shape_cast %201 : vector<8x8xf32> to vector<1x8x8xf32>
    %206 = vector.shape_cast %202 : vector<8x8xf32> to vector<1x8x8xf32>
    %207 = tpu.concatenate %203, %204, %205, %206 in 0 : vector<1x8x8xf32>, vector<1x8x8xf32>, vector<1x8x8xf32>, vector<1x8x8xf32> -> vector<4x8x8xf32>
    "tpu.trace_start"() <{level = 10 : i32, message = "hqd,hkd->hqk"}> : () -> ()
    %cst_83 = arith.constant dense<0.000000e+00> : vector<4x8x8xf32>
    %208 = tpu.matmul %189, %198, %cst_83 {dimension_numbers = #tpu.dot_dimension_numbers<[2], [2], [1], [1], [0, 0, 0, 1, 1, 1], [0], [0]>} : vector<4x8x8xf32>, vector<4x8x8xf32>, vector<4x8x8xf32> -> vector<4x8x8xf32>
    "tpu.trace_stop"() : () -> ()
    %cst_84 = arith.constant 0.353553385 : f32
    %209 = vector.broadcast %cst_84 : f32 to vector<4x8x8xf32>
    %210 = arith.mulf %208, %209 : vector<4x8x8xf32>
    %211 = vector.shape_cast %1 : vector<8x8xf32> to vector<1x8x8xf32>
    %212 = vector.broadcast %211 : vector<1x8x8xf32> to vector<4x8x8xf32>
    %213 = arith.addf %210, %212 : vector<4x8x8xf32>
    %cst_85 = arith.constant dense<0xFF800000> : vector<4x8xf32>
    %214 = vector.multi_reduction <maximumf>, %213, %cst_85 [2] : vector<4x8x8xf32> to vector<4x8xf32>
    %215 = vector.shape_cast %214 : vector<4x8xf32> to vector<4x8x1xf32>
    %216 = vector.broadcast %215 : vector<4x8x1xf32> to vector<4x8x8xf32>
    %217 = arith.subf %213, %216 : vector<4x8x8xf32>
    %218 = math.exp %217 : vector<4x8x8xf32>
    %cst_86 = arith.constant dense<0.000000e+00> : vector<4x8xf32>
    %219 = vector.multi_reduction <add>, %218, %cst_86 [2] : vector<4x8x8xf32> to vector<4x8xf32>
    %220 = vector.shape_cast %219 : vector<4x8xf32> to vector<4x8x1xf32>
    %221 = tpu.reciprocal %220 {approx = true} : vector<4x8x1xf32> -> vector<4x8x1xf32>
    %222 = vector.broadcast %221 : vector<4x8x1xf32> to vector<4x8x8xf32>
    %223 = arith.mulf %218, %222 : vector<4x8x8xf32>
    "tpu.trace_start"() <{level = 10 : i32, message = "hqk,hkd->hqd"}> : () -> ()
    %cst_87 = arith.constant dense<0.000000e+00> : vector<4x8x8xf32>
    %224 = tpu.matmul %223, %207, %cst_87 {dimension_numbers = #tpu.dot_dimension_numbers<[2], [1], [1], [2], [0, 0, 0, 1, 1, 2], [0], [0]>} : vector<4x8x8xf32>, vector<4x8x8xf32>, vector<4x8x8xf32> -> vector<4x8x8xf32>
    "tpu.trace_stop"() : () -> ()
    %225 = vector.extract_strided_slice %224 {offsets = [0, 0, 0], sizes = [1, 8, 8], strides = [1, 1, 1]} : vector<4x8x8xf32> to vector<1x8x8xf32>
    %226 = vector.shape_cast %225 : vector<1x8x8xf32> to vector<8x8xf32>
    %227 = vector.extract_strided_slice %224 {offsets = [1, 0, 0], sizes = [1, 8, 8], strides = [1, 1, 1]} : vector<4x8x8xf32> to vector<1x8x8xf32>
    %228 = vector.shape_cast %227 : vector<1x8x8xf32> to vector<8x8xf32>
    %229 = vector.extract_strided_slice %224 {offsets = [2, 0, 0], sizes = [1, 8, 8], strides = [1, 1, 1]} : vector<4x8x8xf32> to vector<1x8x8xf32>
    %230 = vector.shape_cast %229 : vector<1x8x8xf32> to vector<8x8xf32>
    %231 = vector.extract_strided_slice %224 {offsets = [3, 0, 0], sizes = [1, 8, 8], strides = [1, 1, 1]} : vector<4x8x8xf32> to vector<1x8x8xf32>
    %232 = vector.shape_cast %231 : vector<1x8x8xf32> to vector<8x8xf32>
    %233 = tpu.concatenate %226, %228, %230, %232 in 1 : vector<8x8xf32>, vector<8x8xf32>, vector<8x8xf32>, vector<8x8xf32> -> vector<8x32xf32>
    %c1_88 = arith.constant 1 : index
    %c0_89 = arith.constant 0 : index
    %c0_90 = arith.constant 0 : index
    %234 = vector.load %arg10[%c1_88, %c0_89, %c0_90] : memref<2x32x32xf32, #tpu.memory_space<vmem>>, vector<1x32x32xf32>
    %235 = vector.shape_cast %234 : vector<1x32x32xf32> to vector<32x32xf32>
    %c1_91 = arith.constant 1 : index
    %c0_92 = arith.constant 0 : index
    %c0_93 = arith.constant 0 : index
    %236 = vector.load %arg11[%c1_91, %c0_92, %c0_93] : memref<2x1x32xf32, #tpu.memory_space<vmem>>, vector<1x1x32xf32>
    %237 = vector.shape_cast %236 : vector<1x1x32xf32> to vector<1x32xf32>
    %cst_94 = arith.constant dense<0.000000e+00> : vector<8x32xf32>
    %238 = tpu.matmul %233, %235, %cst_94 {dimension_numbers = #tpu.dot_dimension_numbers<[1], [0], [0], [1], [0, 0, 1, 1], [], []>} : vector<8x32xf32>, vector<32x32xf32>, vector<8x32xf32> -> vector<8x32xf32>
    %239 = vector.broadcast %237 : vector<1x32xf32> to vector<8x32xf32>
    %240 = arith.addf %238, %239 : vector<8x32xf32>
    %241 = arith.addf %145, %240 : vector<8x32xf32>
    %c1_95 = arith.constant 1 : index
    %c0_96 = arith.constant 0 : index
    %c0_97 = arith.constant 0 : index
    %242 = vector.load %arg12[%c1_95, %c0_96, %c0_97] : memref<2x1x32xf32, #tpu.memory_space<vmem>>, vector<1x1x32xf32>
    %243 = vector.shape_cast %242 : vector<1x1x32xf32> to vector<1x32xf32>
    %c1_98 = arith.constant 1 : index
    %c0_99 = arith.constant 0 : index
    %c0_100 = arith.constant 0 : index
    %244 = vector.load %arg13[%c1_98, %c0_99, %c0_100] : memref<2x1x32xf32, #tpu.memory_space<vmem>>, vector<1x1x32xf32>
    %245 = vector.shape_cast %244 : vector<1x1x32xf32> to vector<1x32xf32>
    %cst_101 = arith.constant dense<0.000000e+00> : vector<8xf32>
    %246 = vector.multi_reduction <add>, %241, %cst_101 [1] : vector<8x32xf32> to vector<8xf32>
    %247 = vector.shape_cast %246 : vector<8xf32> to vector<8x1xf32>
    %cst_102 = arith.constant 3.200000e+01 : f32
    %248 = vector.broadcast %cst_102 : f32 to vector<8x1xf32>
    %249 = arith.divf %247, %248 : vector<8x1xf32>
    %250 = vector.broadcast %249 : vector<8x1xf32> to vector<8x32xf32>
    %251 = arith.subf %241, %250 : vector<8x32xf32>
    %252 = arith.mulf %251, %251 : vector<8x32xf32>
    %cst_103 = arith.constant dense<0.000000e+00> : vector<8xf32>
    %253 = vector.multi_reduction <add>, %252, %cst_103 [1] : vector<8x32xf32> to vector<8xf32>
    %254 = vector.shape_cast %253 : vector<8xf32> to vector<8x1xf32>
    %cst_104 = arith.constant 0.0322580636 : f32
    %255 = vector.broadcast %cst_104 : f32 to vector<8x1xf32>
    %256 = arith.mulf %254, %255 : vector<8x1xf32>
    %257 = math.sqrt %256 : vector<8x1xf32>
    %cst_105 = arith.constant 9.99999997E-7 : f32
    %258 = vector.broadcast %cst_105 : f32 to vector<8x1xf32>
    %259 = arith.addf %257, %258 : vector<8x1xf32>
    %260 = tpu.reciprocal %259 {approx = true} : vector<8x1xf32> -> vector<8x1xf32>
    %261 = vector.broadcast %260 : vector<8x1xf32> to vector<8x32xf32>
    %262 = arith.mulf %251, %261 : vector<8x32xf32>
    %263 = vector.broadcast %243 : vector<1x32xf32> to vector<8x32xf32>
    %264 = arith.mulf %263, %262 : vector<8x32xf32>
    %265 = vector.broadcast %245 : vector<1x32xf32> to vector<8x32xf32>
    %266 = arith.addf %264, %265 : vector<8x32xf32>
    %c1_106 = arith.constant 1 : index
    %c0_107 = arith.constant 0 : index
    %c0_108 = arith.constant 0 : index
    %267 = vector.load %arg14[%c1_106, %c0_107, %c0_108] : memref<2x32x64xf32, #tpu.memory_space<vmem>>, vector<1x32x64xf32>
    %268 = vector.shape_cast %267 : vector<1x32x64xf32> to vector<32x64xf32>
    %c1_109 = arith.constant 1 : index
    %c0_110 = arith.constant 0 : index
    %c0_111 = arith.constant 0 : index
    %269 = vector.load %arg15[%c1_109, %c0_110, %c0_111] : memref<2x1x64xf32, #tpu.memory_space<vmem>>, vector<1x1x64xf32>
    %270 = vector.shape_cast %269 : vector<1x1x64xf32> to vector<1x64xf32>
    %cst_112 = arith.constant dense<0.000000e+00> : vector<8x64xf32>
    %271 = tpu.matmul %266, %268, %cst_112 {dimension_numbers = #tpu.dot_dimension_numbers<[1], [0], [0], [1], [0, 0, 1, 1], [], []>} : vector<8x32xf32>, vector<32x64xf32>, vector<8x64xf32> -> vector<8x64xf32>
    %272 = vector.broadcast %270 : vector<1x64xf32> to vector<8x64xf32>
    %273 = arith.addf %271, %272 : vector<8x64xf32>
    %cst_113 = arith.constant 0.000000e+00 : f32
    %274 = vector.broadcast %cst_113 : f32 to vector<8x64xf32>
    %275 = arith.maximumf %273, %274 : vector<8x64xf32>
    %c1_114 = arith.constant 1 : index
    %c0_115 = arith.constant 0 : index
    %c0_116 = arith.constant 0 : index
    %276 = vector.load %arg16[%c1_114, %c0_115, %c0_116] : memref<2x64x32xf32, #tpu.memory_space<vmem>>, vector<1x64x32xf32>
    %277 = vector.shape_cast %276 : vector<1x64x32xf32> to vector<64x32xf32>
    %c1_117 = arith.constant 1 : index
    %c0_118 = arith.constant 0 : index
    %c0_119 = arith.constant 0 : index
    %278 = vector.load %arg17[%c1_117, %c0_118, %c0_119] : memref<2x1x32xf32, #tpu.memory_space<vmem>>, vector<1x1x32xf32>
    %279 = vector.shape_cast %278 : vector<1x1x32xf32> to vector<1x32xf32>
    %cst_120 = arith.constant dense<0.000000e+00> : vector<8x32xf32>
    %280 = tpu.matmul %275, %277, %cst_120 {dimension_numbers = #tpu.dot_dimension_numbers<[1], [0], [0], [1], [0, 0, 1, 1], [], []>} : vector<8x64xf32>, vector<64x32xf32>, vector<8x32xf32> -> vector<8x32xf32>
    %281 = vector.broadcast %279 : vector<1x32xf32> to vector<8x32xf32>
    %282 = arith.addf %280, %281 : vector<8x32xf32>
    %283 = arith.addf %241, %282 : vector<8x32xf32>
    %c0_121 = arith.constant 0 : index
    %c0_122 = arith.constant 0 : index
    %284 = vector.load %arg18[%c0_121, %c0_122] : memref<1x32xf32, #tpu.memory_space<vmem>>, vector<1x32xf32>
    %c0_123 = arith.constant 0 : index
    %c0_124 = arith.constant 0 : index
    %285 = vector.load %arg19[%c0_123, %c0_124] : memref<1x32xf32, #tpu.memory_space<vmem>>, vector<1x32xf32>
    %cst_125 = arith.constant dense<0.000000e+00> : vector<8xf32>
    %286 = vector.multi_reduction <add>, %283, %cst_125 [1] : vector<8x32xf32> to vector<8xf32>
    %287 = vector.shape_cast %286 : vector<8xf32> to vector<8x1xf32>
    %cst_126 = arith.constant 3.200000e+01 : f32
    %288 = vector.broadcast %cst_126 : f32 to vector<8x1xf32>
    %289 = arith.divf %287, %288 : vector<8x1xf32>
    %290 = vector.broadcast %289 : vector<8x1xf32> to vector<8x32xf32>
    %291 = arith.subf %283, %290 : vector<8x32xf32>
    %292 = arith.mulf %291, %291 : vector<8x32xf32>
    %cst_127 = arith.constant dense<0.000000e+00> : vector<8xf32>
    %293 = vector.multi_reduction <add>, %292, %cst_127 [1] : vector<8x32xf32> to vector<8xf32>
    %294 = vector.shape_cast %293 : vector<8xf32> to vector<8x1xf32>
    %cst_128 = arith.constant 0.0322580636 : f32
    %295 = vector.broadcast %cst_128 : f32 to vector<8x1xf32>
    %296 = arith.mulf %294, %295 : vector<8x1xf32>
    %297 = math.sqrt %296 : vector<8x1xf32>
    %cst_129 = arith.constant 9.99999997E-7 : f32
    %298 = vector.broadcast %cst_129 : f32 to vector<8x1xf32>
    %299 = arith.addf %297, %298 : vector<8x1xf32>
    %300 = tpu.reciprocal %299 {approx = true} : vector<8x1xf32> -> vector<8x1xf32>
    %301 = vector.broadcast %300 : vector<8x1xf32> to vector<8x32xf32>
    %302 = arith.mulf %291, %301 : vector<8x32xf32>
    %303 = vector.broadcast %284 : vector<1x32xf32> to vector<8x32xf32>
    %304 = arith.mulf %303, %302 : vector<8x32xf32>
    %305 = vector.broadcast %285 : vector<1x32xf32> to vector<8x32xf32>
    %306 = arith.addf %304, %305 : vector<8x32xf32>
    %c0_130 = arith.constant 0 : index
    %c0_131 = arith.constant 0 : index
    %c0_132 = arith.constant 0 : index
    %307 = vector.load %arg2[%c0_130, %c0_131, %c0_132] : memref<1x8x32xf32, #tpu.memory_space<vmem>>, vector<1x8x32xf32>
    %308 = vector.shape_cast %307 : vector<1x8x32xf32> to vector<8x32xf32>
    %c0_133 = arith.constant 0 : index
    %c0_134 = arith.constant 0 : index
    %c0_135 = arith.constant 0 : index
    %309 = vector.load %arg20[%c0_133, %c0_134, %c0_135] : memref<2x1x32xf32, #tpu.memory_space<vmem>>, vector<1x1x32xf32>
    %310 = vector.shape_cast %309 : vector<1x1x32xf32> to vector<1x32xf32>
    %c0_136 = arith.constant 0 : index
    %c0_137 = arith.constant 0 : index
    %c0_138 = arith.constant 0 : index
    %311 = vector.load %arg21[%c0_136, %c0_137, %c0_138] : memref<2x1x32xf32, #tpu.memory_space<vmem>>, vector<1x1x32xf32>
    %312 = vector.shape_cast %311 : vector<1x1x32xf32> to vector<1x32xf32>
    %cst_139 = arith.constant dense<0.000000e+00> : vector<8xf32>
    %313 = vector.multi_reduction <add>, %308, %cst_139 [1] : vector<8x32xf32> to vector<8xf32>
    %314 = vector.shape_cast %313 : vector<8xf32> to vector<8x1xf32>
    %cst_140 = arith.constant 3.200000e+01 : f32
    %315 = vector.broadcast %cst_140 : f32 to vector<8x1xf32>
    %316 = arith.divf %314, %315 : vector<8x1xf32>
    %317 = vector.broadcast %316 : vector<8x1xf32> to vector<8x32xf32>
    %318 = arith.subf %308, %317 : vector<8x32xf32>
    %319 = arith.mulf %318, %318 : vector<8x32xf32>
    %cst_141 = arith.constant dense<0.000000e+00> : vector<8xf32>
    %320 = vector.multi_reduction <add>, %319, %cst_141 [1] : vector<8x32xf32> to vector<8xf32>
    %321 = vector.shape_cast %320 : vector<8xf32> to vector<8x1xf32>
    %cst_142 = arith.constant 0.0322580636 : f32
    %322 = vector.broadcast %cst_142 : f32 to vector<8x1xf32>
    %323 = arith.mulf %321, %322 : vector<8x1xf32>
    %324 = math.sqrt %323 : vector<8x1xf32>
    %cst_143 = arith.constant 9.99999997E-7 : f32
    %325 = vector.broadcast %cst_143 : f32 to vector<8x1xf32>
    %326 = arith.addf %324, %325 : vector<8x1xf32>
    %327 = tpu.reciprocal %326 {approx = true} : vector<8x1xf32> -> vector<8x1xf32>
    %328 = vector.broadcast %327 : vector<8x1xf32> to vector<8x32xf32>
    %329 = arith.mulf %318, %328 : vector<8x32xf32>
    %330 = vector.broadcast %310 : vector<1x32xf32> to vector<8x32xf32>
    %331 = arith.mulf %330, %329 : vector<8x32xf32>
    %332 = vector.broadcast %312 : vector<1x32xf32> to vector<8x32xf32>
    %333 = arith.addf %331, %332 : vector<8x32xf32>
    %c0_144 = arith.constant 0 : index
    %c0_145 = arith.constant 0 : index
    %c0_146 = arith.constant 0 : index
    %334 = vector.load %arg22[%c0_144, %c0_145, %c0_146] : memref<2x32x96xf32, #tpu.memory_space<vmem>>, vector<1x32x96xf32>
    %335 = vector.shape_cast %334 : vector<1x32x96xf32> to vector<32x96xf32>
    %c0_147 = arith.constant 0 : index
    %c0_148 = arith.constant 0 : index
    %c0_149 = arith.constant 0 : index
    %336 = vector.load %arg23[%c0_147, %c0_148, %c0_149] : memref<2x1x96xf32, #tpu.memory_space<vmem>>, vector<1x1x96xf32>
    %337 = vector.shape_cast %336 : vector<1x1x96xf32> to vector<1x96xf32>
    %cst_150 = arith.constant dense<0.000000e+00> : vector<8x96xf32>
    %338 = tpu.matmul %333, %335, %cst_150 {dimension_numbers = #tpu.dot_dimension_numbers<[1], [0], [0], [1], [0, 0, 1, 1], [], []>} : vector<8x32xf32>, vector<32x96xf32>, vector<8x96xf32> -> vector<8x96xf32>
    %339 = vector.broadcast %337 : vector<1x96xf32> to vector<8x96xf32>
    %340 = arith.addf %338, %339 : vector<8x96xf32>
    %341 = vector.extract_strided_slice %340 {offsets = [0, 0], sizes = [8, 32], strides = [1, 1]} : vector<8x96xf32> to vector<8x32xf32>
    %342 = vector.extract_strided_slice %340 {offsets = [0, 32], sizes = [8, 32], strides = [1, 1]} : vector<8x96xf32> to vector<8x32xf32>
    %343 = vector.extract_strided_slice %340 {offsets = [0, 64], sizes = [8, 32], strides = [1, 1]} : vector<8x96xf32> to vector<8x32xf32>
    %344 = vector.extract_strided_slice %341 {offsets = [0, 0], sizes = [8, 8], strides = [1, 1]} : vector<8x32xf32> to vector<8x8xf32>
    %345 = vector.extract_strided_slice %341 {offsets = [0, 8], sizes = [8, 8], strides = [1, 1]} : vector<8x32xf32> to vector<8x8xf32>
    %346 = vector.extract_strided_slice %341 {offsets = [0, 16], sizes = [8, 8], strides = [1, 1]} : vector<8x32xf32> to vector<8x8xf32>
    %347 = vector.extract_strided_slice %341 {offsets = [0, 24], sizes = [8, 8], strides = [1, 1]} : vector<8x32xf32> to vector<8x8xf32>
    %348 = vector.shape_cast %344 : vector<8x8xf32> to vector<1x8x8xf32>
    %349 = vector.shape_cast %345 : vector<8x8xf32> to vector<1x8x8xf32>
    %350 = vector.shape_cast %346 : vector<8x8xf32> to vector<1x8x8xf32>
    %351 = vector.shape_cast %347 : vector<8x8xf32> to vector<1x8x8xf32>
    %352 = tpu.concatenate %348, %349, %350, %351 in 0 : vector<1x8x8xf32>, vector<1x8x8xf32>, vector<1x8x8xf32>, vector<1x8x8xf32> -> vector<4x8x8xf32>
    %353 = vector.extract_strided_slice %342 {offsets = [0, 0], sizes = [8, 8], strides = [1, 1]} : vector<8x32xf32> to vector<8x8xf32>
    %354 = vector.extract_strided_slice %342 {offsets = [0, 8], sizes = [8, 8], strides = [1, 1]} : vector<8x32xf32> to vector<8x8xf32>
    %355 = vector.extract_strided_slice %342 {offsets = [0, 16], sizes = [8, 8], strides = [1, 1]} : vector<8x32xf32> to vector<8x8xf32>
    %356 = vector.extract_strided_slice %342 {offsets = [0, 24], sizes = [8, 8], strides = [1, 1]} : vector<8x32xf32> to vector<8x8xf32>
    %357 = vector.shape_cast %353 : vector<8x8xf32> to vector<1x8x8xf32>
    %358 = vector.shape_cast %354 : vector<8x8xf32> to vector<1x8x8xf32>
    %359 = vector.shape_cast %355 : vector<8x8xf32> to vector<1x8x8xf32>
    %360 = vector.shape_cast %356 : vector<8x8xf32> to vector<1x8x8xf32>
    %361 = tpu.concatenate %357, %358, %359, %360 in 0 : vector<1x8x8xf32>, vector<1x8x8xf32>, vector<1x8x8xf32>, vector<1x8x8xf32> -> vector<4x8x8xf32>
    %362 = vector.extract_strided_slice %343 {offsets = [0, 0], sizes = [8, 8], strides = [1, 1]} : vector<8x32xf32> to vector<8x8xf32>
    %363 = vector.extract_strided_slice %343 {offsets = [0, 8], sizes = [8, 8], strides = [1, 1]} : vector<8x32xf32> to vector<8x8xf32>
    %364 = vector.extract_strided_slice %343 {offsets = [0, 16], sizes = [8, 8], strides = [1, 1]} : vector<8x32xf32> to vector<8x8xf32>
    %365 = vector.extract_strided_slice %343 {offsets = [0, 24], sizes = [8, 8], strides = [1, 1]} : vector<8x32xf32> to vector<8x8xf32>
    %366 = vector.shape_cast %362 : vector<8x8xf32> to vector<1x8x8xf32>
    %367 = vector.shape_cast %363 : vector<8x8xf32> to vector<1x8x8xf32>
    %368 = vector.shape_cast %364 : vector<8x8xf32> to vector<1x8x8xf32>
    %369 = vector.shape_cast %365 : vector<8x8xf32> to vector<1x8x8xf32>
    %370 = tpu.concatenate %366, %367, %368, %369 in 0 : vector<1x8x8xf32>, vector<1x8x8xf32>, vector<1x8x8xf32>, vector<1x8x8xf32> -> vector<4x8x8xf32>
    "tpu.trace_start"() <{level = 10 : i32, message = "hqd,hkd->hqk"}> : () -> ()
    %cst_151 = arith.constant dense<0.000000e+00> : vector<4x8x8xf32>
    %371 = tpu.matmul %352, %361, %cst_151 {dimension_numbers = #tpu.dot_dimension_numbers<[2], [2], [1], [1], [0, 0, 0, 1, 1, 1], [0], [0]>} : vector<4x8x8xf32>, vector<4x8x8xf32>, vector<4x8x8xf32> -> vector<4x8x8xf32>
    "tpu.trace_stop"() : () -> ()
    %cst_152 = arith.constant 0.353553385 : f32
    %372 = vector.broadcast %cst_152 : f32 to vector<4x8x8xf32>
    %373 = arith.mulf %371, %372 : vector<4x8x8xf32>
    %374 = vector.shape_cast %3 : vector<8x8xf32> to vector<1x8x8xf32>
    %375 = vector.broadcast %374 : vector<1x8x8xf32> to vector<4x8x8xf32>
    %376 = arith.addf %373, %375 : vector<4x8x8xf32>
    %cst_153 = arith.constant dense<0xFF800000> : vector<4x8xf32>
    %377 = vector.multi_reduction <maximumf>, %376, %cst_153 [2] : vector<4x8x8xf32> to vector<4x8xf32>
    %378 = vector.shape_cast %377 : vector<4x8xf32> to vector<4x8x1xf32>
    %379 = vector.broadcast %378 : vector<4x8x1xf32> to vector<4x8x8xf32>
    %380 = arith.subf %376, %379 : vector<4x8x8xf32>
    %381 = math.exp %380 : vector<4x8x8xf32>
    %cst_154 = arith.constant dense<0.000000e+00> : vector<4x8xf32>
    %382 = vector.multi_reduction <add>, %381, %cst_154 [2] : vector<4x8x8xf32> to vector<4x8xf32>
    %383 = vector.shape_cast %382 : vector<4x8xf32> to vector<4x8x1xf32>
    %384 = tpu.reciprocal %383 {approx = true} : vector<4x8x1xf32> -> vector<4x8x1xf32>
    %385 = vector.broadcast %384 : vector<4x8x1xf32> to vector<4x8x8xf32>
    %386 = arith.mulf %381, %385 : vector<4x8x8xf32>
    "tpu.trace_start"() <{level = 10 : i32, message = "hqk,hkd->hqd"}> : () -> ()
    %cst_155 = arith.constant dense<0.000000e+00> : vector<4x8x8xf32>
    %387 = tpu.matmul %386, %370, %cst_155 {dimension_numbers = #tpu.dot_dimension_numbers<[2], [1], [1], [2], [0, 0, 0, 1, 1, 2], [0], [0]>} : vector<4x8x8xf32>, vector<4x8x8xf32>, vector<4x8x8xf32> -> vector<4x8x8xf32>
    "tpu.trace_stop"() : () -> ()
    %388 = vector.extract_strided_slice %387 {offsets = [0, 0, 0], sizes = [1, 8, 8], strides = [1, 1, 1]} : vector<4x8x8xf32> to vector<1x8x8xf32>
    %389 = vector.shape_cast %388 : vector<1x8x8xf32> to vector<8x8xf32>
    %390 = vector.extract_strided_slice %387 {offsets = [1, 0, 0], sizes = [1, 8, 8], strides = [1, 1, 1]} : vector<4x8x8xf32> to vector<1x8x8xf32>
    %391 = vector.shape_cast %390 : vector<1x8x8xf32> to vector<8x8xf32>
    %392 = vector.extract_strided_slice %387 {offsets = [2, 0, 0], sizes = [1, 8, 8], strides = [1, 1, 1]} : vector<4x8x8xf32> to vector<1x8x8xf32>
    %393 = vector.shape_cast %392 : vector<1x8x8xf32> to vector<8x8xf32>
    %394 = vector.extract_strided_slice %387 {offsets = [3, 0, 0], sizes = [1, 8, 8], strides = [1, 1, 1]} : vector<4x8x8xf32> to vector<1x8x8xf32>
    %395 = vector.shape_cast %394 : vector<1x8x8xf32> to vector<8x8xf32>
    %396 = tpu.concatenate %389, %391, %393, %395 in 1 : vector<8x8xf32>, vector<8x8xf32>, vector<8x8xf32>, vector<8x8xf32> -> vector<8x32xf32>
    %c0_156 = arith.constant 0 : index
    %c0_157 = arith.constant 0 : index
    %c0_158 = arith.constant 0 : index
    %397 = vector.load %arg24[%c0_156, %c0_157, %c0_158] : memref<2x32x32xf32, #tpu.memory_space<vmem>>, vector<1x32x32xf32>
    %398 = vector.shape_cast %397 : vector<1x32x32xf32> to vector<32x32xf32>
    %c0_159 = arith.constant 0 : index
    %c0_160 = arith.constant 0 : index
    %c0_161 = arith.constant 0 : index
    %399 = vector.load %arg25[%c0_159, %c0_160, %c0_161] : memref<2x1x32xf32, #tpu.memory_space<vmem>>, vector<1x1x32xf32>
    %400 = vector.shape_cast %399 : vector<1x1x32xf32> to vector<1x32xf32>
    %cst_162 = arith.constant dense<0.000000e+00> : vector<8x32xf32>
    %401 = tpu.matmul %396, %398, %cst_162 {dimension_numbers = #tpu.dot_dimension_numbers<[1], [0], [0], [1], [0, 0, 1, 1], [], []>} : vector<8x32xf32>, vector<32x32xf32>, vector<8x32xf32> -> vector<8x32xf32>
    %402 = vector.broadcast %400 : vector<1x32xf32> to vector<8x32xf32>
    %403 = arith.addf %401, %402 : vector<8x32xf32>
    %404 = arith.addf %308, %403 : vector<8x32xf32>
    %c0_163 = arith.constant 0 : index
    %c0_164 = arith.constant 0 : index
    %c0_165 = arith.constant 0 : index
    %405 = vector.load %arg26[%c0_163, %c0_164, %c0_165] : memref<2x1x32xf32, #tpu.memory_space<vmem>>, vector<1x1x32xf32>
    %406 = vector.shape_cast %405 : vector<1x1x32xf32> to vector<1x32xf32>
    %c0_166 = arith.constant 0 : index
    %c0_167 = arith.constant 0 : index
    %c0_168 = arith.constant 0 : index
    %407 = vector.load %arg27[%c0_166, %c0_167, %c0_168] : memref<2x1x32xf32, #tpu.memory_space<vmem>>, vector<1x1x32xf32>
    %408 = vector.shape_cast %407 : vector<1x1x32xf32> to vector<1x32xf32>
    %cst_169 = arith.constant dense<0.000000e+00> : vector<8xf32>
    %409 = vector.multi_reduction <add>, %404, %cst_169 [1] : vector<8x32xf32> to vector<8xf32>
    %410 = vector.shape_cast %409 : vector<8xf32> to vector<8x1xf32>
    %cst_170 = arith.constant 3.200000e+01 : f32
    %411 = vector.broadcast %cst_170 : f32 to vector<8x1xf32>
    %412 = arith.divf %410, %411 : vector<8x1xf32>
    %413 = vector.broadcast %412 : vector<8x1xf32> to vector<8x32xf32>
    %414 = arith.subf %404, %413 : vector<8x32xf32>
    %415 = arith.mulf %414, %414 : vector<8x32xf32>
    %cst_171 = arith.constant dense<0.000000e+00> : vector<8xf32>
    %416 = vector.multi_reduction <add>, %415, %cst_171 [1] : vector<8x32xf32> to vector<8xf32>
    %417 = vector.shape_cast %416 : vector<8xf32> to vector<8x1xf32>
    %cst_172 = arith.constant 0.0322580636 : f32
    %418 = vector.broadcast %cst_172 : f32 to vector<8x1xf32>
    %419 = arith.mulf %417, %418 : vector<8x1xf32>
    %420 = math.sqrt %419 : vector<8x1xf32>
    %cst_173 = arith.constant 9.99999997E-7 : f32
    %421 = vector.broadcast %cst_173 : f32 to vector<8x1xf32>
    %422 = arith.addf %420, %421 : vector<8x1xf32>
    %423 = tpu.reciprocal %422 {approx = true} : vector<8x1xf32> -> vector<8x1xf32>
    %424 = vector.broadcast %423 : vector<8x1xf32> to vector<8x32xf32>
    %425 = arith.mulf %414, %424 : vector<8x32xf32>
    %426 = vector.broadcast %406 : vector<1x32xf32> to vector<8x32xf32>
    %427 = arith.mulf %426, %425 : vector<8x32xf32>
    %428 = vector.broadcast %408 : vector<1x32xf32> to vector<8x32xf32>
    %429 = arith.addf %427, %428 : vector<8x32xf32>
    %c0_174 = arith.constant 0 : index
    %c0_175 = arith.constant 0 : index
    %c0_176 = arith.constant 0 : index
    %430 = vector.load %arg28[%c0_174, %c0_175, %c0_176] : memref<2x32x32xf32, #tpu.memory_space<vmem>>, vector<1x32x32xf32>
    %431 = vector.shape_cast %430 : vector<1x32x32xf32> to vector<32x32xf32>
    %c0_177 = arith.constant 0 : index
    %c0_178 = arith.constant 0 : index
    %c0_179 = arith.constant 0 : index
    %432 = vector.load %arg29[%c0_177, %c0_178, %c0_179] : memref<2x1x32xf32, #tpu.memory_space<vmem>>, vector<1x1x32xf32>
    %433 = vector.shape_cast %432 : vector<1x1x32xf32> to vector<1x32xf32>
    %cst_180 = arith.constant dense<0.000000e+00> : vector<8x32xf32>
    %434 = tpu.matmul %429, %431, %cst_180 {dimension_numbers = #tpu.dot_dimension_numbers<[1], [0], [0], [1], [0, 0, 1, 1], [], []>} : vector<8x32xf32>, vector<32x32xf32>, vector<8x32xf32> -> vector<8x32xf32>
    %435 = vector.broadcast %433 : vector<1x32xf32> to vector<8x32xf32>
    %436 = arith.addf %434, %435 : vector<8x32xf32>
    %c0_181 = arith.constant 0 : index
    %c0_182 = arith.constant 0 : index
    %c0_183 = arith.constant 0 : index
    %437 = vector.load %arg30[%c0_181, %c0_182, %c0_183] : memref<2x32x64xf32, #tpu.memory_space<vmem>>, vector<1x32x64xf32>
    %438 = vector.shape_cast %437 : vector<1x32x64xf32> to vector<32x64xf32>
    %c0_184 = arith.constant 0 : index
    %c0_185 = arith.constant 0 : index
    %c0_186 = arith.constant 0 : index
    %439 = vector.load %arg31[%c0_184, %c0_185, %c0_186] : memref<2x1x64xf32, #tpu.memory_space<vmem>>, vector<1x1x64xf32>
    %440 = vector.shape_cast %439 : vector<1x1x64xf32> to vector<1x64xf32>
    %cst_187 = arith.constant dense<0.000000e+00> : vector<8x64xf32>
    %441 = tpu.matmul %306, %438, %cst_187 {dimension_numbers = #tpu.dot_dimension_numbers<[1], [0], [0], [1], [0, 0, 1, 1], [], []>} : vector<8x32xf32>, vector<32x64xf32>, vector<8x64xf32> -> vector<8x64xf32>
    %442 = vector.broadcast %440 : vector<1x64xf32> to vector<8x64xf32>
    %443 = arith.addf %441, %442 : vector<8x64xf32>
    %444 = vector.extract_strided_slice %443 {offsets = [0, 0], sizes = [8, 32], strides = [1, 1]} : vector<8x64xf32> to vector<8x32xf32>
    %445 = vector.extract_strided_slice %443 {offsets = [0, 32], sizes = [8, 32], strides = [1, 1]} : vector<8x64xf32> to vector<8x32xf32>
    %446 = vector.extract_strided_slice %436 {offsets = [0, 0], sizes = [8, 8], strides = [1, 1]} : vector<8x32xf32> to vector<8x8xf32>
    %447 = vector.extract_strided_slice %436 {offsets = [0, 8], sizes = [8, 8], strides = [1, 1]} : vector<8x32xf32> to vector<8x8xf32>
    %448 = vector.extract_strided_slice %436 {offsets = [0, 16], sizes = [8, 8], strides = [1, 1]} : vector<8x32xf32> to vector<8x8xf32>
    %449 = vector.extract_strided_slice %436 {offsets = [0, 24], sizes = [8, 8], strides = [1, 1]} : vector<8x32xf32> to vector<8x8xf32>
    %450 = vector.shape_cast %446 : vector<8x8xf32> to vector<1x8x8xf32>
    %451 = vector.shape_cast %447 : vector<8x8xf32> to vector<1x8x8xf32>
    %452 = vector.shape_cast %448 : vector<8x8xf32> to vector<1x8x8xf32>
    %453 = vector.shape_cast %449 : vector<8x8xf32> to vector<1x8x8xf32>
    %454 = tpu.concatenate %450, %451, %452, %453 in 0 : vector<1x8x8xf32>, vector<1x8x8xf32>, vector<1x8x8xf32>, vector<1x8x8xf32> -> vector<4x8x8xf32>
    %455 = vector.extract_strided_slice %444 {offsets = [0, 0], sizes = [8, 8], strides = [1, 1]} : vector<8x32xf32> to vector<8x8xf32>
    %456 = vector.extract_strided_slice %444 {offsets = [0, 8], sizes = [8, 8], strides = [1, 1]} : vector<8x32xf32> to vector<8x8xf32>
    %457 = vector.extract_strided_slice %444 {offsets = [0, 16], sizes = [8, 8], strides = [1, 1]} : vector<8x32xf32> to vector<8x8xf32>
    %458 = vector.extract_strided_slice %444 {offsets = [0, 24], sizes = [8, 8], strides = [1, 1]} : vector<8x32xf32> to vector<8x8xf32>
    %459 = vector.shape_cast %455 : vector<8x8xf32> to vector<1x8x8xf32>
    %460 = vector.shape_cast %456 : vector<8x8xf32> to vector<1x8x8xf32>
    %461 = vector.shape_cast %457 : vector<8x8xf32> to vector<1x8x8xf32>
    %462 = vector.shape_cast %458 : vector<8x8xf32> to vector<1x8x8xf32>
    %463 = tpu.concatenate %459, %460, %461, %462 in 0 : vector<1x8x8xf32>, vector<1x8x8xf32>, vector<1x8x8xf32>, vector<1x8x8xf32> -> vector<4x8x8xf32>
    %464 = vector.extract_strided_slice %445 {offsets = [0, 0], sizes = [8, 8], strides = [1, 1]} : vector<8x32xf32> to vector<8x8xf32>
    %465 = vector.extract_strided_slice %445 {offsets = [0, 8], sizes = [8, 8], strides = [1, 1]} : vector<8x32xf32> to vector<8x8xf32>
    %466 = vector.extract_strided_slice %445 {offsets = [0, 16], sizes = [8, 8], strides = [1, 1]} : vector<8x32xf32> to vector<8x8xf32>
    %467 = vector.extract_strided_slice %445 {offsets = [0, 24], sizes = [8, 8], strides = [1, 1]} : vector<8x32xf32> to vector<8x8xf32>
    %468 = vector.shape_cast %464 : vector<8x8xf32> to vector<1x8x8xf32>
    %469 = vector.shape_cast %465 : vector<8x8xf32> to vector<1x8x8xf32>
    %470 = vector.shape_cast %466 : vector<8x8xf32> to vector<1x8x8xf32>
    %471 = vector.shape_cast %467 : vector<8x8xf32> to vector<1x8x8xf32>
    %472 = tpu.concatenate %468, %469, %470, %471 in 0 : vector<1x8x8xf32>, vector<1x8x8xf32>, vector<1x8x8xf32>, vector<1x8x8xf32> -> vector<4x8x8xf32>
    "tpu.trace_start"() <{level = 10 : i32, message = "hqd,hkd->hqk"}> : () -> ()
    %cst_188 = arith.constant dense<0.000000e+00> : vector<4x8x8xf32>
    %473 = tpu.matmul %454, %463, %cst_188 {dimension_numbers = #tpu.dot_dimension_numbers<[2], [2], [1], [1], [0, 0, 0, 1, 1, 1], [0], [0]>} : vector<4x8x8xf32>, vector<4x8x8xf32>, vector<4x8x8xf32> -> vector<4x8x8xf32>
    "tpu.trace_stop"() : () -> ()
    %cst_189 = arith.constant 0.353553385 : f32
    %474 = vector.broadcast %cst_189 : f32 to vector<4x8x8xf32>
    %475 = arith.mulf %473, %474 : vector<4x8x8xf32>
    %476 = vector.shape_cast %5 : vector<8x8xf32> to vector<1x8x8xf32>
    %477 = vector.broadcast %476 : vector<1x8x8xf32> to vector<4x8x8xf32>
    %478 = arith.addf %475, %477 : vector<4x8x8xf32>
    %cst_190 = arith.constant dense<0xFF800000> : vector<4x8xf32>
    %479 = vector.multi_reduction <maximumf>, %478, %cst_190 [2] : vector<4x8x8xf32> to vector<4x8xf32>
    %480 = vector.shape_cast %479 : vector<4x8xf32> to vector<4x8x1xf32>
    %481 = vector.broadcast %480 : vector<4x8x1xf32> to vector<4x8x8xf32>
    %482 = arith.subf %478, %481 : vector<4x8x8xf32>
    %483 = math.exp %482 : vector<4x8x8xf32>
    %cst_191 = arith.constant dense<0.000000e+00> : vector<4x8xf32>
    %484 = vector.multi_reduction <add>, %483, %cst_191 [2] : vector<4x8x8xf32> to vector<4x8xf32>
    %485 = vector.shape_cast %484 : vector<4x8xf32> to vector<4x8x1xf32>
    %486 = tpu.reciprocal %485 {approx = true} : vector<4x8x1xf32> -> vector<4x8x1xf32>
    %487 = vector.broadcast %486 : vector<4x8x1xf32> to vector<4x8x8xf32>
    %488 = arith.mulf %483, %487 : vector<4x8x8xf32>
    "tpu.trace_start"() <{level = 10 : i32, message = "hqk,hkd->hqd"}> : () -> ()
    %cst_192 = arith.constant dense<0.000000e+00> : vector<4x8x8xf32>
    %489 = tpu.matmul %488, %472, %cst_192 {dimension_numbers = #tpu.dot_dimension_numbers<[2], [1], [1], [2], [0, 0, 0, 1, 1, 2], [0], [0]>} : vector<4x8x8xf32>, vector<4x8x8xf32>, vector<4x8x8xf32> -> vector<4x8x8xf32>
    "tpu.trace_stop"() : () -> ()
    %490 = vector.extract_strided_slice %489 {offsets = [0, 0, 0], sizes = [1, 8, 8], strides = [1, 1, 1]} : vector<4x8x8xf32> to vector<1x8x8xf32>
    %491 = vector.shape_cast %490 : vector<1x8x8xf32> to vector<8x8xf32>
    %492 = vector.extract_strided_slice %489 {offsets = [1, 0, 0], sizes = [1, 8, 8], strides = [1, 1, 1]} : vector<4x8x8xf32> to vector<1x8x8xf32>
    %493 = vector.shape_cast %492 : vector<1x8x8xf32> to vector<8x8xf32>
    %494 = vector.extract_strided_slice %489 {offsets = [2, 0, 0], sizes = [1, 8, 8], strides = [1, 1, 1]} : vector<4x8x8xf32> to vector<1x8x8xf32>
    %495 = vector.shape_cast %494 : vector<1x8x8xf32> to vector<8x8xf32>
    %496 = vector.extract_strided_slice %489 {offsets = [3, 0, 0], sizes = [1, 8, 8], strides = [1, 1, 1]} : vector<4x8x8xf32> to vector<1x8x8xf32>
    %497 = vector.shape_cast %496 : vector<1x8x8xf32> to vector<8x8xf32>
    %498 = tpu.concatenate %491, %493, %495, %497 in 1 : vector<8x8xf32>, vector<8x8xf32>, vector<8x8xf32>, vector<8x8xf32> -> vector<8x32xf32>
    %c0_193 = arith.constant 0 : index
    %c0_194 = arith.constant 0 : index
    %c0_195 = arith.constant 0 : index
    %499 = vector.load %arg32[%c0_193, %c0_194, %c0_195] : memref<2x32x32xf32, #tpu.memory_space<vmem>>, vector<1x32x32xf32>
    %500 = vector.shape_cast %499 : vector<1x32x32xf32> to vector<32x32xf32>
    %c0_196 = arith.constant 0 : index
    %c0_197 = arith.constant 0 : index
    %c0_198 = arith.constant 0 : index
    %501 = vector.load %arg33[%c0_196, %c0_197, %c0_198] : memref<2x1x32xf32, #tpu.memory_space<vmem>>, vector<1x1x32xf32>
    %502 = vector.shape_cast %501 : vector<1x1x32xf32> to vector<1x32xf32>
    %cst_199 = arith.constant dense<0.000000e+00> : vector<8x32xf32>
    %503 = tpu.matmul %498, %500, %cst_199 {dimension_numbers = #tpu.dot_dimension_numbers<[1], [0], [0], [1], [0, 0, 1, 1], [], []>} : vector<8x32xf32>, vector<32x32xf32>, vector<8x32xf32> -> vector<8x32xf32>
    %504 = vector.broadcast %502 : vector<1x32xf32> to vector<8x32xf32>
    %505 = arith.addf %503, %504 : vector<8x32xf32>
    %506 = arith.addf %404, %505 : vector<8x32xf32>
    %c0_200 = arith.constant 0 : index
    %c0_201 = arith.constant 0 : index
    %c0_202 = arith.constant 0 : index
    %507 = vector.load %arg34[%c0_200, %c0_201, %c0_202] : memref<2x1x32xf32, #tpu.memory_space<vmem>>, vector<1x1x32xf32>
    %508 = vector.shape_cast %507 : vector<1x1x32xf32> to vector<1x32xf32>
    %c0_203 = arith.constant 0 : index
    %c0_204 = arith.constant 0 : index
    %c0_205 = arith.constant 0 : index
    %509 = vector.load %arg35[%c0_203, %c0_204, %c0_205] : memref<2x1x32xf32, #tpu.memory_space<vmem>>, vector<1x1x32xf32>
    %510 = vector.shape_cast %509 : vector<1x1x32xf32> to vector<1x32xf32>
    %cst_206 = arith.constant dense<0.000000e+00> : vector<8xf32>
    %511 = vector.multi_reduction <add>, %506, %cst_206 [1] : vector<8x32xf32> to vector<8xf32>
    %512 = vector.shape_cast %511 : vector<8xf32> to vector<8x1xf32>
    %cst_207 = arith.constant 3.200000e+01 : f32
    %513 = vector.broadcast %cst_207 : f32 to vector<8x1xf32>
    %514 = arith.divf %512, %513 : vector<8x1xf32>
    %515 = vector.broadcast %514 : vector<8x1xf32> to vector<8x32xf32>
    %516 = arith.subf %506, %515 : vector<8x32xf32>
    %517 = arith.mulf %516, %516 : vector<8x32xf32>
    %cst_208 = arith.constant dense<0.000000e+00> : vector<8xf32>
    %518 = vector.multi_reduction <add>, %517, %cst_208 [1] : vector<8x32xf32> to vector<8xf32>
    %519 = vector.shape_cast %518 : vector<8xf32> to vector<8x1xf32>
    %cst_209 = arith.constant 0.0322580636 : f32
    %520 = vector.broadcast %cst_209 : f32 to vector<8x1xf32>
    %521 = arith.mulf %519, %520 : vector<8x1xf32>
    %522 = math.sqrt %521 : vector<8x1xf32>
    %cst_210 = arith.constant 9.99999997E-7 : f32
    %523 = vector.broadcast %cst_210 : f32 to vector<8x1xf32>
    %524 = arith.addf %522, %523 : vector<8x1xf32>
    %525 = tpu.reciprocal %524 {approx = true} : vector<8x1xf32> -> vector<8x1xf32>
    %526 = vector.broadcast %525 : vector<8x1xf32> to vector<8x32xf32>
    %527 = arith.mulf %516, %526 : vector<8x32xf32>
    %528 = vector.broadcast %508 : vector<1x32xf32> to vector<8x32xf32>
    %529 = arith.mulf %528, %527 : vector<8x32xf32>
    %530 = vector.broadcast %510 : vector<1x32xf32> to vector<8x32xf32>
    %531 = arith.addf %529, %530 : vector<8x32xf32>
    %c0_211 = arith.constant 0 : index
    %c0_212 = arith.constant 0 : index
    %c0_213 = arith.constant 0 : index
    %532 = vector.load %arg36[%c0_211, %c0_212, %c0_213] : memref<2x32x64xf32, #tpu.memory_space<vmem>>, vector<1x32x64xf32>
    %533 = vector.shape_cast %532 : vector<1x32x64xf32> to vector<32x64xf32>
    %c0_214 = arith.constant 0 : index
    %c0_215 = arith.constant 0 : index
    %c0_216 = arith.constant 0 : index
    %534 = vector.load %arg37[%c0_214, %c0_215, %c0_216] : memref<2x1x64xf32, #tpu.memory_space<vmem>>, vector<1x1x64xf32>
    %535 = vector.shape_cast %534 : vector<1x1x64xf32> to vector<1x64xf32>
    %cst_217 = arith.constant dense<0.000000e+00> : vector<8x64xf32>
    %536 = tpu.matmul %531, %533, %cst_217 {dimension_numbers = #tpu.dot_dimension_numbers<[1], [0], [0], [1], [0, 0, 1, 1], [], []>} : vector<8x32xf32>, vector<32x64xf32>, vector<8x64xf32> -> vector<8x64xf32>
    %537 = vector.broadcast %535 : vector<1x64xf32> to vector<8x64xf32>
    %538 = arith.addf %536, %537 : vector<8x64xf32>
    %cst_218 = arith.constant 0.000000e+00 : f32
    %539 = vector.broadcast %cst_218 : f32 to vector<8x64xf32>
    %540 = arith.maximumf %538, %539 : vector<8x64xf32>
    %c0_219 = arith.constant 0 : index
    %c0_220 = arith.constant 0 : index
    %c0_221 = arith.constant 0 : index
    %541 = vector.load %arg38[%c0_219, %c0_220, %c0_221] : memref<2x64x32xf32, #tpu.memory_space<vmem>>, vector<1x64x32xf32>
    %542 = vector.shape_cast %541 : vector<1x64x32xf32> to vector<64x32xf32>
    %c0_222 = arith.constant 0 : index
    %c0_223 = arith.constant 0 : index
    %c0_224 = arith.constant 0 : index
    %543 = vector.load %arg39[%c0_222, %c0_223, %c0_224] : memref<2x1x32xf32, #tpu.memory_space<vmem>>, vector<1x1x32xf32>
    %544 = vector.shape_cast %543 : vector<1x1x32xf32> to vector<1x32xf32>
    %cst_225 = arith.constant dense<0.000000e+00> : vector<8x32xf32>
    %545 = tpu.matmul %540, %542, %cst_225 {dimension_numbers = #tpu.dot_dimension_numbers<[1], [0], [0], [1], [0, 0, 1, 1], [], []>} : vector<8x64xf32>, vector<64x32xf32>, vector<8x32xf32> -> vector<8x32xf32>
    %546 = vector.broadcast %544 : vector<1x32xf32> to vector<8x32xf32>
    %547 = arith.addf %545, %546 : vector<8x32xf32>
    %548 = arith.addf %506, %547 : vector<8x32xf32>
    %c1_226 = arith.constant 1 : index
    %c0_227 = arith.constant 0 : index
    %c0_228 = arith.constant 0 : index
    %549 = vector.load %arg20[%c1_226, %c0_227, %c0_228] : memref<2x1x32xf32, #tpu.memory_space<vmem>>, vector<1x1x32xf32>
    %550 = vector.shape_cast %549 : vector<1x1x32xf32> to vector<1x32xf32>
    %c1_229 = arith.constant 1 : index
    %c0_230 = arith.constant 0 : index
    %c0_231 = arith.constant 0 : index
    %551 = vector.load %arg21[%c1_229, %c0_230, %c0_231] : memref<2x1x32xf32, #tpu.memory_space<vmem>>, vector<1x1x32xf32>
    %552 = vector.shape_cast %551 : vector<1x1x32xf32> to vector<1x32xf32>
    %cst_232 = arith.constant dense<0.000000e+00> : vector<8xf32>
    %553 = vector.multi_reduction <add>, %548, %cst_232 [1] : vector<8x32xf32> to vector<8xf32>
    %554 = vector.shape_cast %553 : vector<8xf32> to vector<8x1xf32>
    %cst_233 = arith.constant 3.200000e+01 : f32
    %555 = vector.broadcast %cst_233 : f32 to vector<8x1xf32>
    %556 = arith.divf %554, %555 : vector<8x1xf32>
    %557 = vector.broadcast %556 : vector<8x1xf32> to vector<8x32xf32>
    %558 = arith.subf %548, %557 : vector<8x32xf32>
    %559 = arith.mulf %558, %558 : vector<8x32xf32>
    %cst_234 = arith.constant dense<0.000000e+00> : vector<8xf32>
    %560 = vector.multi_reduction <add>, %559, %cst_234 [1] : vector<8x32xf32> to vector<8xf32>
    %561 = vector.shape_cast %560 : vector<8xf32> to vector<8x1xf32>
    %cst_235 = arith.constant 0.0322580636 : f32
    %562 = vector.broadcast %cst_235 : f32 to vector<8x1xf32>
    %563 = arith.mulf %561, %562 : vector<8x1xf32>
    %564 = math.sqrt %563 : vector<8x1xf32>
    %cst_236 = arith.constant 9.99999997E-7 : f32
    %565 = vector.broadcast %cst_236 : f32 to vector<8x1xf32>
    %566 = arith.addf %564, %565 : vector<8x1xf32>
    %567 = tpu.reciprocal %566 {approx = true} : vector<8x1xf32> -> vector<8x1xf32>
    %568 = vector.broadcast %567 : vector<8x1xf32> to vector<8x32xf32>
    %569 = arith.mulf %558, %568 : vector<8x32xf32>
    %570 = vector.broadcast %550 : vector<1x32xf32> to vector<8x32xf32>
    %571 = arith.mulf %570, %569 : vector<8x32xf32>
    %572 = vector.broadcast %552 : vector<1x32xf32> to vector<8x32xf32>
    %573 = arith.addf %571, %572 : vector<8x32xf32>
    %c1_237 = arith.constant 1 : index
    %c0_238 = arith.constant 0 : index
    %c0_239 = arith.constant 0 : index
    %574 = vector.load %arg22[%c1_237, %c0_238, %c0_239] : memref<2x32x96xf32, #tpu.memory_space<vmem>>, vector<1x32x96xf32>
    %575 = vector.shape_cast %574 : vector<1x32x96xf32> to vector<32x96xf32>
    %c1_240 = arith.constant 1 : index
    %c0_241 = arith.constant 0 : index
    %c0_242 = arith.constant 0 : index
    %576 = vector.load %arg23[%c1_240, %c0_241, %c0_242] : memref<2x1x96xf32, #tpu.memory_space<vmem>>, vector<1x1x96xf32>
    %577 = vector.shape_cast %576 : vector<1x1x96xf32> to vector<1x96xf32>
    %cst_243 = arith.constant dense<0.000000e+00> : vector<8x96xf32>
    %578 = tpu.matmul %573, %575, %cst_243 {dimension_numbers = #tpu.dot_dimension_numbers<[1], [0], [0], [1], [0, 0, 1, 1], [], []>} : vector<8x32xf32>, vector<32x96xf32>, vector<8x96xf32> -> vector<8x96xf32>
    %579 = vector.broadcast %577 : vector<1x96xf32> to vector<8x96xf32>
    %580 = arith.addf %578, %579 : vector<8x96xf32>
    %581 = vector.extract_strided_slice %580 {offsets = [0, 0], sizes = [8, 32], strides = [1, 1]} : vector<8x96xf32> to vector<8x32xf32>
    %582 = vector.extract_strided_slice %580 {offsets = [0, 32], sizes = [8, 32], strides = [1, 1]} : vector<8x96xf32> to vector<8x32xf32>
    %583 = vector.extract_strided_slice %580 {offsets = [0, 64], sizes = [8, 32], strides = [1, 1]} : vector<8x96xf32> to vector<8x32xf32>
    %584 = vector.extract_strided_slice %581 {offsets = [0, 0], sizes = [8, 8], strides = [1, 1]} : vector<8x32xf32> to vector<8x8xf32>
    %585 = vector.extract_strided_slice %581 {offsets = [0, 8], sizes = [8, 8], strides = [1, 1]} : vector<8x32xf32> to vector<8x8xf32>
    %586 = vector.extract_strided_slice %581 {offsets = [0, 16], sizes = [8, 8], strides = [1, 1]} : vector<8x32xf32> to vector<8x8xf32>
    %587 = vector.extract_strided_slice %581 {offsets = [0, 24], sizes = [8, 8], strides = [1, 1]} : vector<8x32xf32> to vector<8x8xf32>
    %588 = vector.shape_cast %584 : vector<8x8xf32> to vector<1x8x8xf32>
    %589 = vector.shape_cast %585 : vector<8x8xf32> to vector<1x8x8xf32>
    %590 = vector.shape_cast %586 : vector<8x8xf32> to vector<1x8x8xf32>
    %591 = vector.shape_cast %587 : vector<8x8xf32> to vector<1x8x8xf32>
    %592 = tpu.concatenate %588, %589, %590, %591 in 0 : vector<1x8x8xf32>, vector<1x8x8xf32>, vector<1x8x8xf32>, vector<1x8x8xf32> -> vector<4x8x8xf32>
    %593 = vector.extract_strided_slice %582 {offsets = [0, 0], sizes = [8, 8], strides = [1, 1]} : vector<8x32xf32> to vector<8x8xf32>
    %594 = vector.extract_strided_slice %582 {offsets = [0, 8], sizes = [8, 8], strides = [1, 1]} : vector<8x32xf32> to vector<8x8xf32>
    %595 = vector.extract_strided_slice %582 {offsets = [0, 16], sizes = [8, 8], strides = [1, 1]} : vector<8x32xf32> to vector<8x8xf32>
    %596 = vector.extract_strided_slice %582 {offsets = [0, 24], sizes = [8, 8], strides = [1, 1]} : vector<8x32xf32> to vector<8x8xf32>
    %597 = vector.shape_cast %593 : vector<8x8xf32> to vector<1x8x8xf32>
    %598 = vector.shape_cast %594 : vector<8x8xf32> to vector<1x8x8xf32>
    %599 = vector.shape_cast %595 : vector<8x8xf32> to vector<1x8x8xf32>
    %600 = vector.shape_cast %596 : vector<8x8xf32> to vector<1x8x8xf32>
    %601 = tpu.concatenate %597, %598, %599, %600 in 0 : vector<1x8x8xf32>, vector<1x8x8xf32>, vector<1x8x8xf32>, vector<1x8x8xf32> -> vector<4x8x8xf32>
    %602 = vector.extract_strided_slice %583 {offsets = [0, 0], sizes = [8, 8], strides = [1, 1]} : vector<8x32xf32> to vector<8x8xf32>
    %603 = vector.extract_strided_slice %583 {offsets = [0, 8], sizes = [8, 8], strides = [1, 1]} : vector<8x32xf32> to vector<8x8xf32>
    %604 = vector.extract_strided_slice %583 {offsets = [0, 16], sizes = [8, 8], strides = [1, 1]} : vector<8x32xf32> to vector<8x8xf32>
    %605 = vector.extract_strided_slice %583 {offsets = [0, 24], sizes = [8, 8], strides = [1, 1]} : vector<8x32xf32> to vector<8x8xf32>
    %606 = vector.shape_cast %602 : vector<8x8xf32> to vector<1x8x8xf32>
    %607 = vector.shape_cast %603 : vector<8x8xf32> to vector<1x8x8xf32>
    %608 = vector.shape_cast %604 : vector<8x8xf32> to vector<1x8x8xf32>
    %609 = vector.shape_cast %605 : vector<8x8xf32> to vector<1x8x8xf32>
    %610 = tpu.concatenate %606, %607, %608, %609 in 0 : vector<1x8x8xf32>, vector<1x8x8xf32>, vector<1x8x8xf32>, vector<1x8x8xf32> -> vector<4x8x8xf32>
    "tpu.trace_start"() <{level = 10 : i32, message = "hqd,hkd->hqk"}> : () -> ()
    %cst_244 = arith.constant dense<0.000000e+00> : vector<4x8x8xf32>
    %611 = tpu.matmul %592, %601, %cst_244 {dimension_numbers = #tpu.dot_dimension_numbers<[2], [2], [1], [1], [0, 0, 0, 1, 1, 1], [0], [0]>} : vector<4x8x8xf32>, vector<4x8x8xf32>, vector<4x8x8xf32> -> vector<4x8x8xf32>
    "tpu.trace_stop"() : () -> ()
    %cst_245 = arith.constant 0.353553385 : f32
    %612 = vector.broadcast %cst_245 : f32 to vector<4x8x8xf32>
    %613 = arith.mulf %611, %612 : vector<4x8x8xf32>
    %614 = vector.shape_cast %3 : vector<8x8xf32> to vector<1x8x8xf32>
    %615 = vector.broadcast %614 : vector<1x8x8xf32> to vector<4x8x8xf32>
    %616 = arith.addf %613, %615 : vector<4x8x8xf32>
    %cst_246 = arith.constant dense<0xFF800000> : vector<4x8xf32>
    %617 = vector.multi_reduction <maximumf>, %616, %cst_246 [2] : vector<4x8x8xf32> to vector<4x8xf32>
    %618 = vector.shape_cast %617 : vector<4x8xf32> to vector<4x8x1xf32>
    %619 = vector.broadcast %618 : vector<4x8x1xf32> to vector<4x8x8xf32>
    %620 = arith.subf %616, %619 : vector<4x8x8xf32>
    %621 = math.exp %620 : vector<4x8x8xf32>
    %cst_247 = arith.constant dense<0.000000e+00> : vector<4x8xf32>
    %622 = vector.multi_reduction <add>, %621, %cst_247 [2] : vector<4x8x8xf32> to vector<4x8xf32>
    %623 = vector.shape_cast %622 : vector<4x8xf32> to vector<4x8x1xf32>
    %624 = tpu.reciprocal %623 {approx = true} : vector<4x8x1xf32> -> vector<4x8x1xf32>
    %625 = vector.broadcast %624 : vector<4x8x1xf32> to vector<4x8x8xf32>
    %626 = arith.mulf %621, %625 : vector<4x8x8xf32>
    "tpu.trace_start"() <{level = 10 : i32, message = "hqk,hkd->hqd"}> : () -> ()
    %cst_248 = arith.constant dense<0.000000e+00> : vector<4x8x8xf32>
    %627 = tpu.matmul %626, %610, %cst_248 {dimension_numbers = #tpu.dot_dimension_numbers<[2], [1], [1], [2], [0, 0, 0, 1, 1, 2], [0], [0]>} : vector<4x8x8xf32>, vector<4x8x8xf32>, vector<4x8x8xf32> -> vector<4x8x8xf32>
    "tpu.trace_stop"() : () -> ()
    %628 = vector.extract_strided_slice %627 {offsets = [0, 0, 0], sizes = [1, 8, 8], strides = [1, 1, 1]} : vector<4x8x8xf32> to vector<1x8x8xf32>
    %629 = vector.shape_cast %628 : vector<1x8x8xf32> to vector<8x8xf32>
    %630 = vector.extract_strided_slice %627 {offsets = [1, 0, 0], sizes = [1, 8, 8], strides = [1, 1, 1]} : vector<4x8x8xf32> to vector<1x8x8xf32>
    %631 = vector.shape_cast %630 : vector<1x8x8xf32> to vector<8x8xf32>
    %632 = vector.extract_strided_slice %627 {offsets = [2, 0, 0], sizes = [1, 8, 8], strides = [1, 1, 1]} : vector<4x8x8xf32> to vector<1x8x8xf32>
    %633 = vector.shape_cast %632 : vector<1x8x8xf32> to vector<8x8xf32>
    %634 = vector.extract_strided_slice %627 {offsets = [3, 0, 0], sizes = [1, 8, 8], strides = [1, 1, 1]} : vector<4x8x8xf32> to vector<1x8x8xf32>
    %635 = vector.shape_cast %634 : vector<1x8x8xf32> to vector<8x8xf32>
    %636 = tpu.concatenate %629, %631, %633, %635 in 1 : vector<8x8xf32>, vector<8x8xf32>, vector<8x8xf32>, vector<8x8xf32> -> vector<8x32xf32>
    %c1_249 = arith.constant 1 : index
    %c0_250 = arith.constant 0 : index
    %c0_251 = arith.constant 0 : index
    %637 = vector.load %arg24[%c1_249, %c0_250, %c0_251] : memref<2x32x32xf32, #tpu.memory_space<vmem>>, vector<1x32x32xf32>
    %638 = vector.shape_cast %637 : vector<1x32x32xf32> to vector<32x32xf32>
    %c1_252 = arith.constant 1 : index
    %c0_253 = arith.constant 0 : index
    %c0_254 = arith.constant 0 : index
    %639 = vector.load %arg25[%c1_252, %c0_253, %c0_254] : memref<2x1x32xf32, #tpu.memory_space<vmem>>, vector<1x1x32xf32>
    %640 = vector.shape_cast %639 : vector<1x1x32xf32> to vector<1x32xf32>
    %cst_255 = arith.constant dense<0.000000e+00> : vector<8x32xf32>
    %641 = tpu.matmul %636, %638, %cst_255 {dimension_numbers = #tpu.dot_dimension_numbers<[1], [0], [0], [1], [0, 0, 1, 1], [], []>} : vector<8x32xf32>, vector<32x32xf32>, vector<8x32xf32> -> vector<8x32xf32>
    %642 = vector.broadcast %640 : vector<1x32xf32> to vector<8x32xf32>
    %643 = arith.addf %641, %642 : vector<8x32xf32>
    %644 = arith.addf %548, %643 : vector<8x32xf32>
    %c1_256 = arith.constant 1 : index
    %c0_257 = arith.constant 0 : index
    %c0_258 = arith.constant 0 : index
    %645 = vector.load %arg26[%c1_256, %c0_257, %c0_258] : memref<2x1x32xf32, #tpu.memory_space<vmem>>, vector<1x1x32xf32>
    %646 = vector.shape_cast %645 : vector<1x1x32xf32> to vector<1x32xf32>
    %c1_259 = arith.constant 1 : index
    %c0_260 = arith.constant 0 : index
    %c0_261 = arith.constant 0 : index
    %647 = vector.load %arg27[%c1_259, %c0_260, %c0_261] : memref<2x1x32xf32, #tpu.memory_space<vmem>>, vector<1x1x32xf32>
    %648 = vector.shape_cast %647 : vector<1x1x32xf32> to vector<1x32xf32>
    %cst_262 = arith.constant dense<0.000000e+00> : vector<8xf32>
    %649 = vector.multi_reduction <add>, %644, %cst_262 [1] : vector<8x32xf32> to vector<8xf32>
    %650 = vector.shape_cast %649 : vector<8xf32> to vector<8x1xf32>
    %cst_263 = arith.constant 3.200000e+01 : f32
    %651 = vector.broadcast %cst_263 : f32 to vector<8x1xf32>
    %652 = arith.divf %650, %651 : vector<8x1xf32>
    %653 = vector.broadcast %652 : vector<8x1xf32> to vector<8x32xf32>
    %654 = arith.subf %644, %653 : vector<8x32xf32>
    %655 = arith.mulf %654, %654 : vector<8x32xf32>
    %cst_264 = arith.constant dense<0.000000e+00> : vector<8xf32>
    %656 = vector.multi_reduction <add>, %655, %cst_264 [1] : vector<8x32xf32> to vector<8xf32>
    %657 = vector.shape_cast %656 : vector<8xf32> to vector<8x1xf32>
    %cst_265 = arith.constant 0.0322580636 : f32
    %658 = vector.broadcast %cst_265 : f32 to vector<8x1xf32>
    %659 = arith.mulf %657, %658 : vector<8x1xf32>
    %660 = math.sqrt %659 : vector<8x1xf32>
    %cst_266 = arith.constant 9.99999997E-7 : f32
    %661 = vector.broadcast %cst_266 : f32 to vector<8x1xf32>
    %662 = arith.addf %660, %661 : vector<8x1xf32>
    %663 = tpu.reciprocal %662 {approx = true} : vector<8x1xf32> -> vector<8x1xf32>
    %664 = vector.broadcast %663 : vector<8x1xf32> to vector<8x32xf32>
    %665 = arith.mulf %654, %664 : vector<8x32xf32>
    %666 = vector.broadcast %646 : vector<1x32xf32> to vector<8x32xf32>
    %667 = arith.mulf %666, %665 : vector<8x32xf32>
    %668 = vector.broadcast %648 : vector<1x32xf32> to vector<8x32xf32>
    %669 = arith.addf %667, %668 : vector<8x32xf32>
    %c1_267 = arith.constant 1 : index
    %c0_268 = arith.constant 0 : index
    %c0_269 = arith.constant 0 : index
    %670 = vector.load %arg28[%c1_267, %c0_268, %c0_269] : memref<2x32x32xf32, #tpu.memory_space<vmem>>, vector<1x32x32xf32>
    %671 = vector.shape_cast %670 : vector<1x32x32xf32> to vector<32x32xf32>
    %c1_270 = arith.constant 1 : index
    %c0_271 = arith.constant 0 : index
    %c0_272 = arith.constant 0 : index
    %672 = vector.load %arg29[%c1_270, %c0_271, %c0_272] : memref<2x1x32xf32, #tpu.memory_space<vmem>>, vector<1x1x32xf32>
    %673 = vector.shape_cast %672 : vector<1x1x32xf32> to vector<1x32xf32>
    %cst_273 = arith.constant dense<0.000000e+00> : vector<8x32xf32>
    %674 = tpu.matmul %669, %671, %cst_273 {dimension_numbers = #tpu.dot_dimension_numbers<[1], [0], [0], [1], [0, 0, 1, 1], [], []>} : vector<8x32xf32>, vector<32x32xf32>, vector<8x32xf32> -> vector<8x32xf32>
    %675 = vector.broadcast %673 : vector<1x32xf32> to vector<8x32xf32>
    %676 = arith.addf %674, %675 : vector<8x32xf32>
    %c1_274 = arith.constant 1 : index
    %c0_275 = arith.constant 0 : index
    %c0_276 = arith.constant 0 : index
    %677 = vector.load %arg30[%c1_274, %c0_275, %c0_276] : memref<2x32x64xf32, #tpu.memory_space<vmem>>, vector<1x32x64xf32>
    %678 = vector.shape_cast %677 : vector<1x32x64xf32> to vector<32x64xf32>
    %c1_277 = arith.constant 1 : index
    %c0_278 = arith.constant 0 : index
    %c0_279 = arith.constant 0 : index
    %679 = vector.load %arg31[%c1_277, %c0_278, %c0_279] : memref<2x1x64xf32, #tpu.memory_space<vmem>>, vector<1x1x64xf32>
    %680 = vector.shape_cast %679 : vector<1x1x64xf32> to vector<1x64xf32>
    %cst_280 = arith.constant dense<0.000000e+00> : vector<8x64xf32>
    %681 = tpu.matmul %306, %678, %cst_280 {dimension_numbers = #tpu.dot_dimension_numbers<[1], [0], [0], [1], [0, 0, 1, 1], [], []>} : vector<8x32xf32>, vector<32x64xf32>, vector<8x64xf32> -> vector<8x64xf32>
    %682 = vector.broadcast %680 : vector<1x64xf32> to vector<8x64xf32>
    %683 = arith.addf %681, %682 : vector<8x64xf32>
    %684 = vector.extract_strided_slice %683 {offsets = [0, 0], sizes = [8, 32], strides = [1, 1]} : vector<8x64xf32> to vector<8x32xf32>
    %685 = vector.extract_strided_slice %683 {offsets = [0, 32], sizes = [8, 32], strides = [1, 1]} : vector<8x64xf32> to vector<8x32xf32>
    %686 = vector.extract_strided_slice %676 {offsets = [0, 0], sizes = [8, 8], strides = [1, 1]} : vector<8x32xf32> to vector<8x8xf32>
    %687 = vector.extract_strided_slice %676 {offsets = [0, 8], sizes = [8, 8], strides = [1, 1]} : vector<8x32xf32> to vector<8x8xf32>
    %688 = vector.extract_strided_slice %676 {offsets = [0, 16], sizes = [8, 8], strides = [1, 1]} : vector<8x32xf32> to vector<8x8xf32>
    %689 = vector.extract_strided_slice %676 {offsets = [0, 24], sizes = [8, 8], strides = [1, 1]} : vector<8x32xf32> to vector<8x8xf32>
    %690 = vector.shape_cast %686 : vector<8x8xf32> to vector<1x8x8xf32>
    %691 = vector.shape_cast %687 : vector<8x8xf32> to vector<1x8x8xf32>
    %692 = vector.shape_cast %688 : vector<8x8xf32> to vector<1x8x8xf32>
    %693 = vector.shape_cast %689 : vector<8x8xf32> to vector<1x8x8xf32>
    %694 = tpu.concatenate %690, %691, %692, %693 in 0 : vector<1x8x8xf32>, vector<1x8x8xf32>, vector<1x8x8xf32>, vector<1x8x8xf32> -> vector<4x8x8xf32>
    %695 = vector.extract_strided_slice %684 {offsets = [0, 0], sizes = [8, 8], strides = [1, 1]} : vector<8x32xf32> to vector<8x8xf32>
    %696 = vector.extract_strided_slice %684 {offsets = [0, 8], sizes = [8, 8], strides = [1, 1]} : vector<8x32xf32> to vector<8x8xf32>
    %697 = vector.extract_strided_slice %684 {offsets = [0, 16], sizes = [8, 8], strides = [1, 1]} : vector<8x32xf32> to vector<8x8xf32>
    %698 = vector.extract_strided_slice %684 {offsets = [0, 24], sizes = [8, 8], strides = [1, 1]} : vector<8x32xf32> to vector<8x8xf32>
    %699 = vector.shape_cast %695 : vector<8x8xf32> to vector<1x8x8xf32>
    %700 = vector.shape_cast %696 : vector<8x8xf32> to vector<1x8x8xf32>
    %701 = vector.shape_cast %697 : vector<8x8xf32> to vector<1x8x8xf32>
    %702 = vector.shape_cast %698 : vector<8x8xf32> to vector<1x8x8xf32>
    %703 = tpu.concatenate %699, %700, %701, %702 in 0 : vector<1x8x8xf32>, vector<1x8x8xf32>, vector<1x8x8xf32>, vector<1x8x8xf32> -> vector<4x8x8xf32>
    %704 = vector.extract_strided_slice %685 {offsets = [0, 0], sizes = [8, 8], strides = [1, 1]} : vector<8x32xf32> to vector<8x8xf32>
    %705 = vector.extract_strided_slice %685 {offsets = [0, 8], sizes = [8, 8], strides = [1, 1]} : vector<8x32xf32> to vector<8x8xf32>
    %706 = vector.extract_strided_slice %685 {offsets = [0, 16], sizes = [8, 8], strides = [1, 1]} : vector<8x32xf32> to vector<8x8xf32>
    %707 = vector.extract_strided_slice %685 {offsets = [0, 24], sizes = [8, 8], strides = [1, 1]} : vector<8x32xf32> to vector<8x8xf32>
    %708 = vector.shape_cast %704 : vector<8x8xf32> to vector<1x8x8xf32>
    %709 = vector.shape_cast %705 : vector<8x8xf32> to vector<1x8x8xf32>
    %710 = vector.shape_cast %706 : vector<8x8xf32> to vector<1x8x8xf32>
    %711 = vector.shape_cast %707 : vector<8x8xf32> to vector<1x8x8xf32>
    %712 = tpu.concatenate %708, %709, %710, %711 in 0 : vector<1x8x8xf32>, vector<1x8x8xf32>, vector<1x8x8xf32>, vector<1x8x8xf32> -> vector<4x8x8xf32>
    "tpu.trace_start"() <{level = 10 : i32, message = "hqd,hkd->hqk"}> : () -> ()
    %cst_281 = arith.constant dense<0.000000e+00> : vector<4x8x8xf32>
    %713 = tpu.matmul %694, %703, %cst_281 {dimension_numbers = #tpu.dot_dimension_numbers<[2], [2], [1], [1], [0, 0, 0, 1, 1, 1], [0], [0]>} : vector<4x8x8xf32>, vector<4x8x8xf32>, vector<4x8x8xf32> -> vector<4x8x8xf32>
    "tpu.trace_stop"() : () -> ()
    %cst_282 = arith.constant 0.353553385 : f32
    %714 = vector.broadcast %cst_282 : f32 to vector<4x8x8xf32>
    %715 = arith.mulf %713, %714 : vector<4x8x8xf32>
    %716 = vector.shape_cast %5 : vector<8x8xf32> to vector<1x8x8xf32>
    %717 = vector.broadcast %716 : vector<1x8x8xf32> to vector<4x8x8xf32>
    %718 = arith.addf %715, %717 : vector<4x8x8xf32>
    %cst_283 = arith.constant dense<0xFF800000> : vector<4x8xf32>
    %719 = vector.multi_reduction <maximumf>, %718, %cst_283 [2] : vector<4x8x8xf32> to vector<4x8xf32>
    %720 = vector.shape_cast %719 : vector<4x8xf32> to vector<4x8x1xf32>
    %721 = vector.broadcast %720 : vector<4x8x1xf32> to vector<4x8x8xf32>
    %722 = arith.subf %718, %721 : vector<4x8x8xf32>
    %723 = math.exp %722 : vector<4x8x8xf32>
    %cst_284 = arith.constant dense<0.000000e+00> : vector<4x8xf32>
    %724 = vector.multi_reduction <add>, %723, %cst_284 [2] : vector<4x8x8xf32> to vector<4x8xf32>
    %725 = vector.shape_cast %724 : vector<4x8xf32> to vector<4x8x1xf32>
    %726 = tpu.reciprocal %725 {approx = true} : vector<4x8x1xf32> -> vector<4x8x1xf32>
    %727 = vector.broadcast %726 : vector<4x8x1xf32> to vector<4x8x8xf32>
    %728 = arith.mulf %723, %727 : vector<4x8x8xf32>
    "tpu.trace_start"() <{level = 10 : i32, message = "hqk,hkd->hqd"}> : () -> ()
    %cst_285 = arith.constant dense<0.000000e+00> : vector<4x8x8xf32>
    %729 = tpu.matmul %728, %712, %cst_285 {dimension_numbers = #tpu.dot_dimension_numbers<[2], [1], [1], [2], [0, 0, 0, 1, 1, 2], [0], [0]>} : vector<4x8x8xf32>, vector<4x8x8xf32>, vector<4x8x8xf32> -> vector<4x8x8xf32>
    "tpu.trace_stop"() : () -> ()
    %730 = vector.extract_strided_slice %729 {offsets = [0, 0, 0], sizes = [1, 8, 8], strides = [1, 1, 1]} : vector<4x8x8xf32> to vector<1x8x8xf32>
    %731 = vector.shape_cast %730 : vector<1x8x8xf32> to vector<8x8xf32>
    %732 = vector.extract_strided_slice %729 {offsets = [1, 0, 0], sizes = [1, 8, 8], strides = [1, 1, 1]} : vector<4x8x8xf32> to vector<1x8x8xf32>
    %733 = vector.shape_cast %732 : vector<1x8x8xf32> to vector<8x8xf32>
    %734 = vector.extract_strided_slice %729 {offsets = [2, 0, 0], sizes = [1, 8, 8], strides = [1, 1, 1]} : vector<4x8x8xf32> to vector<1x8x8xf32>
    %735 = vector.shape_cast %734 : vector<1x8x8xf32> to vector<8x8xf32>
    %736 = vector.extract_strided_slice %729 {offsets = [3, 0, 0], sizes = [1, 8, 8], strides = [1, 1, 1]} : vector<4x8x8xf32> to vector<1x8x8xf32>
    %737 = vector.shape_cast %736 : vector<1x8x8xf32> to vector<8x8xf32>
    %738 = tpu.concatenate %731, %733, %735, %737 in 1 : vector<8x8xf32>, vector<8x8xf32>, vector<8x8xf32>, vector<8x8xf32> -> vector<8x32xf32>
    %c1_286 = arith.constant 1 : index
    %c0_287 = arith.constant 0 : index
    %c0_288 = arith.constant 0 : index
    %739 = vector.load %arg32[%c1_286, %c0_287, %c0_288] : memref<2x32x32xf32, #tpu.memory_space<vmem>>, vector<1x32x32xf32>
    %740 = vector.shape_cast %739 : vector<1x32x32xf32> to vector<32x32xf32>
    %c1_289 = arith.constant 1 : index
    %c0_290 = arith.constant 0 : index
    %c0_291 = arith.constant 0 : index
    %741 = vector.load %arg33[%c1_289, %c0_290, %c0_291] : memref<2x1x32xf32, #tpu.memory_space<vmem>>, vector<1x1x32xf32>
    %742 = vector.shape_cast %741 : vector<1x1x32xf32> to vector<1x32xf32>
    %cst_292 = arith.constant dense<0.000000e+00> : vector<8x32xf32>
    %743 = tpu.matmul %738, %740, %cst_292 {dimension_numbers = #tpu.dot_dimension_numbers<[1], [0], [0], [1], [0, 0, 1, 1], [], []>} : vector<8x32xf32>, vector<32x32xf32>, vector<8x32xf32> -> vector<8x32xf32>
    %744 = vector.broadcast %742 : vector<1x32xf32> to vector<8x32xf32>
    %745 = arith.addf %743, %744 : vector<8x32xf32>
    %746 = arith.addf %644, %745 : vector<8x32xf32>
    %c1_293 = arith.constant 1 : index
    %c0_294 = arith.constant 0 : index
    %c0_295 = arith.constant 0 : index
    %747 = vector.load %arg34[%c1_293, %c0_294, %c0_295] : memref<2x1x32xf32, #tpu.memory_space<vmem>>, vector<1x1x32xf32>
    %748 = vector.shape_cast %747 : vector<1x1x32xf32> to vector<1x32xf32>
    %c1_296 = arith.constant 1 : index
    %c0_297 = arith.constant 0 : index
    %c0_298 = arith.constant 0 : index
    %749 = vector.load %arg35[%c1_296, %c0_297, %c0_298] : memref<2x1x32xf32, #tpu.memory_space<vmem>>, vector<1x1x32xf32>
    %750 = vector.shape_cast %749 : vector<1x1x32xf32> to vector<1x32xf32>
    %cst_299 = arith.constant dense<0.000000e+00> : vector<8xf32>
    %751 = vector.multi_reduction <add>, %746, %cst_299 [1] : vector<8x32xf32> to vector<8xf32>
    %752 = vector.shape_cast %751 : vector<8xf32> to vector<8x1xf32>
    %cst_300 = arith.constant 3.200000e+01 : f32
    %753 = vector.broadcast %cst_300 : f32 to vector<8x1xf32>
    %754 = arith.divf %752, %753 : vector<8x1xf32>
    %755 = vector.broadcast %754 : vector<8x1xf32> to vector<8x32xf32>
    %756 = arith.subf %746, %755 : vector<8x32xf32>
    %757 = arith.mulf %756, %756 : vector<8x32xf32>
    %cst_301 = arith.constant dense<0.000000e+00> : vector<8xf32>
    %758 = vector.multi_reduction <add>, %757, %cst_301 [1] : vector<8x32xf32> to vector<8xf32>
    %759 = vector.shape_cast %758 : vector<8xf32> to vector<8x1xf32>
    %cst_302 = arith.constant 0.0322580636 : f32
    %760 = vector.broadcast %cst_302 : f32 to vector<8x1xf32>
    %761 = arith.mulf %759, %760 : vector<8x1xf32>
    %762 = math.sqrt %761 : vector<8x1xf32>
    %cst_303 = arith.constant 9.99999997E-7 : f32
    %763 = vector.broadcast %cst_303 : f32 to vector<8x1xf32>
    %764 = arith.addf %762, %763 : vector<8x1xf32>
    %765 = tpu.reciprocal %764 {approx = true} : vector<8x1xf32> -> vector<8x1xf32>
    %766 = vector.broadcast %765 : vector<8x1xf32> to vector<8x32xf32>
    %767 = arith.mulf %756, %766 : vector<8x32xf32>
    %768 = vector.broadcast %748 : vector<1x32xf32> to vector<8x32xf32>
    %769 = arith.mulf %768, %767 : vector<8x32xf32>
    %770 = vector.broadcast %750 : vector<1x32xf32> to vector<8x32xf32>
    %771 = arith.addf %769, %770 : vector<8x32xf32>
    %c1_304 = arith.constant 1 : index
    %c0_305 = arith.constant 0 : index
    %c0_306 = arith.constant 0 : index
    %772 = vector.load %arg36[%c1_304, %c0_305, %c0_306] : memref<2x32x64xf32, #tpu.memory_space<vmem>>, vector<1x32x64xf32>
    %773 = vector.shape_cast %772 : vector<1x32x64xf32> to vector<32x64xf32>
    %c1_307 = arith.constant 1 : index
    %c0_308 = arith.constant 0 : index
    %c0_309 = arith.constant 0 : index
    %774 = vector.load %arg37[%c1_307, %c0_308, %c0_309] : memref<2x1x64xf32, #tpu.memory_space<vmem>>, vector<1x1x64xf32>
    %775 = vector.shape_cast %774 : vector<1x1x64xf32> to vector<1x64xf32>
    %cst_310 = arith.constant dense<0.000000e+00> : vector<8x64xf32>
    %776 = tpu.matmul %771, %773, %cst_310 {dimension_numbers = #tpu.dot_dimension_numbers<[1], [0], [0], [1], [0, 0, 1, 1], [], []>} : vector<8x32xf32>, vector<32x64xf32>, vector<8x64xf32> -> vector<8x64xf32>
    %777 = vector.broadcast %775 : vector<1x64xf32> to vector<8x64xf32>
    %778 = arith.addf %776, %777 : vector<8x64xf32>
    %cst_311 = arith.constant 0.000000e+00 : f32
    %779 = vector.broadcast %cst_311 : f32 to vector<8x64xf32>
    %780 = arith.maximumf %778, %779 : vector<8x64xf32>
    %c1_312 = arith.constant 1 : index
    %c0_313 = arith.constant 0 : index
    %c0_314 = arith.constant 0 : index
    %781 = vector.load %arg38[%c1_312, %c0_313, %c0_314] : memref<2x64x32xf32, #tpu.memory_space<vmem>>, vector<1x64x32xf32>
    %782 = vector.shape_cast %781 : vector<1x64x32xf32> to vector<64x32xf32>
    %c1_315 = arith.constant 1 : index
    %c0_316 = arith.constant 0 : index
    %c0_317 = arith.constant 0 : index
    %783 = vector.load %arg39[%c1_315, %c0_316, %c0_317] : memref<2x1x32xf32, #tpu.memory_space<vmem>>, vector<1x1x32xf32>
    %784 = vector.shape_cast %783 : vector<1x1x32xf32> to vector<1x32xf32>
    %cst_318 = arith.constant dense<0.000000e+00> : vector<8x32xf32>
    %785 = tpu.matmul %780, %782, %cst_318 {dimension_numbers = #tpu.dot_dimension_numbers<[1], [0], [0], [1], [0, 0, 1, 1], [], []>} : vector<8x64xf32>, vector<64x32xf32>, vector<8x32xf32> -> vector<8x32xf32>
    %786 = vector.broadcast %784 : vector<1x32xf32> to vector<8x32xf32>
    %787 = arith.addf %785, %786 : vector<8x32xf32>
    %788 = arith.addf %746, %787 : vector<8x32xf32>
    %c0_319 = arith.constant 0 : index
    %c0_320 = arith.constant 0 : index
    %789 = vector.load %arg40[%c0_319, %c0_320] : memref<1x32xf32, #tpu.memory_space<vmem>>, vector<1x32xf32>
    %c0_321 = arith.constant 0 : index
    %c0_322 = arith.constant 0 : index
    %790 = vector.load %arg41[%c0_321, %c0_322] : memref<1x32xf32, #tpu.memory_space<vmem>>, vector<1x32xf32>
    %cst_323 = arith.constant dense<0.000000e+00> : vector<8xf32>
    %791 = vector.multi_reduction <add>, %788, %cst_323 [1] : vector<8x32xf32> to vector<8xf32>
    %792 = vector.shape_cast %791 : vector<8xf32> to vector<8x1xf32>
    %cst_324 = arith.constant 3.200000e+01 : f32
    %793 = vector.broadcast %cst_324 : f32 to vector<8x1xf32>
    %794 = arith.divf %792, %793 : vector<8x1xf32>
    %795 = vector.broadcast %794 : vector<8x1xf32> to vector<8x32xf32>
    %796 = arith.subf %788, %795 : vector<8x32xf32>
    %797 = arith.mulf %796, %796 : vector<8x32xf32>
    %cst_325 = arith.constant dense<0.000000e+00> : vector<8xf32>
    %798 = vector.multi_reduction <add>, %797, %cst_325 [1] : vector<8x32xf32> to vector<8xf32>
    %799 = vector.shape_cast %798 : vector<8xf32> to vector<8x1xf32>
    %cst_326 = arith.constant 0.0322580636 : f32
    %800 = vector.broadcast %cst_326 : f32 to vector<8x1xf32>
    %801 = arith.mulf %799, %800 : vector<8x1xf32>
    %802 = math.sqrt %801 : vector<8x1xf32>
    %cst_327 = arith.constant 9.99999997E-7 : f32
    %803 = vector.broadcast %cst_327 : f32 to vector<8x1xf32>
    %804 = arith.addf %802, %803 : vector<8x1xf32>
    %805 = tpu.reciprocal %804 {approx = true} : vector<8x1xf32> -> vector<8x1xf32>
    %806 = vector.broadcast %805 : vector<8x1xf32> to vector<8x32xf32>
    %807 = arith.mulf %796, %806 : vector<8x32xf32>
    %808 = vector.broadcast %789 : vector<1x32xf32> to vector<8x32xf32>
    %809 = arith.mulf %808, %807 : vector<8x32xf32>
    %810 = vector.broadcast %790 : vector<1x32xf32> to vector<8x32xf32>
    %811 = arith.addf %809, %810 : vector<8x32xf32>
    %c0_328 = arith.constant 0 : index
    %c0_329 = arith.constant 0 : index
    %c0_330 = arith.constant 0 : index
    %812 = vector.load %arg42[%c0_328, %c0_329, %c0_330] : memref<1x8x32xf32, #tpu.memory_space<vmem>>, vector<1x8x32xf32>
    %813 = vector.shape_cast %812 : vector<1x8x32xf32> to vector<8x32xf32>
    %814 = vector.shape_cast %811 : vector<8x32xf32> to vector<1x8x32xf32>
    tpu.vector_store %arg42[%c0_328, %c0_329, %c0_330], %814 {strides = array<i32>} : memref<1x8x32xf32, #tpu.memory_space<vmem>>, vector<1x8x32xf32>,
    return
  }
  func.func @transform_0(%arg0: i32) -> (i32, i32, i32) {
    %c0_i32 = arith.constant 0 : i32
    %c0_i32_0 = arith.constant 0 : i32
    %c0_i32_1 = arith.constant 0 : i32
    return %arg0, %c0_i32, %c0_i32_0 : i32, i32, i32
  }
  func.func @transform_1(%arg0: i32) -> (i32, i32, i32) {
    %c0_i32 = arith.constant 0 : i32
    %c0_i32_0 = arith.constant 0 : i32
    %c0_i32_1 = arith.constant 0 : i32
    return %arg0, %c0_i32, %c0_i32_0 : i32, i32, i32
  }
  func.func @transform_2(%arg0: i32) -> (i32, i32, i32) {
    %c0_i32 = arith.constant 0 : i32
    %c0_i32_0 = arith.constant 0 : i32
    %c0_i32_1 = arith.constant 0 : i32
    return %arg0, %c0_i32, %c0_i32_0 : i32, i32, i32
  }
  func.func @transform_3(%arg0: i32) -> (i32, i32, i32) {
    %c0_i32 = arith.constant 0 : i32
    %c0_i32_0 = arith.constant 0 : i32
    %c0_i32_1 = arith.constant 0 : i32
    return %arg0, %c0_i32, %c0_i32_0 : i32, i32, i32
  }
  func.func @transform_4(%arg0: i32) -> (i32, i32, i32) {
    %c0_i32 = arith.constant 0 : i32
    %c0_i32_0 = arith.constant 0 : i32
    %c0_i32_1 = arith.constant 0 : i32
    return %arg0, %c0_i32, %c0_i32_0 : i32, i32, i32
  }
  func.func @transform_5(%arg0: i32) -> (i32, i32, i32) {
    %c0_i32 = arith.constant 0 : i32
    %c0_i32_0 = arith.constant 0 : i32
    %c0_i32_1 = arith.constant 0 : i32
    %c0_i32_2 = arith.constant 0 : i32
    return %c0_i32, %c0_i32_0, %c0_i32_1 : i32, i32, i32
  }
  func.func @transform_6(%arg0: i32) -> (i32, i32, i32) {
    %c0_i32 = arith.constant 0 : i32
    %c0_i32_0 = arith.constant 0 : i32
    %c0_i32_1 = arith.constant 0 : i32
    %c0_i32_2 = arith.constant 0 : i32
    return %c0_i32, %c0_i32_0, %c0_i32_1 : i32, i32, i32
  }
  func.func @transform_7(%arg0: i32) -> (i32, i32, i32) {
    %c0_i32 = arith.constant 0 : i32
    %c0_i32_0 = arith.constant 0 : i32
    %c0_i32_1 = arith.constant 0 : i32
    %c0_i32_2 = arith.constant 0 : i32
    return %c0_i32, %c0_i32_0, %c0_i32_1 : i32, i32, i32
  }
  func.func @transform_8(%arg0: i32) -> (i32, i32, i32) {
    %c0_i32 = arith.constant 0 : i32
    %c0_i32_0 = arith.constant 0 : i32
    %c0_i32_1 = arith.constant 0 : i32
    %c0_i32_2 = arith.constant 0 : i32
    return %c0_i32, %c0_i32_0, %c0_i32_1 : i32, i32, i32
  }
  func.func @transform_9(%arg0: i32) -> (i32, i32, i32) {
    %c0_i32 = arith.constant 0 : i32
    %c0_i32_0 = arith.constant 0 : i32
    %c0_i32_1 = arith.constant 0 : i32
    %c0_i32_2 = arith.constant 0 : i32
    return %c0_i32, %c0_i32_0, %c0_i32_1 : i32, i32, i32
  }
  func.func @transform_10(%arg0: i32) -> (i32, i32, i32) {
    %c0_i32 = arith.constant 0 : i32
    %c0_i32_0 = arith.constant 0 : i32
    %c0_i32_1 = arith.constant 0 : i32
    %c0_i32_2 = arith.constant 0 : i32
    return %c0_i32, %c0_i32_0, %c0_i32_1 : i32, i32, i32
  }
  func.func @transform_11(%arg0: i32) -> (i32, i32, i32) {
    %c0_i32 = arith.constant 0 : i32
    %c0_i32_0 = arith.constant 0 : i32
    %c0_i32_1 = arith.constant 0 : i32
    %c0_i32_2 = arith.constant 0 : i32
    return %c0_i32, %c0_i32_0, %c0_i32_1 : i32, i32, i32
  }
  func.func @transform_12(%arg0: i32) -> (i32, i32, i32) {
    %c0_i32 = arith.constant 0 : i32
    %c0_i32_0 = arith.constant 0 : i32
    %c0_i32_1 = arith.constant 0 : i32
    %c0_i32_2 = arith.constant 0 : i32
    return %c0_i32, %c0_i32_0, %c0_i32_1 : i32, i32, i32
  }
  func.func @transform_13(%arg0: i32) -> (i32, i32, i32) {
    %c0_i32 = arith.constant 0 : i32
    %c0_i32_0 = arith.constant 0 : i32
    %c0_i32_1 = arith.constant 0 : i32
    %c0_i32_2 = arith.constant 0 : i32
    return %c0_i32, %c0_i32_0, %c0_i32_1 : i32, i32, i32
  }
  func.func @transform_14(%arg0: i32) -> (i32, i32, i32) {
    %c0_i32 = arith.constant 0 : i32
    %c0_i32_0 = arith.constant 0 : i32
    %c0_i32_1 = arith.constant 0 : i32
    %c0_i32_2 = arith.constant 0 : i32
    return %c0_i32, %c0_i32_0, %c0_i32_1 : i32, i32, i32
  }
  func.func @transform_15(%arg0: i32) -> (i32, i32, i32) {
    %c0_i32 = arith.constant 0 : i32
    %c0_i32_0 = arith.constant 0 : i32
    %c0_i32_1 = arith.constant 0 : i32
    %c0_i32_2 = arith.constant 0 : i32
    return %c0_i32, %c0_i32_0, %c0_i32_1 : i32, i32, i32
  }
  func.func @transform_16(%arg0: i32) -> (i32, i32, i32) {
    %c0_i32 = arith.constant 0 : i32
    %c0_i32_0 = arith.constant 0 : i32
    %c0_i32_1 = arith.constant 0 : i32
    %c0_i32_2 = arith.constant 0 : i32
    return %c0_i32, %c0_i32_0, %c0_i32_1 : i32, i32, i32
  }
  func.func @transform_17(%arg0: i32) -> (i32, i32) {
    %c0_i32 = arith.constant 0 : i32
    %c0_i32_0 = arith.constant 0 : i32
    %c0_i32_1 = arith.constant 0 : i32
    return %c0_i32, %c0_i32_0 : i32, i32
  }
  func.func @transform_18(%arg0: i32) -> (i32, i32) {
    %c0_i32 = arith.constant 0 : i32
    %c0_i32_0 = arith.constant 0 : i32
    %c0_i32_1 = arith.constant 0 : i32
    return %c0_i32, %c0_i32_0 : i32, i32
  }
  func.func @transform_19(%arg0: i32) -> (i32, i32, i32) {
    %c0_i32 = arith.constant 0 : i32
    %c0_i32_0 = arith.constant 0 : i32
    %c0_i32_1 = arith.constant 0 : i32
    %c0_i32_2 = arith.constant 0 : i32
    return %c0_i32, %c0_i32_0, %c0_i32_1 : i32, i32, i32
  }
  func.func @transform_20(%arg0: i32) -> (i32, i32, i32) {
    %c0_i32 = arith.constant 0 : i32
    %c0_i32_0 = arith.constant 0 : i32
    %c0_i32_1 = arith.constant 0 : i32
    %c0_i32_2 = arith.constant 0 : i32
    return %c0_i32, %c0_i32_0, %c0_i32_1 : i32, i32, i32
  }
  func.func @transform_21(%arg0: i32) -> (i32, i32, i32) {
    %c0_i32 = arith.constant 0 : i32
    %c0_i32_0 = arith.constant 0 : i32
    %c0_i32_1 = arith.constant 0 : i32
    %c0_i32_2 = arith.constant 0 : i32
    return %c0_i32, %c0_i32_0, %c0_i32_1 : i32, i32, i32
  }
  func.func @transform_22(%arg0: i32) -> (i32, i32, i32) {
    %c0_i32 = arith.constant 0 : i32
    %c0_i32_0 = arith.constant 0 : i32
    %c0_i32_1 = arith.constant 0 : i32
    %c0_i32_2 = arith.constant 0 : i32
    return %c0_i32, %c0_i32_0, %c0_i32_1 : i32, i32, i32
  }
  func.func @transform_23(%arg0: i32) -> (i32, i32, i32) {
    %c0_i32 = arith.constant 0 : i32
    %c0_i32_0 = arith.constant 0 : i32
    %c0_i32_1 = arith.constant 0 : i32
    %c0_i32_2 = arith.constant 0 : i32
    return %c0_i32, %c0_i32_0, %c0_i32_1 : i32, i32, i32
  }
  func.func @transform_24(%arg0: i32) -> (i32, i32, i32) {
    %c0_i32 = arith.constant 0 : i32
    %c0_i32_0 = arith.constant 0 : i32
    %c0_i32_1 = arith.constant 0 : i32
    %c0_i32_2 = arith.constant 0 : i32
    return %c0_i32, %c0_i32_0, %c0_i32_1 : i32, i32, i32
  }
  func.func @transform_25(%arg0: i32) -> (i32, i32, i32) {
    %c0_i32 = arith.constant 0 : i32
    %c0_i32_0 = arith.constant 0 : i32
    %c0_i32_1 = arith.constant 0 : i32
    %c0_i32_2 = arith.constant 0 : i32
    return %c0_i32, %c0_i32_0, %c0_i32_1 : i32, i32, i32
  }
  func.func @transform_26(%arg0: i32) -> (i32, i32, i32) {
    %c0_i32 = arith.constant 0 : i32
    %c0_i32_0 = arith.constant 0 : i32
    %c0_i32_1 = arith.constant 0 : i32
    %c0_i32_2 = arith.constant 0 : i32
    return %c0_i32, %c0_i32_0, %c0_i32_1 : i32, i32, i32
  }
  func.func @transform_27(%arg0: i32) -> (i32, i32, i32) {
    %c0_i32 = arith.constant 0 : i32
    %c0_i32_0 = arith.constant 0 : i32
    %c0_i32_1 = arith.constant 0 : i32
    %c0_i32_2 = arith.constant 0 : i32
    return %c0_i32, %c0_i32_0, %c0_i32_1 : i32, i32, i32
  }
  func.func @transform_28(%arg0: i32) -> (i32, i32, i32) {
    %c0_i32 = arith.constant 0 : i32
    %c0_i32_0 = arith.constant 0 : i32
    %c0_i32_1 = arith.constant 0 : i32
    %c0_i32_2 = arith.constant 0 : i32
    return %c0_i32, %c0_i32_0, %c0_i32_1 : i32, i32, i32
  }
  func.func @transform_29(%arg0: i32) -> (i32, i32, i32) {
    %c0_i32 = arith.constant 0 : i32
    %c0_i32_0 = arith.constant 0 : i32
    %c0_i32_1 = arith.constant 0 : i32
    %c0_i32_2 = arith.constant 0 : i32
    return %c0_i32, %c0_i32_0, %c0_i32_1 : i32, i32, i32
  }
  func.func @transform_30(%arg0: i32) -> (i32, i32, i32) {
    %c0_i32 = arith.constant 0 : i32
    %c0_i32_0 = arith.constant 0 : i32
    %c0_i32_1 = arith.constant 0 : i32
    %c0_i32_2 = arith.constant 0 : i32
    return %c0_i32, %c0_i32_0, %c0_i32_1 : i32, i32, i32
  }
  func.func @transform_31(%arg0: i32) -> (i32, i32, i32) {
    %c0_i32 = arith.constant 0 : i32
    %c0_i32_0 = arith.constant 0 : i32
    %c0_i32_1 = arith.constant 0 : i32
    %c0_i32_2 = arith.constant 0 : i32
    return %c0_i32, %c0_i32_0, %c0_i32_1 : i32, i32, i32
  }
  func.func @transform_32(%arg0: i32) -> (i32, i32, i32) {
    %c0_i32 = arith.constant 0 : i32
    %c0_i32_0 = arith.constant 0 : i32
    %c0_i32_1 = arith.constant 0 : i32
    %c0_i32_2 = arith.constant 0 : i32
    return %c0_i32, %c0_i32_0, %c0_i32_1 : i32, i32, i32
  }
  func.func @transform_33(%arg0: i32) -> (i32, i32, i32) {
    %c0_i32 = arith.constant 0 : i32
    %c0_i32_0 = arith.constant 0 : i32
    %c0_i32_1 = arith.constant 0 : i32
    %c0_i32_2 = arith.constant 0 : i32
    return %c0_i32, %c0_i32_0, %c0_i32_1 : i32, i32, i32
  }
  func.func @transform_34(%arg0: i32) -> (i32, i32, i32) {
    %c0_i32 = arith.constant 0 : i32
    %c0_i32_0 = arith.constant 0 : i32
    %c0_i32_1 = arith.constant 0 : i32
    %c0_i32_2 = arith.constant 0 : i32
    return %c0_i32, %c0_i32_0, %c0_i32_1 : i32, i32, i32
  }
  func.func @transform_35(%arg0: i32) -> (i32, i32, i32) {
    %c0_i32 = arith.constant 0 : i32
    %c0_i32_0 = arith.constant 0 : i32
    %c0_i32_1 = arith.constant 0 : i32
    %c0_i32_2 = arith.constant 0 : i32
    return %c0_i32, %c0_i32_0, %c0_i32_1 : i32, i32, i32
  }
  func.func @transform_36(%arg0: i32) -> (i32, i32, i32) {
    %c0_i32 = arith.constant 0 : i32
    %c0_i32_0 = arith.constant 0 : i32
    %c0_i32_1 = arith.constant 0 : i32
    %c0_i32_2 = arith.constant 0 : i32
    return %c0_i32, %c0_i32_0, %c0_i32_1 : i32, i32, i32
  }
  func.func @transform_37(%arg0: i32) -> (i32, i32, i32) {
    %c0_i32 = arith.constant 0 : i32
    %c0_i32_0 = arith.constant 0 : i32
    %c0_i32_1 = arith.constant 0 : i32
    %c0_i32_2 = arith.constant 0 : i32
    return %c0_i32, %c0_i32_0, %c0_i32_1 : i32, i32, i32
  }
  func.func @transform_38(%arg0: i32) -> (i32, i32, i32) {
    %c0_i32 = arith.constant 0 : i32
    %c0_i32_0 = arith.constant 0 : i32
    %c0_i32_1 = arith.constant 0 : i32
    %c0_i32_2 = arith.constant 0 : i32
    return %c0_i32, %c0_i32_0, %c0_i32_1 : i32, i32, i32
  }
  func.func @transform_39(%arg0: i32) -> (i32, i32) {
    %c0_i32 = arith.constant 0 : i32
    %c0_i32_0 = arith.constant 0 : i32
    %c0_i32_1 = arith.constant 0 : i32
    return %c0_i32, %c0_i32_0 : i32, i32
  }
  func.func @transform_40(%arg0: i32) -> (i32, i32) {
    %c0_i32 = arith.constant 0 : i32
    %c0_i32_0 = arith.constant 0 : i32
    %c0_i32_1 = arith.constant 0 : i32
    return %c0_i32, %c0_i32_0 : i32, i32
  }
  func.func @transform_41(%arg0: i32) -> (i32, i32, i32) {
    %c0_i32 = arith.constant 0 : i32
    %c0_i32_0 = arith.constant 0 : i32
    %c0_i32_1 = arith.constant 0 : i32
    return %arg0, %c0_i32, %c0_i32_0 : i32, i32, i32
  }
}

</mosaic_0001>

<llo_original>
// kernel: encoder_decoder_forward.1
$region0: #{encoder_decoder_forward.1}
  #allocation0 [shape = 'u32[]', space=smem, size = 0x4, offset = 0x4, fixed_abs, tag = 'smem constant byte address 0x4 - core index']
  #allocation1 [shape = 'u32[72,128]{1,0:T(1,128)}', space=vmem, size = 0x9000, scoped, tag = 'internal scratch']
  %s0 = inlined_call_operand.smem [shape: u32[42], index: -1, kind: input, shape index: {}]
  %s1 = sld [smem:[%s0]]
  %s2 = scalar_lea.smem %s0, 1
  %s3 = sld [smem:[%s2]]
  %s4 = scalar_lea.smem %s0, 2
  %s5 = sld [smem:[%s4]]
  %s6 = scalar_lea.smem %s0, 3
  %s7 = sld [smem:[%s6]]
  %s8 = scalar_lea.smem %s0, 4
  %s9 = sld [smem:[%s8]]
  %s10 = scalar_lea.smem %s0, 5
  %s11 = sld [smem:[%s10]]
  %s12 = scalar_lea.smem %s0, 6
  %s13 = sld [smem:[%s12]]
  %s14 = scalar_lea.smem %s0, 7
  %s15 = sld [smem:[%s14]]
  %s16 = scalar_lea.smem %s0, 8
  %s17 = sld [smem:[%s16]]
  %s18 = scalar_lea.smem %s0, 9
  %s19 = sld [smem:[%s18]]
  %s20 = scalar_lea.smem %s0, 10
  %s21 = sld [smem:[%s20]]
  %s22 = scalar_lea.smem %s0, 11
  %s23 = sld [smem:[%s22]]
  %s24 = scalar_lea.smem %s0, 12
  %s25 = sld [smem:[%s24]]
  %s26 = scalar_lea.smem %s0, 13
  %s27 = sld [smem:[%s26]]
  %s28 = scalar_lea.smem %s0, 14
  %s29 = sld [smem:[%s28]]
  %s30 = scalar_lea.smem %s0, 15
  %s31 = sld [smem:[%s30]]
  %s32 = scalar_lea.smem %s0, 16
  %s33 = sld [smem:[%s32]]
  %s34 = scalar_lea.smem %s0, 17
  %s35 = sld [smem:[%s34]]
  %s36 = scalar_lea.smem %s0, 18
  %s37 = sld [smem:[%s36]]
  %s38 = scalar_lea.smem %s0, 19
  %s39 = sld [smem:[%s38]]
  %s40 = scalar_lea.smem %s0, 20
  %s41 = sld [smem:[%s40]]
  %s42 = scalar_lea.smem %s0, 21
  %s43 = sld [smem:[%s42]]
  %s44 = scalar_lea.smem %s0, 22
  %s45 = sld [smem:[%s44]]
  %s46 = scalar_lea.smem %s0, 23
  %s47 = sld [smem:[%s46]]
  %s48 = scalar_lea.smem %s0, 24
  %s49 = sld [smem:[%s48]]
  %s50 = scalar_lea.smem %s0, 25
  %s51 = sld [smem:[%s50]]
  %s52 = scalar_lea.smem %s0, 26
  %s53 = sld [smem:[%s52]]
  %s54 = scalar_lea.smem %s0, 27
  %s55 = sld [smem:[%s54]]
  %s56 = scalar_lea.smem %s0, 28
  %s57 = sld [smem:[%s56]]
  %s58 = scalar_lea.smem %s0, 29
  %s59 = sld [smem:[%s58]]
  %s60 = scalar_lea.smem %s0, 30
  %s61 = sld [smem:[%s60]]
  %s62 = scalar_lea.smem %s0, 31
  %s63 = sld [smem:[%s62]]
  %s64 = scalar_lea.smem %s0, 32
  %s65 = sld [smem:[%s64]]
  %s66 = scalar_lea.smem %s0, 33
  %s67 = sld [smem:[%s66]]
  %s68 = scalar_lea.smem %s0, 34
  %s69 = sld [smem:[%s68]]
  %s70 = scalar_lea.smem %s0, 35
  %s71 = sld [smem:[%s70]]
  %s72 = scalar_lea.smem %s0, 36
  %s73 = sld [smem:[%s72]]
  %s74 = scalar_lea.smem %s0, 37
  %s75 = sld [smem:[%s74]]
  %s76 = scalar_lea.smem %s0, 38
  %s77 = sld [smem:[%s76]]
  %s78 = scalar_lea.smem %s0, 39
  %s79 = sld [smem:[%s78]]
  %s80 = scalar_lea.smem %s0, 40
  %s81 = sld [smem:[%s80]]
  %s82 = scalar_lea.smem %s0, 41
  %s83 = sld [smem:[%s82]]
  %s84 = sld [smem:[#allocation0]]
  $region197: #{encoder_decoder_forward.1} parent=0
    _
  %s86 = ssub.s32 1, %s84
  %s87 = scalar_select 0, %s86, %s84
  $region1: #{encoder_decoder_forward.1} parent=0
    #allocation2 [shape = 'u8[8192]{0}', space=vmem, size = 0x2000, scoped, tag = 'output window, operand 0']
    #allocation3 [shape = 's32[2]{0}', space=sflag, size = 0x8, scoped, tag = 'scoped memory for encoder_decoder_forward.1']
    %88 = vsyncpa [#allocation3], 0
    %s89 = scalar_lea.sflag [#allocation3], 1
    %90 = vsyncpa %s89, 0
    loop: start=0, step=1, limit=4
    $region2: #{encoder_decoder_forward.1} parent=1 // loop_pre_header
      _
    $region3: #{encoder_decoder_forward.1} parent=1 // loop_header
      %s92 = sphi 0, %s96
      %p93 = scmp.ge.s32.totalorder %s92, 4
      %s102 = sphi 0, %s104
      %s105 = sphi 0, %s102
      %s106 = sphi 0, %s105
      %s122 = sphi 0, %s106
      %s128 = sphi 0, %s130
      %s131 = sphi 0, %s128
      %s132 = sphi 0, %s131
      %s148 = sphi 0, %s132
      %s154 = sphi 0, %s156
      %s157 = sphi 0, %s154
      %s158 = sphi 0, %s157
      %s174 = sphi 0, %s158
      %s180 = sphi 0, %s182
      %s183 = sphi 0, %s180
      %s184 = sphi 0, %s183
      %s200 = sphi 0, %s184
      %s206 = sphi 0, %s208
      %s209 = sphi 0, %s206
      %s210 = sphi 0, %s209
      %s226 = sphi 0, %s210
      %s230 = sphi 0, %s230
      %s232 = sphi 0, %s230
      %s233 = sphi 0, %s232
      %s247 = sphi 0, %s233
      %s251 = sphi 0, %s251
      %s253 = sphi 0, %s251
      %s254 = sphi 0, %s253
      %s268 = sphi 0, %s254
      %s272 = sphi 0, %s272
      %s274 = sphi 0, %s272
      %s275 = sphi 0, %s274
      %s289 = sphi 0, %s275
      %s293 = sphi 0, %s293
      %s295 = sphi 0, %s293
      %s296 = sphi 0, %s295
      %s310 = sphi 0, %s296
      %s314 = sphi 0, %s314
      %s316 = sphi 0, %s314
      %s317 = sphi 0, %s316
      %s331 = sphi 0, %s317
      %s335 = sphi 0, %s335
      %s337 = sphi 0, %s335
      %s338 = sphi 0, %s337
      %s352 = sphi 0, %s338
      %s356 = sphi 0, %s356
      %s358 = sphi 0, %s356
      %s359 = sphi 0, %s358
      %s373 = sphi 0, %s359
      %s377 = sphi 0, %s377
      %s379 = sphi 0, %s377
      %s380 = sphi 0, %s379
      %s394 = sphi 0, %s380
      %s398 = sphi 0, %s398
      %s400 = sphi 0, %s398
      %s401 = sphi 0, %s400
      %s415 = sphi 0, %s401
      %s419 = sphi 0, %s419
      %s421 = sphi 0, %s419
      %s422 = sphi 0, %s421
      %s436 = sphi 0, %s422
      %s440 = sphi 0, %s440
      %s442 = sphi 0, %s440
      %s443 = sphi 0, %s442
      %s457 = sphi 0, %s443
      %s461 = sphi 0, %s461
      %s463 = sphi 0, %s461
      %s464 = sphi 0, %s463
      %s478 = sphi 0, %s464
      %s482 = sphi 0, %s482
      %s484 = sphi 0, %s482
      %s485 = sphi 0, %s484
      %s499 = sphi 0, %s485
      %s503 = sphi 0, %s503
      %s505 = sphi 0, %s503
      %s506 = sphi 0, %s505
      %s520 = sphi 0, %s506
      %s524 = sphi 0, %s524
      %s526 = sphi 0, %s524
      %s527 = sphi 0, %s526
      %s541 = sphi 0, %s527
      %s545 = sphi 0, %s545
      %s547 = sphi 0, %s545
      %s548 = sphi 0, %s547
      %s562 = sphi 0, %s548
      %s566 = sphi 0, %s566
      %s568 = sphi 0, %s566
      %s569 = sphi 0, %s568
      %s583 = sphi 0, %s569
      %s587 = sphi 0, %s587
      %s589 = sphi 0, %s587
      %s590 = sphi 0, %s589
      %s604 = sphi 0, %s590
      %s608 = sphi 0, %s608
      %s610 = sphi 0, %s608
      %s611 = sphi 0, %s610
      %s625 = sphi 0, %s611
      %s629 = sphi 0, %s629
      %s631 = sphi 0, %s629
      %s632 = sphi 0, %s631
      %s646 = sphi 0, %s632
      %s650 = sphi 0, %s650
      %s652 = sphi 0, %s650
      %s653 = sphi 0, %s652
      %s667 = sphi 0, %s653
      %s671 = sphi 0, %s671
      %s673 = sphi 0, %s671
      %s674 = sphi 0, %s673
      %s688 = sphi 0, %s674
      %s692 = sphi 0, %s692
      %s694 = sphi 0, %s692
      %s695 = sphi 0, %s694
      %s709 = sphi 0, %s695
      %s713 = sphi 0, %s713
      %s715 = sphi 0, %s713
      %s716 = sphi 0, %s715
      %s730 = sphi 0, %s716
      %s734 = sphi 0, %s734
      %s736 = sphi 0, %s734
      %s737 = sphi 0, %s736
      %s751 = sphi 0, %s737
      %s755 = sphi 0, %s755
      %s757 = sphi 0, %s755
      %s758 = sphi 0, %s757
      %s772 = sphi 0, %s758
      %s776 = sphi 0, %s776
      %s778 = sphi 0, %s776
      %s779 = sphi 0, %s778
      %s793 = sphi 0, %s779
      %s797 = sphi 0, %s797
      %s799 = sphi 0, %s797
      %s800 = sphi 0, %s799
      %s814 = sphi 0, %s800
      %s818 = sphi 0, %s818
      %s820 = sphi 0, %s818
      %s821 = sphi 0, %s820
      %s835 = sphi 0, %s821
      %s839 = sphi 0, %s839
      %s841 = sphi 0, %s839
      %s842 = sphi 0, %s841
      %s856 = sphi 0, %s842
      %s860 = sphi 0, %s860
      %s862 = sphi 0, %s860
      %s863 = sphi 0, %s862
      %s877 = sphi 0, %s863
      %s881 = sphi 0, %s881
      %s883 = sphi 0, %s881
      %s884 = sphi 0, %s883
      %s898 = sphi 0, %s884
      %s902 = sphi 0, %s902
      %s904 = sphi 0, %s902
      %s905 = sphi 0, %s904
      %s919 = sphi 0, %s905
      %s923 = sphi 0, %s923
      %s925 = sphi 0, %s923
      %s926 = sphi 0, %s925
      %s940 = sphi 0, %s926
      %s944 = sphi 0, %s944
      %s946 = sphi 0, %s944
      %s947 = sphi 0, %s946
      %s961 = sphi 0, %s947
      %s965 = sphi 0, %s965
      %s967 = sphi 0, %s965
      %s968 = sphi 0, %s967
      %s982 = sphi 0, %s968
      %s988 = sphi 0, %s990
      %s991 = sphi 0, %s988
      %s992 = sphi 0, %s991
      %s1008 = sphi 0, %s992
    $region4: #{encoder_decoder_forward.1} parent=1 // loop_header_branch
      %95 = sbr.rel (%p93) target = $region8
    $region5: #{encoder_decoder_forward.1} parent=1 // loop_body
      %s97 = ssub.s32 %s92, 1
      %s98 = ssub.s32 %s92, 2
      %s99 = sadd.s32 %s92, 1
      %s100 = ssub.s32 %s92, %s99
      %p101 = scmp.eq.s32.totalorder %s100, 0
      %s103 = sadd.s32 %s102, 1
      %s104 = scalar_select %p101, %s102, %s103
      %p107 = pneg %p101
      %p108 = scmp.eq.s32.totalorder %s92, 1
      %p109 = por %p107, %p108
      %p110 = scmp.ne.s32.totalorder %s102, %s105
      %p111 = scmp.eq.s32.totalorder %s92, 0
      %p112 = por %p110, %p111
      %p113 = scmp.ne.s32.totalorder %s102, %s105
      %p114 = scmp.eq.s32.totalorder %s97, 1
      %p115 = por %p113, %p114
      %p116 = scmp.ne.s32.totalorder %s105, %s106
      %p117 = scmp.eq.s32.totalorder %s97, 0
      %p118 = por %p116, %p117
      %p119 = scmp.ne.s32.totalorder %s105, %s106
      %p120 = scmp.eq.s32.totalorder %s98, 1
      %p121 = por %p119, %p120
      %p123 = scmp.ne.s32.totalorder %s106, %s122
      %p124 = scmp.eq.s32.totalorder %s98, 0
      %p125 = por %p123, %p124
      %s126 = ssub.s32 %s92, %s99
      %p127 = scmp.eq.s32.totalorder %s126, 0
      %s129 = sadd.s32 %s128, 1
      %s130 = scalar_select %p127, %s128, %s129
      %p133 = pneg %p127
      %p134 = scmp.eq.s32.totalorder %s92, 1
      %p135 = por %p133, %p134
      %p136 = scmp.ne.s32.totalorder %s128, %s131
      %p137 = scmp.eq.s32.totalorder %s92, 0
      %p138 = por %p136, %p137
      %p139 = scmp.ne.s32.totalorder %s128, %s131
      %p140 = scmp.eq.s32.totalorder %s97, 1
      %p141 = por %p139, %p140
      %p142 = scmp.ne.s32.totalorder %s131, %s132
      %p143 = scmp.eq.s32.totalorder %s97, 0
      %p144 = por %p142, %p143
      %p145 = scmp.ne.s32.totalorder %s131, %s132
      %p146 = scmp.eq.s32.totalorder %s98, 1
      %p147 = por %p145, %p146
      %p149 = scmp.ne.s32.totalorder %s132, %s148
      %p150 = scmp.eq.s32.totalorder %s98, 0
      %p151 = por %p149, %p150
      %s152 = ssub.s32 %s92, %s99
      %p153 = scmp.eq.s32.totalorder %s152, 0
      %s155 = sadd.s32 %s154, 1
      %s156 = scalar_select %p153, %s154, %s155
      %p159 = pneg %p153
      %p160 = scmp.eq.s32.totalorder %s92, 1
      %p161 = por %p159, %p160
      %p162 = scmp.ne.s32.totalorder %s154, %s157
      %p163 = scmp.eq.s32.totalorder %s92, 0
      %p164 = por %p162, %p163
      %p165 = scmp.ne.s32.totalorder %s154, %s157
      %p166 = scmp.eq.s32.totalorder %s97, 1
      %p167 = por %p165, %p166
      %p168 = scmp.ne.s32.totalorder %s157, %s158
      %p169 = scmp.eq.s32.totalorder %s97, 0
      %p170 = por %p168, %p169
      %p171 = scmp.ne.s32.totalorder %s157, %s158
      %p172 = scmp.eq.s32.totalorder %s98, 1
      %p173 = por %p171, %p172
      %p175 = scmp.ne.s32.totalorder %s158, %s174
      %p176 = scmp.eq.s32.totalorder %s98, 0
      %p177 = por %p175, %p176
      %s178 = ssub.s32 %s92, %s99
      %p179 = scmp.eq.s32.totalorder %s178, 0
      %s181 = sadd.s32 %s180, 1
      %s182 = scalar_select %p179, %s180, %s181
      %p185 = pneg %p179
      %p186 = scmp.eq.s32.totalorder %s92, 1
      %p187 = por %p185, %p186
      %p188 = scmp.ne.s32.totalorder %s180, %s183
      %p189 = scmp.eq.s32.totalorder %s92, 0
      %p190 = por %p188, %p189
      %p191 = scmp.ne.s32.totalorder %s180, %s183
      %p192 = scmp.eq.s32.totalorder %s97, 1
      %p193 = por %p191, %p192
      %p194 = scmp.ne.s32.totalorder %s183, %s184
      %p195 = scmp.eq.s32.totalorder %s97, 0
      %p196 = por %p194, %p195
      %p197 = scmp.ne.s32.totalorder %s183, %s184
      %p198 = scmp.eq.s32.totalorder %s98, 1
      %p199 = por %p197, %p198
      %p201 = scmp.ne.s32.totalorder %s184, %s200
      %p202 = scmp.eq.s32.totalorder %s98, 0
      %p203 = por %p201, %p202
      %s204 = ssub.s32 %s92, %s99
      %p205 = scmp.eq.s32.totalorder %s204, 0
      %s207 = sadd.s32 %s206, 1
      %s208 = scalar_select %p205, %s206, %s207
      %p211 = pneg %p205
      %p212 = scmp.eq.s32.totalorder %s92, 1
      %p213 = por %p211, %p212
      %p214 = scmp.ne.s32.totalorder %s206, %s209
      %p215 = scmp.eq.s32.totalorder %s92, 0
      %p216 = por %p214, %p215
      %p217 = scmp.ne.s32.totalorder %s206, %s209
      %p218 = scmp.eq.s32.totalorder %s97, 1
      %p219 = por %p217, %p218
      %p220 = scmp.ne.s32.totalorder %s209, %s210
      %p221 = scmp.eq.s32.totalorder %s97, 0
      %p222 = por %p220, %p221
      %p223 = scmp.ne.s32.totalorder %s209, %s210
      %p224 = scmp.eq.s32.totalorder %s98, 1
      %p225 = por %p223, %p224
      %p227 = scmp.ne.s32.totalorder %s210, %s226
      %p228 = scmp.eq.s32.totalorder %s98, 0
      %p229 = por %p227, %p228
      %s231 = sadd.s32 %s230, 1
      %p234 = scmp.eq.s32.totalorder %s92, 1
      %p235 = scmp.ne.s32.totalorder %s230, %s232
      %p236 = scmp.eq.s32.totalorder %s92, 0
      %p237 = por %p235, %p236
      %p238 = scmp.ne.s32.totalorder %s230, %s232
      %p239 = scmp.eq.s32.totalorder %s97, 1
      %p240 = por %p238, %p239
      %p241 = scmp.ne.s32.totalorder %s232, %s233
      %p242 = scmp.eq.s32.totalorder %s97, 0
      %p243 = por %p241, %p242
      %p244 = scmp.ne.s32.totalorder %s232, %s233
      %p245 = scmp.eq.s32.totalorder %s98, 1
      %p246 = por %p244, %p245
      %p248 = scmp.ne.s32.totalorder %s233, %s247
      %p249 = scmp.eq.s32.totalorder %s98, 0
      %p250 = por %p248, %p249
      %s252 = sadd.s32 %s251, 1
      %p255 = scmp.eq.s32.totalorder %s92, 1
      %p256 = scmp.ne.s32.totalorder %s251, %s253
      %p257 = scmp.eq.s32.totalorder %s92, 0
      %p258 = por %p256, %p257
      %p259 = scmp.ne.s32.totalorder %s251, %s253
      %p260 = scmp.eq.s32.totalorder %s97, 1
      %p261 = por %p259, %p260
      %p262 = scmp.ne.s32.totalorder %s253, %s254
      %p263 = scmp.eq.s32.totalorder %s97, 0
      %p264 = por %p262, %p263
      %p265 = scmp.ne.s32.totalorder %s253, %s254
      %p266 = scmp.eq.s32.totalorder %s98, 1
      %p267 = por %p265, %p266
      %p269 = scmp.ne.s32.totalorder %s254, %s268
      %p270 = scmp.eq.s32.totalorder %s98, 0
      %p271 = por %p269, %p270
      %s273 = sadd.s32 %s272, 1
      %p276 = scmp.eq.s32.totalorder %s92, 1
      %p277 = scmp.ne.s32.totalorder %s272, %s274
      %p278 = scmp.eq.s32.totalorder %s92, 0
      %p279 = por %p277, %p278
      %p280 = scmp.ne.s32.totalorder %s272, %s274
      %p281 = scmp.eq.s32.totalorder %s97, 1
      %p282 = por %p280, %p281
      %p283 = scmp.ne.s32.totalorder %s274, %s275
      %p284 = scmp.eq.s32.totalorder %s97, 0
      %p285 = por %p283, %p284
      %p286 = scmp.ne.s32.totalorder %s274, %s275
      %p287 = scmp.eq.s32.totalorder %s98, 1
      %p288 = por %p286, %p287
      %p290 = scmp.ne.s32.totalorder %s275, %s289
      %p291 = scmp.eq.s32.totalorder %s98, 0
      %p292 = por %p290, %p291
      %s294 = sadd.s32 %s293, 1
      %p297 = scmp.eq.s32.totalorder %s92, 1
      %p298 = scmp.ne.s32.totalorder %s293, %s295
      %p299 = scmp.eq.s32.totalorder %s92, 0
      %p300 = por %p298, %p299
      %p301 = scmp.ne.s32.totalorder %s293, %s295
      %p302 = scmp.eq.s32.totalorder %s97, 1
      %p303 = por %p301, %p302
      %p304 = scmp.ne.s32.totalorder %s295, %s296
      %p305 = scmp.eq.s32.totalorder %s97, 0
      %p306 = por %p304, %p305
      %p307 = scmp.ne.s32.totalorder %s295, %s296
      %p308 = scmp.eq.s32.totalorder %s98, 1
      %p309 = por %p307, %p308
      %p311 = scmp.ne.s32.totalorder %s296, %s310
      %p312 = scmp.eq.s32.totalorder %s98, 0
      %p313 = por %p311, %p312
      %s315 = sadd.s32 %s314, 1
      %p318 = scmp.eq.s32.totalorder %s92, 1
      %p319 = scmp.ne.s32.totalorder %s314, %s316
      %p320 = scmp.eq.s32.totalorder %s92, 0
      %p321 = por %p319, %p320
      %p322 = scmp.ne.s32.totalorder %s314, %s316
      %p323 = scmp.eq.s32.totalorder %s97, 1
      %p324 = por %p322, %p323
      %p325 = scmp.ne.s32.totalorder %s316, %s317
      %p326 = scmp.eq.s32.totalorder %s97, 0
      %p327 = por %p325, %p326
      %p328 = scmp.ne.s32.totalorder %s316, %s317
      %p329 = scmp.eq.s32.totalorder %s98, 1
      %p330 = por %p328, %p329
      %p332 = scmp.ne.s32.totalorder %s317, %s331
      %p333 = scmp.eq.s32.totalorder %s98, 0
      %p334 = por %p332, %p333
      %s336 = sadd.s32 %s335, 1
      %p339 = scmp.eq.s32.totalorder %s92, 1
      %p340 = scmp.ne.s32.totalorder %s335, %s337
      %p341 = scmp.eq.s32.totalorder %s92, 0
      %p342 = por %p340, %p341
      %p343 = scmp.ne.s32.totalorder %s335, %s337
      %p344 = scmp.eq.s32.totalorder %s97, 1
      %p345 = por %p343, %p344
      %p346 = scmp.ne.s32.totalorder %s337, %s338
      %p347 = scmp.eq.s32.totalorder %s97, 0
      %p348 = por %p346, %p347
      %p349 = scmp.ne.s32.totalorder %s337, %s338
      %p350 = scmp.eq.s32.totalorder %s98, 1
      %p351 = por %p349, %p350
      %p353 = scmp.ne.s32.totalorder %s338, %s352
      %p354 = scmp.eq.s32.totalorder %s98, 0
      %p355 = por %p353, %p354
      %s357 = sadd.s32 %s356, 1
      %p360 = scmp.eq.s32.totalorder %s92, 1
      %p361 = scmp.ne.s32.totalorder %s356, %s358
      %p362 = scmp.eq.s32.totalorder %s92, 0
      %p363 = por %p361, %p362
      %p364 = scmp.ne.s32.totalorder %s356, %s358
      %p365 = scmp.eq.s32.totalorder %s97, 1
      %p366 = por %p364, %p365
      %p367 = scmp.ne.s32.totalorder %s358, %s359
      %p368 = scmp.eq.s32.totalorder %s97, 0
      %p369 = por %p367, %p368
      %p370 = scmp.ne.s32.totalorder %s358, %s359
      %p371 = scmp.eq.s32.totalorder %s98, 1
      %p372 = por %p370, %p371
      %p374 = scmp.ne.s32.totalorder %s359, %s373
      %p375 = scmp.eq.s32.totalorder %s98, 0
      %p376 = por %p374, %p375
      %s378 = sadd.s32 %s377, 1
      %p381 = scmp.eq.s32.totalorder %s92, 1
      %p382 = scmp.ne.s32.totalorder %s377, %s379
      %p383 = scmp.eq.s32.totalorder %s92, 0
      %p384 = por %p382, %p383
      %p385 = scmp.ne.s32.totalorder %s377, %s379
      %p386 = scmp.eq.s32.totalorder %s97, 1
      %p387 = por %p385, %p386
      %p388 = scmp.ne.s32.totalorder %s379, %s380
      %p389 = scmp.eq.s32.totalorder %s97, 0
      %p390 = por %p388, %p389
      %p391 = scmp.ne.s32.totalorder %s379, %s380
      %p392 = scmp.eq.s32.totalorder %s98, 1
      %p393 = por %p391, %p392
      %p395 = scmp.ne.s32.totalorder %s380, %s394
      %p396 = scmp.eq.s32.totalorder %s98, 0
      %p397 = por %p395, %p396
      %s399 = sadd.s32 %s398, 1
      %p402 = scmp.eq.s32.totalorder %s92, 1
      %p403 = scmp.ne.s32.totalorder %s398, %s400
      %p404 = scmp.eq.s32.totalorder %s92, 0
      %p405 = por %p403, %p404
      %p406 = scmp.ne.s32.totalorder %s398, %s400
      %p407 = scmp.eq.s32.totalorder %s97, 1
      %p408 = por %p406, %p407
      %p409 = scmp.ne.s32.totalorder %s400, %s401
      %p410 = scmp.eq.s32.totalorder %s97, 0
      %p411 = por %p409, %p410
      %p412 = scmp.ne.s32.totalorder %s400, %s401
      %p413 = scmp.eq.s32.totalorder %s98, 1
      %p414 = por %p412, %p413
      %p416 = scmp.ne.s32.totalorder %s401, %s415
      %p417 = scmp.eq.s32.totalorder %s98, 0
      %p418 = por %p416, %p417
      %s420 = sadd.s32 %s419, 1
      %p423 = scmp.eq.s32.totalorder %s92, 1
      %p424 = scmp.ne.s32.totalorder %s419, %s421
      %p425 = scmp.eq.s32.totalorder %s92, 0
      %p426 = por %p424, %p425
      %p427 = scmp.ne.s32.totalorder %s419, %s421
      %p428 = scmp.eq.s32.totalorder %s97, 1
      %p429 = por %p427, %p428
      %p430 = scmp.ne.s32.totalorder %s421, %s422
      %p431 = scmp.eq.s32.totalorder %s97, 0
      %p432 = por %p430, %p431
      %p433 = scmp.ne.s32.totalorder %s421, %s422
      %p434 = scmp.eq.s32.totalorder %s98, 1
      %p435 = por %p433, %p434
      %p437 = scmp.ne.s32.totalorder %s422, %s436
      %p438 = scmp.eq.s32.totalorder %s98, 0
      %p439 = por %p437, %p438
      %s441 = sadd.s32 %s440, 1
      %p444 = scmp.eq.s32.totalorder %s92, 1
      %p445 = scmp.ne.s32.totalorder %s440, %s442
      %p446 = scmp.eq.s32.totalorder %s92, 0
      %p447 = por %p445, %p446
      %p448 = scmp.ne.s32.totalorder %s440, %s442
      %p449 = scmp.eq.s32.totalorder %s97, 1
      %p450 = por %p448, %p449
      %p451 = scmp.ne.s32.totalorder %s442, %s443
      %p452 = scmp.eq.s32.totalorder %s97, 0
      %p453 = por %p451, %p452
      %p454 = scmp.ne.s32.totalorder %s442, %s443
      %p455 = scmp.eq.s32.totalorder %s98, 1
      %p456 = por %p454, %p455
      %p458 = scmp.ne.s32.totalorder %s443, %s457
      %p459 = scmp.eq.s32.totalorder %s98, 0
      %p460 = por %p458, %p459
      %s462 = sadd.s32 %s461, 1
      %p465 = scmp.eq.s32.totalorder %s92, 1
      %p466 = scmp.ne.s32.totalorder %s461, %s463
      %p467 = scmp.eq.s32.totalorder %s92, 0
      %p468 = por %p466, %p467
      %p469 = scmp.ne.s32.totalorder %s461, %s463
      %p470 = scmp.eq.s32.totalorder %s97, 1
      %p471 = por %p469, %p470
      %p472 = scmp.ne.s32.totalorder %s463, %s464
      %p473 = scmp.eq.s32.totalorder %s97, 0
      %p474 = por %p472, %p473
      %p475 = scmp.ne.s32.totalorder %s463, %s464
      %p476 = scmp.eq.s32.totalorder %s98, 1
      %p477 = por %p475, %p476
      %p479 = scmp.ne.s32.totalorder %s464, %s478
      %p480 = scmp.eq.s32.totalorder %s98, 0
      %p481 = por %p479, %p480
      %s483 = sadd.s32 %s482, 1
      %p486 = scmp.eq.s32.totalorder %s92, 1
      %p487 = scmp.ne.s32.totalorder %s482, %s484
      %p488 = scmp.eq.s32.totalorder %s92, 0
      %p489 = por %p487, %p488
      %p490 = scmp.ne.s32.totalorder %s482, %s484
      %p491 = scmp.eq.s32.totalorder %s97, 1
      %p492 = por %p490, %p491
      %p493 = scmp.ne.s32.totalorder %s484, %s485
      %p494 = scmp.eq.s32.totalorder %s97, 0
      %p495 = por %p493, %p494
      %p496 = scmp.ne.s32.totalorder %s484, %s485
      %p497 = scmp.eq.s32.totalorder %s98, 1
      %p498 = por %p496, %p497
      %p500 = scmp.ne.s32.totalorder %s485, %s499
      %p501 = scmp.eq.s32.totalorder %s98, 0
      %p502 = por %p500, %p501
      %s504 = sadd.s32 %s503, 1
      %p507 = scmp.eq.s32.totalorder %s92, 1
      %p508 = scmp.ne.s32.totalorder %s503, %s505
      %p509 = scmp.eq.s32.totalorder %s92, 0
      %p510 = por %p508, %p509
      %p511 = scmp.ne.s32.totalorder %s503, %s505
      %p512 = scmp.eq.s32.totalorder %s97, 1
      %p513 = por %p511, %p512
      %p514 = scmp.ne.s32.totalorder %s505, %s506
      %p515 = scmp.eq.s32.totalorder %s97, 0
      %p516 = por %p514, %p515
      %p517 = scmp.ne.s32.totalorder %s505, %s506
      %p518 = scmp.eq.s32.totalorder %s98, 1
      %p519 = por %p517, %p518
      %p521 = scmp.ne.s32.totalorder %s506, %s520
      %p522 = scmp.eq.s32.totalorder %s98, 0
      %p523 = por %p521, %p522
      %s525 = sadd.s32 %s524, 1
      %p528 = scmp.eq.s32.totalorder %s92, 1
      %p529 = scmp.ne.s32.totalorder %s524, %s526
      %p530 = scmp.eq.s32.totalorder %s92, 0
      %p531 = por %p529, %p530
      %p532 = scmp.ne.s32.totalorder %s524, %s526
      %p533 = scmp.eq.s32.totalorder %s97, 1
      %p534 = por %p532, %p533
      %p535 = scmp.ne.s32.totalorder %s526, %s527
      %p536 = scmp.eq.s32.totalorder %s97, 0
      %p537 = por %p535, %p536
      %p538 = scmp.ne.s32.totalorder %s526, %s527
      %p539 = scmp.eq.s32.totalorder %s98, 1
      %p540 = por %p538, %p539
      %p542 = scmp.ne.s32.totalorder %s527, %s541
      %p543 = scmp.eq.s32.totalorder %s98, 0
      %p544 = por %p542, %p543
      %s546 = sadd.s32 %s545, 1
      %p549 = scmp.eq.s32.totalorder %s92, 1
      %p550 = scmp.ne.s32.totalorder %s545, %s547
      %p551 = scmp.eq.s32.totalorder %s92, 0
      %p552 = por %p550, %p551
      %p553 = scmp.ne.s32.totalorder %s545, %s547
      %p554 = scmp.eq.s32.totalorder %s97, 1
      %p555 = por %p553, %p554
      %p556 = scmp.ne.s32.totalorder %s547, %s548
      %p557 = scmp.eq.s32.totalorder %s97, 0
      %p558 = por %p556, %p557
      %p559 = scmp.ne.s32.totalorder %s547, %s548
      %p560 = scmp.eq.s32.totalorder %s98, 1
      %p561 = por %p559, %p560
      %p563 = scmp.ne.s32.totalorder %s548, %s562
      %p564 = scmp.eq.s32.totalorder %s98, 0
      %p565 = por %p563, %p564
      %s567 = sadd.s32 %s566, 1
      %p570 = scmp.eq.s32.totalorder %s92, 1
      %p571 = scmp.ne.s32.totalorder %s566, %s568
      %p572 = scmp.eq.s32.totalorder %s92, 0
      %p573 = por %p571, %p572
      %p574 = scmp.ne.s32.totalorder %s566, %s568
      %p575 = scmp.eq.s32.totalorder %s97, 1
      %p576 = por %p574, %p575
      %p577 = scmp.ne.s32.totalorder %s568, %s569
      %p578 = scmp.eq.s32.totalorder %s97, 0
      %p579 = por %p577, %p578
      %p580 = scmp.ne.s32.totalorder %s568, %s569
      %p581 = scmp.eq.s32.totalorder %s98, 1
      %p582 = por %p580, %p581
      %p584 = scmp.ne.s32.totalorder %s569, %s583
      %p585 = scmp.eq.s32.totalorder %s98, 0
      %p586 = por %p584, %p585
      %s588 = sadd.s32 %s587, 1
      %p591 = scmp.eq.s32.totalorder %s92, 1
      %p592 = scmp.ne.s32.totalorder %s587, %s589
      %p593 = scmp.eq.s32.totalorder %s92, 0
      %p594 = por %p592, %p593
      %p595 = scmp.ne.s32.totalorder %s587, %s589
      %p596 = scmp.eq.s32.totalorder %s97, 1
      %p597 = por %p595, %p596
      %p598 = scmp.ne.s32.totalorder %s589, %s590
      %p599 = scmp.eq.s32.totalorder %s97, 0
      %p600 = por %p598, %p599
      %p601 = scmp.ne.s32.totalorder %s589, %s590
      %p602 = scmp.eq.s32.totalorder %s98, 1
      %p603 = por %p601, %p602
      %p605 = scmp.ne.s32.totalorder %s590, %s604
      %p606 = scmp.eq.s32.totalorder %s98, 0
      %p607 = por %p605, %p606
      %s609 = sadd.s32 %s608, 1
      %p612 = scmp.eq.s32.totalorder %s92, 1
      %p613 = scmp.ne.s32.totalorder %s608, %s610
      %p614 = scmp.eq.s32.totalorder %s92, 0
      %p615 = por %p613, %p614
      %p616 = scmp.ne.s32.totalorder %s608, %s610
      %p617 = scmp.eq.s32.totalorder %s97, 1
      %p618 = por %p616, %p617
      %p619 = scmp.ne.s32.totalorder %s610, %s611
      %p620 = scmp.eq.s32.totalorder %s97, 0
      %p621 = por %p619, %p620
      %p622 = scmp.ne.s32.totalorder %s610, %s611
      %p623 = scmp.eq.s32.totalorder %s98, 1
      %p624 = por %p622, %p623
      %p626 = scmp.ne.s32.totalorder %s611, %s625
      %p627 = scmp.eq.s32.totalorder %s98, 0
      %p628 = por %p626, %p627
      %s630 = sadd.s32 %s629, 1
      %p633 = scmp.eq.s32.totalorder %s92, 1
      %p634 = scmp.ne.s32.totalorder %s629, %s631
      %p635 = scmp.eq.s32.totalorder %s92, 0
      %p636 = por %p634, %p635
      %p637 = scmp.ne.s32.totalorder %s629, %s631
      %p638 = scmp.eq.s32.totalorder %s97, 1
      %p639 = por %p637, %p638
      %p640 = scmp.ne.s32.totalorder %s631, %s632
      %p641 = scmp.eq.s32.totalorder %s97, 0
      %p642 = por %p640, %p641
      %p643 = scmp.ne.s32.totalorder %s631, %s632
      %p644 = scmp.eq.s32.totalorder %s98, 1
      %p645 = por %p643, %p644
      %p647 = scmp.ne.s32.totalorder %s632, %s646
      %p648 = scmp.eq.s32.totalorder %s98, 0
      %p649 = por %p647, %p648
      %s651 = sadd.s32 %s650, 1
      %p654 = scmp.eq.s32.totalorder %s92, 1
      %p655 = scmp.ne.s32.totalorder %s650, %s652
      %p656 = scmp.eq.s32.totalorder %s92, 0
      %p657 = por %p655, %p656
      %p658 = scmp.ne.s32.totalorder %s650, %s652
      %p659 = scmp.eq.s32.totalorder %s97, 1
      %p660 = por %p658, %p659
      %p661 = scmp.ne.s32.totalorder %s652, %s653
      %p662 = scmp.eq.s32.totalorder %s97, 0
      %p663 = por %p661, %p662
      %p664 = scmp.ne.s32.totalorder %s652, %s653
      %p665 = scmp.eq.s32.totalorder %s98, 1
      %p666 = por %p664, %p665
      %p668 = scmp.ne.s32.totalorder %s653, %s667
      %p669 = scmp.eq.s32.totalorder %s98, 0
      %p670 = por %p668, %p669
      %s672 = sadd.s32 %s671, 1
      %p675 = scmp.eq.s32.totalorder %s92, 1
      %p676 = scmp.ne.s32.totalorder %s671, %s673
      %p677 = scmp.eq.s32.totalorder %s92, 0
      %p678 = por %p676, %p677
      %p679 = scmp.ne.s32.totalorder %s671, %s673
      %p680 = scmp.eq.s32.totalorder %s97, 1
      %p681 = por %p679, %p680
      %p682 = scmp.ne.s32.totalorder %s673, %s674
      %p683 = scmp.eq.s32.totalorder %s97, 0
      %p684 = por %p682, %p683
      %p685 = scmp.ne.s32.totalorder %s673, %s674
      %p686 = scmp.eq.s32.totalorder %s98, 1
      %p687 = por %p685, %p686
      %p689 = scmp.ne.s32.totalorder %s674, %s688
      %p690 = scmp.eq.s32.totalorder %s98, 0
      %p691 = por %p689, %p690
      %s693 = sadd.s32 %s692, 1
      %p696 = scmp.eq.s32.totalorder %s92, 1
      %p697 = scmp.ne.s32.totalorder %s692, %s694
      %p698 = scmp.eq.s32.totalorder %s92, 0
      %p699 = por %p697, %p698
      %p700 = scmp.ne.s32.totalorder %s692, %s694
      %p701 = scmp.eq.s32.totalorder %s97, 1
      %p702 = por %p700, %p701
      %p703 = scmp.ne.s32.totalorder %s694, %s695
      %p704 = scmp.eq.s32.totalorder %s97, 0
      %p705 = por %p703, %p704
      %p706 = scmp.ne.s32.totalorder %s694, %s695
      %p707 = scmp.eq.s32.totalorder %s98, 1
      %p708 = por %p706, %p707
      %p710 = scmp.ne.s32.totalorder %s695, %s709
      %p711 = scmp.eq.s32.totalorder %s98, 0
      %p712 = por %p710, %p711
      %s714 = sadd.s32 %s713, 1
      %p717 = scmp.eq.s32.totalorder %s92, 1
      %p718 = scmp.ne.s32.totalorder %s713, %s715
      %p719 = scmp.eq.s32.totalorder %s92, 0
      %p720 = por %p718, %p719
      %p721 = scmp.ne.s32.totalorder %s713, %s715
      %p722 = scmp.eq.s32.totalorder %s97, 1
      %p723 = por %p721, %p722
      %p724 = scmp.ne.s32.totalorder %s715, %s716
      %p725 = scmp.eq.s32.totalorder %s97, 0
      %p726 = por %p724, %p725
      %p727 = scmp.ne.s32.totalorder %s715, %s716
      %p728 = scmp.eq.s32.totalorder %s98, 1
      %p729 = por %p727, %p728
      %p731 = scmp.ne.s32.totalorder %s716, %s730
      %p732 = scmp.eq.s32.totalorder %s98, 0
      %p733 = por %p731, %p732
      %s735 = sadd.s32 %s734, 1
      %p738 = scmp.eq.s32.totalorder %s92, 1
      %p739 = scmp.ne.s32.totalorder %s734, %s736
      %p740 = scmp.eq.s32.totalorder %s92, 0
      %p741 = por %p739, %p740
      %p742 = scmp.ne.s32.totalorder %s734, %s736
      %p743 = scmp.eq.s32.totalorder %s97, 1
      %p744 = por %p742, %p743
      %p745 = scmp.ne.s32.totalorder %s736, %s737
      %p746 = scmp.eq.s32.totalorder %s97, 0
      %p747 = por %p745, %p746
      %p748 = scmp.ne.s32.totalorder %s736, %s737
      %p749 = scmp.eq.s32.totalorder %s98, 1
      %p750 = por %p748, %p749
      %p752 = scmp.ne.s32.totalorder %s737, %s751
      %p753 = scmp.eq.s32.totalorder %s98, 0
      %p754 = por %p752, %p753
      %s756 = sadd.s32 %s755, 1
      %p759 = scmp.eq.s32.totalorder %s92, 1
      %p760 = scmp.ne.s32.totalorder %s755, %s757
      %p761 = scmp.eq.s32.totalorder %s92, 0
      %p762 = por %p760, %p761
      %p763 = scmp.ne.s32.totalorder %s755, %s757
      %p764 = scmp.eq.s32.totalorder %s97, 1
      %p765 = por %p763, %p764
      %p766 = scmp.ne.s32.totalorder %s757, %s758
      %p767 = scmp.eq.s32.totalorder %s97, 0
      %p768 = por %p766, %p767
      %p769 = scmp.ne.s32.totalorder %s757, %s758
      %p770 = scmp.eq.s32.totalorder %s98, 1
      %p771 = por %p769, %p770
      %p773 = scmp.ne.s32.totalorder %s758, %s772
      %p774 = scmp.eq.s32.totalorder %s98, 0
      %p775 = por %p773, %p774
      %s777 = sadd.s32 %s776, 1
      %p780 = scmp.eq.s32.totalorder %s92, 1
      %p781 = scmp.ne.s32.totalorder %s776, %s778
      %p782 = scmp.eq.s32.totalorder %s92, 0
      %p783 = por %p781, %p782
      %p784 = scmp.ne.s32.totalorder %s776, %s778
      %p785 = scmp.eq.s32.totalorder %s97, 1
      %p786 = por %p784, %p785
      %p787 = scmp.ne.s32.totalorder %s778, %s779
      %p788 = scmp.eq.s32.totalorder %s97, 0
      %p789 = por %p787, %p788
      %p790 = scmp.ne.s32.totalorder %s778, %s779
      %p791 = scmp.eq.s32.totalorder %s98, 1
      %p792 = por %p790, %p791
      %p794 = scmp.ne.s32.totalorder %s779, %s793
      %p795 = scmp.eq.s32.totalorder %s98, 0
      %p796 = por %p794, %p795
      %s798 = sadd.s32 %s797, 1
      %p801 = scmp.eq.s32.totalorder %s92, 1
      %p802 = scmp.ne.s32.totalorder %s797, %s799
      %p803 = scmp.eq.s32.totalorder %s92, 0
      %p804 = por %p802, %p803
      %p805 = scmp.ne.s32.totalorder %s797, %s799
      %p806 = scmp.eq.s32.totalorder %s97, 1
      %p807 = por %p805, %p806
      %p808 = scmp.ne.s32.totalorder %s799, %s800
      %p809 = scmp.eq.s32.totalorder %s97, 0
      %p810 = por %p808, %p809
      %p811 = scmp.ne.s32.totalorder %s799, %s800
      %p812 = scmp.eq.s32.totalorder %s98, 1
      %p813 = por %p811, %p812
      %p815 = scmp.ne.s32.totalorder %s800, %s814
      %p816 = scmp.eq.s32.totalorder %s98, 0
      %p817 = por %p815, %p816
      %s819 = sadd.s32 %s818, 1
      %p822 = scmp.eq.s32.totalorder %s92, 1
      %p823 = scmp.ne.s32.totalorder %s818, %s820
      %p824 = scmp.eq.s32.totalorder %s92, 0
      %p825 = por %p823, %p824
      %p826 = scmp.ne.s32.totalorder %s818, %s820
      %p827 = scmp.eq.s32.totalorder %s97, 1
      %p828 = por %p826, %p827
      %p829 = scmp.ne.s32.totalorder %s820, %s821
      %p830 = scmp.eq.s32.totalorder %s97, 0
      %p831 = por %p829, %p830
      %p832 = scmp.ne.s32.totalorder %s820, %s821
      %p833 = scmp.eq.s32.totalorder %s98, 1
      %p834 = por %p832, %p833
      %p836 = scmp.ne.s32.totalorder %s821, %s835
      %p837 = scmp.eq.s32.totalorder %s98, 0
      %p838 = por %p836, %p837
      %s840 = sadd.s32 %s839, 1
      %p843 = scmp.eq.s32.totalorder %s92, 1
      %p844 = scmp.ne.s32.totalorder %s839, %s841
      %p845 = scmp.eq.s32.totalorder %s92, 0
      %p846 = por %p844, %p845
      %p847 = scmp.ne.s32.totalorder %s839, %s841
      %p848 = scmp.eq.s32.totalorder %s97, 1
      %p849 = por %p847, %p848
      %p850 = scmp.ne.s32.totalorder %s841, %s842
      %p851 = scmp.eq.s32.totalorder %s97, 0
      %p852 = por %p850, %p851
      %p853 = scmp.ne.s32.totalorder %s841, %s842
      %p854 = scmp.eq.s32.totalorder %s98, 1
      %p855 = por %p853, %p854
      %p857 = scmp.ne.s32.totalorder %s842, %s856
      %p858 = scmp.eq.s32.totalorder %s98, 0
      %p859 = por %p857, %p858
      %s861 = sadd.s32 %s860, 1
      %p864 = scmp.eq.s32.totalorder %s92, 1
      %p865 = scmp.ne.s32.totalorder %s860, %s862
      %p866 = scmp.eq.s32.totalorder %s92, 0
      %p867 = por %p865, %p866
      %p868 = scmp.ne.s32.totalorder %s860, %s862
      %p869 = scmp.eq.s32.totalorder %s97, 1
      %p870 = por %p868, %p869
      %p871 = scmp.ne.s32.totalorder %s862, %s863
      %p872 = scmp.eq.s32.totalorder %s97, 0
      %p873 = por %p871, %p872
      %p874 = scmp.ne.s32.totalorder %s862, %s863
      %p875 = scmp.eq.s32.totalorder %s98, 1
      %p876 = por %p874, %p875
      %p878 = scmp.ne.s32.totalorder %s863, %s877
      %p879 = scmp.eq.s32.totalorder %s98, 0
      %p880 = por %p878, %p879
      %s882 = sadd.s32 %s881, 1
      %p885 = scmp.eq.s32.totalorder %s92, 1
      %p886 = scmp.ne.s32.totalorder %s881, %s883
      %p887 = scmp.eq.s32.totalorder %s92, 0
      %p888 = por %p886, %p887
      %p889 = scmp.ne.s32.totalorder %s881, %s883
      %p890 = scmp.eq.s32.totalorder %s97, 1
      %p891 = por %p889, %p890
      %p892 = scmp.ne.s32.totalorder %s883, %s884
      %p893 = scmp.eq.s32.totalorder %s97, 0
      %p894 = por %p892, %p893
      %p895 = scmp.ne.s32.totalorder %s883, %s884
      %p896 = scmp.eq.s32.totalorder %s98, 1
      %p897 = por %p895, %p896
      %p899 = scmp.ne.s32.totalorder %s884, %s898
      %p900 = scmp.eq.s32.totalorder %s98, 0
      %p901 = por %p899, %p900
      %s903 = sadd.s32 %s902, 1
      %p906 = scmp.eq.s32.totalorder %s92, 1
      %p907 = scmp.ne.s32.totalorder %s902, %s904
      %p908 = scmp.eq.s32.totalorder %s92, 0
      %p909 = por %p907, %p908
      %p910 = scmp.ne.s32.totalorder %s902, %s904
      %p911 = scmp.eq.s32.totalorder %s97, 1
      %p912 = por %p910, %p911
      %p913 = scmp.ne.s32.totalorder %s904, %s905
      %p914 = scmp.eq.s32.totalorder %s97, 0
      %p915 = por %p913, %p914
      %p916 = scmp.ne.s32.totalorder %s904, %s905
      %p917 = scmp.eq.s32.totalorder %s98, 1
      %p918 = por %p916, %p917
      %p920 = scmp.ne.s32.totalorder %s905, %s919
      %p921 = scmp.eq.s32.totalorder %s98, 0
      %p922 = por %p920, %p921
      %s924 = sadd.s32 %s923, 1
      %p927 = scmp.eq.s32.totalorder %s92, 1
      %p928 = scmp.ne.s32.totalorder %s923, %s925
      %p929 = scmp.eq.s32.totalorder %s92, 0
      %p930 = por %p928, %p929
      %p931 = scmp.ne.s32.totalorder %s923, %s925
      %p932 = scmp.eq.s32.totalorder %s97, 1
      %p933 = por %p931, %p932
      %p934 = scmp.ne.s32.totalorder %s925, %s926
      %p935 = scmp.eq.s32.totalorder %s97, 0
      %p936 = por %p934, %p935
      %p937 = scmp.ne.s32.totalorder %s925, %s926
      %p938 = scmp.eq.s32.totalorder %s98, 1
      %p939 = por %p937, %p938
      %p941 = scmp.ne.s32.totalorder %s926, %s940
      %p942 = scmp.eq.s32.totalorder %s98, 0
      %p943 = por %p941, %p942
      %s945 = sadd.s32 %s944, 1
      %p948 = scmp.eq.s32.totalorder %s92, 1
      %p949 = scmp.ne.s32.totalorder %s944, %s946
      %p950 = scmp.eq.s32.totalorder %s92, 0
      %p951 = por %p949, %p950
      %p952 = scmp.ne.s32.totalorder %s944, %s946
      %p953 = scmp.eq.s32.totalorder %s97, 1
      %p954 = por %p952, %p953
      %p955 = scmp.ne.s32.totalorder %s946, %s947
      %p956 = scmp.eq.s32.totalorder %s97, 0
      %p957 = por %p955, %p956
      %p958 = scmp.ne.s32.totalorder %s946, %s947
      %p959 = scmp.eq.s32.totalorder %s98, 1
      %p960 = por %p958, %p959
      %p962 = scmp.ne.s32.totalorder %s947, %s961
      %p963 = scmp.eq.s32.totalorder %s98, 0
      %p964 = por %p962, %p963
      %s966 = sadd.s32 %s965, 1
      %p969 = scmp.eq.s32.totalorder %s92, 1
      %p970 = scmp.ne.s32.totalorder %s965, %s967
      %p971 = scmp.eq.s32.totalorder %s92, 0
      %p972 = por %p970, %p971
      %p973 = scmp.ne.s32.totalorder %s965, %s967
      %p974 = scmp.eq.s32.totalorder %s97, 1
      %p975 = por %p973, %p974
      %p976 = scmp.ne.s32.totalorder %s967, %s968
      %p977 = scmp.eq.s32.totalorder %s97, 0
      %p978 = por %p976, %p977
      %p979 = scmp.ne.s32.totalorder %s967, %s968
      %p980 = scmp.eq.s32.totalorder %s98, 1
      %p981 = por %p979, %p980
      %p983 = scmp.ne.s32.totalorder %s968, %s982
      %p984 = scmp.eq.s32.totalorder %s98, 0
      %p985 = por %p983, %p984
      %s986 = ssub.s32 %s92, %s99
      %p987 = scmp.eq.s32.totalorder %s986, 0
      %s989 = sadd.s32 %s988, 1
      %s990 = scalar_select %p987, %s988, %s989
      %p993 = pneg %p987
      %p994 = scmp.eq.s32.totalorder %s92, 1
      %p995 = por %p993, %p994
      %p996 = scmp.ne.s32.totalorder %s988, %s991
      %p997 = scmp.eq.s32.totalorder %s92, 0
      %p998 = por %p996, %p997
      %p999 = scmp.ne.s32.totalorder %s988, %s991
      %p1000 = scmp.eq.s32.totalorder %s97, 1
      %p1001 = por %p999, %p1000
      %p1002 = scmp.ne.s32.totalorder %s991, %s992
      %p1003 = scmp.eq.s32.totalorder %s97, 0
      %p1004 = por %p1002, %p1003
      %p1005 = scmp.ne.s32.totalorder %s991, %s992
      %p1006 = scmp.eq.s32.totalorder %s98, 1
      %p1007 = por %p1005, %p1006
      %p1009 = scmp.ne.s32.totalorder %s992, %s1008
      %p1010 = scmp.eq.s32.totalorder %s98, 0
      %p1011 = por %p1009, %p1010
      %p1012 = scmp.le.s32.totalorder 1, %s92
      %p1013 = scmp.lt.s32.totalorder %s92, 3
      %p1014 = pnand %p1012, %p1013
      %p1015 = pneg %p1014
      // Predicated region
      $region9: #{encoder_decoder_forward.1} parent=5 // pred_check
        _
      $region10: #{encoder_decoder_forward.1} parent=5 // pred_check_branch
        %1017 = sbr.rel (%p1014) target = $region12
      $region11: #{encoder_decoder_forward.1} parent=5 // pred_region
        %s1018 = ssub.s32 %s92, 1
        // Predicated region
        $region13: #{encoder_decoder_forward.1} parent=11 // pred_check
          %p1019 = pneg %p243
        $region14: #{encoder_decoder_forward.1} parent=11 // pred_check_branch
          %1021 = sbr.rel (%p1019) target = $region16
        $region15: #{encoder_decoder_forward.1} parent=11 // pred_region
          _
        $region16: #{encoder_decoder_forward.1} parent=11 // pred_fallthru
          _
        // Predicated region
        $region17: #{encoder_decoder_forward.1} parent=11 // pred_check
          %p1022 = pneg %p264
        $region18: #{encoder_decoder_forward.1} parent=11 // pred_check_branch
          %1024 = sbr.rel (%p1022) target = $region20
        $region19: #{encoder_decoder_forward.1} parent=11 // pred_region
          _
        $region20: #{encoder_decoder_forward.1} parent=11 // pred_fallthru
          _
        // Predicated region
        $region21: #{encoder_decoder_forward.1} parent=11 // pred_check
          %p1025 = pneg %p285
        $region22: #{encoder_decoder_forward.1} parent=11 // pred_check_branch
          %1027 = sbr.rel (%p1025) target = $region24
        $region23: #{encoder_decoder_forward.1} parent=11 // pred_region
          _
        $region24: #{encoder_decoder_forward.1} parent=11 // pred_fallthru
          _
        // Predicated region
        $region25: #{encoder_decoder_forward.1} parent=11 // pred_check
          %p1028 = pneg %p306
        $region26: #{encoder_decoder_forward.1} parent=11 // pred_check_branch
          %1030 = sbr.rel (%p1028) target = $region28
        $region27: #{encoder_decoder_forward.1} parent=11 // pred_region
          _
        $region28: #{encoder_decoder_forward.1} parent=11 // pred_fallthru
          _
        // Predicated region
        $region29: #{encoder_decoder_forward.1} parent=11 // pred_check
          %p1031 = pneg %p327
        $region30: #{encoder_decoder_forward.1} parent=11 // pred_check_branch
          %1033 = sbr.rel (%p1031) target = $region32
        $region31: #{encoder_decoder_forward.1} parent=11 // pred_region
          _
        $region32: #{encoder_decoder_forward.1} parent=11 // pred_fallthru
          _
        // Predicated region
        $region33: #{encoder_decoder_forward.1} parent=11 // pred_check
          %p1034 = pneg %p348
        $region34: #{encoder_decoder_forward.1} parent=11 // pred_check_branch
          %1036 = sbr.rel (%p1034) target = $region36
        $region35: #{encoder_decoder_forward.1} parent=11 // pred_region
          _
        $region36: #{encoder_decoder_forward.1} parent=11 // pred_fallthru
          _
        // Predicated region
        $region37: #{encoder_decoder_forward.1} parent=11 // pred_check
          %p1037 = pneg %p369
        $region38: #{encoder_decoder_forward.1} parent=11 // pred_check_branch
          %1039 = sbr.rel (%p1037) target = $region40
        $region39: #{encoder_decoder_forward.1} parent=11 // pred_region
          _
        $region40: #{encoder_decoder_forward.1} parent=11 // pred_fallthru
          _
        // Predicated region
        $region41: #{encoder_decoder_forward.1} parent=11 // pred_check
          %p1040 = pneg %p390
        $region42: #{encoder_decoder_forward.1} parent=11 // pred_check_branch
          %1042 = sbr.rel (%p1040) target = $region44
        $region43: #{encoder_decoder_forward.1} parent=11 // pred_region
          _
        $region44: #{encoder_decoder_forward.1} parent=11 // pred_fallthru
          _
        // Predicated region
        $region45: #{encoder_decoder_forward.1} parent=11 // pred_check
          %p1043 = pneg %p411
        $region46: #{encoder_decoder_forward.1} parent=11 // pred_check_branch
          %1045 = sbr.rel (%p1043) target = $region48
        $region47: #{encoder_decoder_forward.1} parent=11 // pred_region
          _
        $region48: #{encoder_decoder_forward.1} parent=11 // pred_fallthru
          _
        // Predicated region
        $region49: #{encoder_decoder_forward.1} parent=11 // pred_check
          %p1046 = pneg %p432
        $region50: #{encoder_decoder_forward.1} parent=11 // pred_check_branch
          %1048 = sbr.rel (%p1046) target = $region52
        $region51: #{encoder_decoder_forward.1} parent=11 // pred_region
          _
        $region52: #{encoder_decoder_forward.1} parent=11 // pred_fallthru
          _
        // Predicated region
        $region53: #{encoder_decoder_forward.1} parent=11 // pred_check
          %p1049 = pneg %p453
        $region54: #{encoder_decoder_forward.1} parent=11 // pred_check_branch
          %1051 = sbr.rel (%p1049) target = $region56
        $region55: #{encoder_decoder_forward.1} parent=11 // pred_region
          _
        $region56: #{encoder_decoder_forward.1} parent=11 // pred_fallthru
          _
        // Predicated region
        $region57: #{encoder_decoder_forward.1} parent=11 // pred_check
          %p1052 = pneg %p474
        $region58: #{encoder_decoder_forward.1} parent=11 // pred_check_branch
          %1054 = sbr.rel (%p1052) target = $region60
        $region59: #{encoder_decoder_forward.1} parent=11 // pred_region
          _
        $region60: #{encoder_decoder_forward.1} parent=11 // pred_fallthru
          _
        // Predicated region
        $region61: #{encoder_decoder_forward.1} parent=11 // pred_check
          %p1055 = pneg %p495
        $region62: #{encoder_decoder_forward.1} parent=11 // pred_check_branch
          %1057 = sbr.rel (%p1055) target = $region64
        $region63: #{encoder_decoder_forward.1} parent=11 // pred_region
          _
        $region64: #{encoder_decoder_forward.1} parent=11 // pred_fallthru
          _
        // Predicated region
        $region65: #{encoder_decoder_forward.1} parent=11 // pred_check
          %p1058 = pneg %p516
        $region66: #{encoder_decoder_forward.1} parent=11 // pred_check_branch
          %1060 = sbr.rel (%p1058) target = $region68
        $region67: #{encoder_decoder_forward.1} parent=11 // pred_region
          _
        $region68: #{encoder_decoder_forward.1} parent=11 // pred_fallthru
          _
        // Predicated region
        $region69: #{encoder_decoder_forward.1} parent=11 // pred_check
          %p1061 = pneg %p537
        $region70: #{encoder_decoder_forward.1} parent=11 // pred_check_branch
          %1063 = sbr.rel (%p1061) target = $region72
        $region71: #{encoder_decoder_forward.1} parent=11 // pred_region
          _
        $region72: #{encoder_decoder_forward.1} parent=11 // pred_fallthru
          _
        // Predicated region
        $region73: #{encoder_decoder_forward.1} parent=11 // pred_check
          %p1064 = pneg %p558
        $region74: #{encoder_decoder_forward.1} parent=11 // pred_check_branch
          %1066 = sbr.rel (%p1064) target = $region76
        $region75: #{encoder_decoder_forward.1} parent=11 // pred_region
          _
        $region76: #{encoder_decoder_forward.1} parent=11 // pred_fallthru
          _
        // Predicated region
        $region77: #{encoder_decoder_forward.1} parent=11 // pred_check
          %p1067 = pneg %p579
        $region78: #{encoder_decoder_forward.1} parent=11 // pred_check_branch
          %1069 = sbr.rel (%p1067) target = $region80
        $region79: #{encoder_decoder_forward.1} parent=11 // pred_region
          _
        $region80: #{encoder_decoder_forward.1} parent=11 // pred_fallthru
          _
        // Predicated region
        $region81: #{encoder_decoder_forward.1} parent=11 // pred_check
          %p1070 = pneg %p600
        $region82: #{encoder_decoder_forward.1} parent=11 // pred_check_branch
          %1072 = sbr.rel (%p1070) target = $region84
        $region83: #{encoder_decoder_forward.1} parent=11 // pred_region
          _
        $region84: #{encoder_decoder_forward.1} parent=11 // pred_fallthru
          _
        // Predicated region
        $region85: #{encoder_decoder_forward.1} parent=11 // pred_check
          %p1073 = pneg %p621
        $region86: #{encoder_decoder_forward.1} parent=11 // pred_check_branch
          %1075 = sbr.rel (%p1073) target = $region88
        $region87: #{encoder_decoder_forward.1} parent=11 // pred_region
          _
        $region88: #{encoder_decoder_forward.1} parent=11 // pred_fallthru
          _
        // Predicated region
        $region89: #{encoder_decoder_forward.1} parent=11 // pred_check
          %p1076 = pneg %p642
        $region90: #{encoder_decoder_forward.1} parent=11 // pred_check_branch
          %1078 = sbr.rel (%p1076) target = $region92
        $region91: #{encoder_decoder_forward.1} parent=11 // pred_region
          _
        $region92: #{encoder_decoder_forward.1} parent=11 // pred_fallthru
          _
        // Predicated region
        $region93: #{encoder_decoder_forward.1} parent=11 // pred_check
          %p1079 = pneg %p663
        $region94: #{encoder_decoder_forward.1} parent=11 // pred_check_branch
          %1081 = sbr.rel (%p1079) target = $region96
        $region95: #{encoder_decoder_forward.1} parent=11 // pred_region
          _
        $region96: #{encoder_decoder_forward.1} parent=11 // pred_fallthru
          _
        // Predicated region
        $region97: #{encoder_decoder_forward.1} parent=11 // pred_check
          %p1082 = pneg %p684
        $region98: #{encoder_decoder_forward.1} parent=11 // pred_check_branch
          %1084 = sbr.rel (%p1082) target = $region100
        $region99: #{encoder_decoder_forward.1} parent=11 // pred_region
          _
        $region100: #{encoder_decoder_forward.1} parent=11 // pred_fallthru
          _
        // Predicated region
        $region101: #{encoder_decoder_forward.1} parent=11 // pred_check
          %p1085 = pneg %p705
        $region102: #{encoder_decoder_forward.1} parent=11 // pred_check_branch
          %1087 = sbr.rel (%p1085) target = $region104
        $region103: #{encoder_decoder_forward.1} parent=11 // pred_region
          _
        $region104: #{encoder_decoder_forward.1} parent=11 // pred_fallthru
          _
        // Predicated region
        $region105: #{encoder_decoder_forward.1} parent=11 // pred_check
          %p1088 = pneg %p726
        $region106: #{encoder_decoder_forward.1} parent=11 // pred_check_branch
          %1090 = sbr.rel (%p1088) target = $region108
        $region107: #{encoder_decoder_forward.1} parent=11 // pred_region
          _
        $region108: #{encoder_decoder_forward.1} parent=11 // pred_fallthru
          _
        // Predicated region
        $region109: #{encoder_decoder_forward.1} parent=11 // pred_check
          %p1091 = pneg %p747
        $region110: #{encoder_decoder_forward.1} parent=11 // pred_check_branch
          %1093 = sbr.rel (%p1091) target = $region112
        $region111: #{encoder_decoder_forward.1} parent=11 // pred_region
          _
        $region112: #{encoder_decoder_forward.1} parent=11 // pred_fallthru
          _
        // Predicated region
        $region113: #{encoder_decoder_forward.1} parent=11 // pred_check
          %p1094 = pneg %p768
        $region114: #{encoder_decoder_forward.1} parent=11 // pred_check_branch
          %1096 = sbr.rel (%p1094) target = $region116
        $region115: #{encoder_decoder_forward.1} parent=11 // pred_region
          _
        $region116: #{encoder_decoder_forward.1} parent=11 // pred_fallthru
          _
        // Predicated region
        $region117: #{encoder_decoder_forward.1} parent=11 // pred_check
          %p1097 = pneg %p789
        $region118: #{encoder_decoder_forward.1} parent=11 // pred_check_branch
          %1099 = sbr.rel (%p1097) target = $region120
        $region119: #{encoder_decoder_forward.1} parent=11 // pred_region
          _
        $region120: #{encoder_decoder_forward.1} parent=11 // pred_fallthru
          _
        // Predicated region
        $region121: #{encoder_decoder_forward.1} parent=11 // pred_check
          %p1100 = pneg %p810
        $region122: #{encoder_decoder_forward.1} parent=11 // pred_check_branch
          %1102 = sbr.rel (%p1100) target = $region124
        $region123: #{encoder_decoder_forward.1} parent=11 // pred_region
          _
        $region124: #{encoder_decoder_forward.1} parent=11 // pred_fallthru
          _
        // Predicated region
        $region125: #{encoder_decoder_forward.1} parent=11 // pred_check
          %p1103 = pneg %p831
        $region126: #{encoder_decoder_forward.1} parent=11 // pred_check_branch
          %1105 = sbr.rel (%p1103) target = $region128
        $region127: #{encoder_decoder_forward.1} parent=11 // pred_region
          _
        $region128: #{encoder_decoder_forward.1} parent=11 // pred_fallthru
          _
        // Predicated region
        $region129: #{encoder_decoder_forward.1} parent=11 // pred_check
          %p1106 = pneg %p852
        $region130: #{encoder_decoder_forward.1} parent=11 // pred_check_branch
          %1108 = sbr.rel (%p1106) target = $region132
        $region131: #{encoder_decoder_forward.1} parent=11 // pred_region
          _
        $region132: #{encoder_decoder_forward.1} parent=11 // pred_fallthru
          _
        // Predicated region
        $region133: #{encoder_decoder_forward.1} parent=11 // pred_check
          %p1109 = pneg %p873
        $region134: #{encoder_decoder_forward.1} parent=11 // pred_check_branch
          %1111 = sbr.rel (%p1109) target = $region136
        $region135: #{encoder_decoder_forward.1} parent=11 // pred_region
          _
        $region136: #{encoder_decoder_forward.1} parent=11 // pred_fallthru
          _
        // Predicated region
        $region137: #{encoder_decoder_forward.1} parent=11 // pred_check
          %p1112 = pneg %p894
        $region138: #{encoder_decoder_forward.1} parent=11 // pred_check_branch
          %1114 = sbr.rel (%p1112) target = $region140
        $region139: #{encoder_decoder_forward.1} parent=11 // pred_region
          _
        $region140: #{encoder_decoder_forward.1} parent=11 // pred_fallthru
          _
        // Predicated region
        $region141: #{encoder_decoder_forward.1} parent=11 // pred_check
          %p1115 = pneg %p915
        $region142: #{encoder_decoder_forward.1} parent=11 // pred_check_branch
          %1117 = sbr.rel (%p1115) target = $region144
        $region143: #{encoder_decoder_forward.1} parent=11 // pred_region
          _
        $region144: #{encoder_decoder_forward.1} parent=11 // pred_fallthru
          _
        // Predicated region
        $region145: #{encoder_decoder_forward.1} parent=11 // pred_check
          %p1118 = pneg %p936
        $region146: #{encoder_decoder_forward.1} parent=11 // pred_check_branch
          %1120 = sbr.rel (%p1118) target = $region148
        $region147: #{encoder_decoder_forward.1} parent=11 // pred_region
          _
        $region148: #{encoder_decoder_forward.1} parent=11 // pred_fallthru
          _
        // Predicated region
        $region149: #{encoder_decoder_forward.1} parent=11 // pred_check
          %p1121 = pneg %p957
        $region150: #{encoder_decoder_forward.1} parent=11 // pred_check_branch
          %1123 = sbr.rel (%p1121) target = $region152
        $region151: #{encoder_decoder_forward.1} parent=11 // pred_region
          _
        $region152: #{encoder_decoder_forward.1} parent=11 // pred_fallthru
          _
        // Predicated region
        $region153: #{encoder_decoder_forward.1} parent=11 // pred_check
          %p1124 = pneg %p978
        $region154: #{encoder_decoder_forward.1} parent=11 // pred_check_branch
          %1126 = sbr.rel (%p1124) target = $region156
        $region155: #{encoder_decoder_forward.1} parent=11 // pred_region
          _
        $region156: #{encoder_decoder_forward.1} parent=11 // pred_fallthru
          _
      $region12: #{encoder_decoder_forward.1} parent=5 // pred_fallthru
        _
      %p1127 = scmp.lt.s32.totalorder %s92, 2
      // Predicated region
      $region157: #{encoder_decoder_forward.1} parent=5 // pred_check
        %p1128 = pneg %p1127
      $region158: #{encoder_decoder_forward.1} parent=5 // pred_check_branch
        %1130 = sbr.rel (%p1128) target = $region160
      $region159: #{encoder_decoder_forward.1} parent=5 // pred_region
        // Predicated region
        $region161: #{encoder_decoder_forward.1} parent=159 // pred_check
          %p1131 = pneg %p112
        $region162: #{encoder_decoder_forward.1} parent=159 // pred_check_branch
          %1133 = sbr.rel (%p1131) target = $region164
        $region163: #{encoder_decoder_forward.1} parent=159 // pred_region
          %p1134 = scmp.lt.s32.totalorder %s92, 1
          %s1135 = scalar_select %p1134, %s92, 1
          %s1136 = smul.addr %s1135, 8
          %s1137 = scalar_lea.vmem %s1, %s1136
        $region164: #{encoder_decoder_forward.1} parent=159 // pred_fallthru
          _
        // Predicated region
        $region165: #{encoder_decoder_forward.1} parent=159 // pred_check
          %p1138 = pneg %p138
        $region166: #{encoder_decoder_forward.1} parent=159 // pred_check_branch
          %1140 = sbr.rel (%p1138) target = $region168
        $region167: #{encoder_decoder_forward.1} parent=159 // pred_region
          %p1141 = scmp.lt.s32.totalorder %s92, 1
          %s1142 = scalar_select %p1141, %s92, 1
          %s1143 = smul.addr %s1142, 8
          %s1144 = scalar_lea.vmem %s3, %s1143
        $region168: #{encoder_decoder_forward.1} parent=159 // pred_fallthru
          _
        // Predicated region
        $region169: #{encoder_decoder_forward.1} parent=159 // pred_check
          %p1145 = pneg %p164
        $region170: #{encoder_decoder_forward.1} parent=159 // pred_check_branch
          %1147 = sbr.rel (%p1145) target = $region172
        $region171: #{encoder_decoder_forward.1} parent=159 // pred_region
          %p1148 = scmp.lt.s32.totalorder %s92, 1
          %s1149 = scalar_select %p1148, %s92, 1
          %s1150 = smul.addr %s1149, 8
          %s1151 = scalar_lea.vmem %s5, %s1150
        $region172: #{encoder_decoder_forward.1} parent=159 // pred_fallthru
          _
        // Predicated region
        $region173: #{encoder_decoder_forward.1} parent=159 // pred_check
          %p1152 = pneg %p190
        $region174: #{encoder_decoder_forward.1} parent=159 // pred_check_branch
          %1154 = sbr.rel (%p1152) target = $region176
        $region175: #{encoder_decoder_forward.1} parent=159 // pred_region
          %p1155 = scmp.lt.s32.totalorder %s92, 1
          %s1156 = scalar_select %p1155, %s92, 1
          %s1157 = smul.addr %s1156, 8
          %s1158 = scalar_lea.vmem %s7, %s1157
        $region176: #{encoder_decoder_forward.1} parent=159 // pred_fallthru
          _
        // Predicated region
        $region177: #{encoder_decoder_forward.1} parent=159 // pred_check
          %p1159 = pneg %p216
        $region178: #{encoder_decoder_forward.1} parent=159 // pred_check_branch
          %1161 = sbr.rel (%p1159) target = $region180
        $region179: #{encoder_decoder_forward.1} parent=159 // pred_region
          %p1162 = scmp.lt.s32.totalorder %s92, 1
          %s1163 = scalar_select %p1162, %s92, 1
          %s1164 = smul.addr %s1163, 8
          %s1165 = scalar_lea.vmem %s9, %s1164
        $region180: #{encoder_decoder_forward.1} parent=159 // pred_fallthru
          _
      $region160: #{encoder_decoder_forward.1} parent=5 // pred_fallthru
        _
      %p1166 = scmp.le.s32.totalorder 1, %s92
      %p1167 = scmp.lt.s32.totalorder %s92, 3
      %p1168 = pnand %p1166, %p1167
      %p1169 = pneg %p1168
      // Predicated region
      $region181: #{encoder_decoder_forward.1} parent=5 // pred_check
        _
      $region182: #{encoder_decoder_forward.1} parent=5 // pred_check_branch
        %1171 = sbr.rel (%p1168) target = $region184
      $region183: #{encoder_decoder_forward.1} parent=5 // pred_region
        %s1172 = ssub.s32 %s92, 1
        %p1173 = scmp.lt.s32.totalorder %s97, 1
        %s1174 = scalar_select %p1173, %s97, 1
        %s1175 = smul.addr %s1174, 8
        %s1176 = scalar_lea.vmem %s1, %s1175
        %p1177 = pneg %p118
        %p1178 = pneg %p115
        %p1179 = scmp.lt.s32.totalorder %s97, 1
        %s1180 = scalar_select %p1179, %s97, 1
        %s1181 = smul.addr %s1180, 8
        %s1182 = scalar_lea.vmem %s3, %s1181
        %p1183 = pneg %p144
        %p1184 = pneg %p141
        %p1185 = scmp.lt.s32.totalorder %s97, 1
        %s1186 = scalar_select %p1185, %s97, 1
        %s1187 = smul.addr %s1186, 8
        %s1188 = scalar_lea.vmem %s5, %s1187
        %p1189 = pneg %p170
        %p1190 = pneg %p167
        %p1191 = scmp.lt.s32.totalorder %s97, 1
        %s1192 = scalar_select %p1191, %s97, 1
        %s1193 = smul.addr %s1192, 8
        %s1194 = scalar_lea.vmem %s7, %s1193
        %p1195 = pneg %p196
        %p1196 = pneg %p193
        %p1197 = scmp.lt.s32.totalorder %s97, 1
        %s1198 = scalar_select %p1197, %s97, 1
        %s1199 = smul.addr %s1198, 8
        %s1200 = scalar_lea.vmem %s9, %s1199
        %p1201 = pneg %p222
        %p1202 = pneg %p219
        %p1203 = pneg %p243
        %p1204 = pneg %p240
        %p1205 = pneg %p264
        %p1206 = pneg %p261
        %p1207 = pneg %p285
        %p1208 = pneg %p282
        %p1209 = pneg %p306
        %p1210 = pneg %p303
        %p1211 = pneg %p327
        %p1212 = pneg %p324
        %p1213 = pneg %p348
        %p1214 = pneg %p345
        %p1215 = pneg %p369
        %p1216 = pneg %p366
        %p1217 = pneg %p390
        %p1218 = pneg %p387
        %p1219 = pneg %p411
        %p1220 = pneg %p408
        %p1221 = pneg %p432
        %p1222 = pneg %p429
        %p1223 = pneg %p453
        %p1224 = pneg %p450
        %p1225 = pneg %p474
        %p1226 = pneg %p471
        %p1227 = pneg %p495
        %p1228 = pneg %p492
        %p1229 = pneg %p516
        %p1230 = pneg %p513
        %p1231 = pneg %p537
        %p1232 = pneg %p534
        %p1233 = pneg %p558
        %p1234 = pneg %p555
        %p1235 = pneg %p579
        %p1236 = pneg %p576
        %p1237 = pneg %p600
        %p1238 = pneg %p597
        %p1239 = pneg %p621
        %p1240 = pneg %p618
        %p1241 = pneg %p642
        %p1242 = pneg %p639
        %p1243 = pneg %p663
        %p1244 = pneg %p660
        %p1245 = pneg %p684
        %p1246 = pneg %p681
        %p1247 = pneg %p705
        %p1248 = pneg %p702
        %p1249 = pneg %p726
        %p1250 = pneg %p723
        %p1251 = pneg %p747
        %p1252 = pneg %p744
        %p1253 = pneg %p768
        %p1254 = pneg %p765
        %p1255 = pneg %p789
        %p1256 = pneg %p786
        %p1257 = pneg %p810
        %p1258 = pneg %p807
        %p1259 = pneg %p831
        %p1260 = pneg %p828
        %p1261 = pneg %p852
        %p1262 = pneg %p849
        %p1263 = pneg %p873
        %p1264 = pneg %p870
        %p1265 = pneg %p894
        %p1266 = pneg %p891
        %p1267 = pneg %p915
        %p1268 = pneg %p912
        %p1269 = pneg %p936
        %p1270 = pneg %p933
        %p1271 = pneg %p957
        %p1272 = pneg %p954
        %p1273 = pneg %p978
        %p1274 = pneg %p975
        %p1275 = pneg %p1004
        %p1276 = pneg %p1001
        %s1277 = sand.u32 %s991, 1
        %s1278 = scalar_lea.sflag [#allocation3], %s1277
        %s1279 = sand.u32 %s991, 1
        %s1280 = smul.addr %s1279, 8
        %s1281 = scalar_lea.vmem [#allocation2], %s1280
        %p1282 = scmp.lt.s32.totalorder %s97, 1
        %s1283 = scalar_select %p1282, %s97, 1
        %s1284 = smul.addr %s1283, 8
        %s1285 = scalar_lea.vmem %s1, %s1284
        %p1286 = scmp.lt.s32.totalorder %s97, 1
        %s1287 = scalar_select %p1286, %s97, 1
        %s1288 = smul.addr %s1287, 8
        %s1289 = scalar_lea.vmem %s3, %s1288
        %p1290 = scmp.lt.s32.totalorder %s97, 1
        %s1291 = scalar_select %p1290, %s97, 1
        %s1292 = smul.addr %s1291, 8
        %s1293 = scalar_lea.vmem %s5, %s1292
        %p1294 = scmp.lt.s32.totalorder %s97, 1
        %s1295 = scalar_select %p1294, %s97, 1
        %s1296 = smul.addr %s1295, 8
        %s1297 = scalar_lea.vmem %s7, %s1296
        %p1298 = scmp.lt.s32.totalorder %s97, 1
        %s1299 = scalar_select %p1298, %s97, 1
        %s1300 = smul.addr %s1299, 8
        %s1301 = scalar_lea.vmem %s9, %s1300
        %v1302 = vld [vmem:[%s1293] sm:$0xff]
        %v1303 = vld [vmem:[%s1297] sm:$0xff]
        %v1304 = vld [vmem:[%s1301] sm:$0xff]
        %v1305 = vld [vmem:[%s1285] sm:$0xff]
        %v1306 = vld [vmem:[%s11] sm:$0x1]
        %v1307 = vld [vmem:[%s13] sm:$0x1]
        %vm1308 = vcmask 261120
        %v1309 = vsel %vm1308, %v1305, 0.0
        %1310 = vadd.xlane.f32.xlu0 %v1309
        %v1311 = vpop.xlane.xlu0 %1310
        %v1312 = vrcp.pop 32.0
        %v1313 = vmul.f32 32.0, %v1312
        %v1314 = vsub.f32 1.0, %v1313
        %v1315 = vmul.f32 %v1312, %v1314
        %v1316 = vadd.f32 %v1312, %v1315
        %vm1317 = vweird.f32 %v1312
        %v1318 = vsel %vm1317, %v1312, %v1316
        %v1319 = vmul.f32 %v1311, %v1318
        %v1320 = vsub.f32 %v1305, %v1319
        %v1321 = vmul.f32 %v1320, %v1320
        %v1322 = vsel %vm1308, %v1321, 0.0
        %1323 = vadd.xlane.f32.xlu0 %v1322
        %v1324 = vpop.xlane.xlu0 %1323
        %v1325 = vmul.f32 %v1324, 0.032258064
        %v1326 = vrsqrt.pop %v1325
        %v1327 = vmul.f32 %v1326, %v1325
        %v1328 = vmul.f32 %v1327, %v1326
        %v1329 = vmul.f32 0.5, %v1328
        %v1330 = vsub.f32 1.5, %v1329
        %v1331 = vmul.f32 %v1326, %v1330
        %v1332 = vmul.f32 %v1325, %v1331
        %vm1333 = vcmp.eq.f32.partialorder %v1325, inf
        %v1334 = vsel %vm1333, %v1325, %v1332
        %vm1335 = vcmp.eq.f32.partialorder %v1325, 0.0
        %v1336 = vand.u32 %v1325, 2147483648
        %v1337 = vsel %vm1335, %v1336, %v1334
        %v1338 = vadd.f32 %v1337, 1e-06
        %v1339 = vrcp.pop %v1338
        %v1340 = vmul.f32 %v1320, %v1339
        %v1342 = vperm.slane %v1306, 0
        %v1344 = vmul.f32 %v1342, %v1340
        %v1346 = vperm.slane %v1307, 0
        %v1348 = vadd.f32 %v1344, %v1346
        %v1349 = vld [vmem:[%s15] sm:$0xff]
        %v1350 = vld [vmem:[%s15 + $0x8] sm:$0xff]
        %v1351 = vld [vmem:[%s15 + $0x10] sm:$0xff]
        %v1352 = vld [vmem:[%s15 + $0x18] sm:$0xff]
        %v1353 = vld [vmem:[%s17] sm:$0x1]
        %v1355 = vperm.slane %v1353, 0
        %v1358 = vsel %vm1308, %v1348, 0
        %1360 = vmatpush.msra.mxu0 0.0
        %1361 = vmatpush.msra.mxu0 0.0
        %1362 = vmatpush.msra.mxu0 0.0
        %1363 = vmatpush.msra.mxu0 0.0
        %1364 = vmatpush.msra.mxu0 0.0
        %1365 = vmatpush.msra.mxu0 0.0
        %1366 = vmatpush.msra.mxu0 0.0
        %1367 = vmatpush.msra.mxu0 0.0
        %1368 = vmatpush.msra.mxu0 0.0
        %1369 = vmatpush.msra.mxu0 0.0
        %1370 = vmatpush.msra.mxu0 0.0
        %1371 = vmatpush.msra.mxu0 0.0
        %1372 = vmatpush.msra.mxu0 %v1352
        %1373 = vmatpush.msra.mxu0 %v1351
        %1374 = vmatpush.msra.mxu0 %v1350
        %1375 = vmatpush.msra.mxu0 %v1349
        %1376 = vmatmul.f32.gmra.mxu0 %v1358
        %v1377 = vpop.f32.mrf.mxu0
        %v1378 = vadd.f32 %v1355, %v1377
        %1379 = vdwg.mxu0
        %1381 = vrot.lane.b32.xlu0 %v1378, 120
        %v1382 = vpop.permute.xlu0 %1381
        %1383 = vrot.lane.b32.xlu0 %v1378, 112
        %v1384 = vpop.permute.xlu0 %1383
        %1385 = vrot.lane.b32.xlu0 %v1378, 104
        %v1386 = vpop.permute.xlu0 %1385
        %1387 = vrot.lane.b32.xlu0 %v1378, 96
        %v1388 = vpop.permute.xlu0 %1387
        %vm1389 = vcmask 64512
        %v1390 = vsel %vm1389, %v1378, 0
        %v1392 = vsel %vm1389, %v1388, 0
        %1394 = vmatpush.xpose.msra.mxu0 0.0
        %1395 = vmatpush.xpose.msra.mxu0 0.0
        %1396 = vmatpush.xpose.msra.mxu0 0.0
        %1397 = vmatpush.xpose.msra.mxu0 0.0
        %1398 = vmatpush.xpose.msra.mxu0 0.0
        %1399 = vmatpush.xpose.msra.mxu0 0.0
        %1400 = vmatpush.xpose.msra.mxu0 0.0
        %1401 = vmatpush.xpose.msra.mxu0 0.0
        %1402 = vmatpush.xpose.msra.mxu0 0.0
        %1403 = vmatpush.xpose.msra.mxu0 0.0
        %1404 = vmatpush.xpose.msra.mxu0 0.0
        %1405 = vmatpush.xpose.msra.mxu0 0.0
        %1406 = vmatpush.xpose.msra.mxu0 0.0
        %1407 = vmatpush.xpose.msra.mxu0 0.0
        %1408 = vmatpush.xpose.msra.mxu0 0.0
        %1409 = vmatpush.xpose.msra.mxu0 %v1392
        %1410 = vmatmul.f32.gmra.mxu0 %v1390
        %v1411 = vpop.f32.mrf.mxu0
        %v1412 = vadd.f32 0.0, %v1411
        %1413 = vdwg.mxu0
        %1414 = vrot.lane.b32.xlu0 %v1382, 96
        %v1415 = vpop.permute.xlu0 %1414
        %v1416 = vsel %vm1389, %v1382, 0
        %v1418 = vsel %vm1389, %v1415, 0
        %1420 = vmatpush.xpose.msra.mxu0 0.0
        %1421 = vmatpush.xpose.msra.mxu0 0.0
        %1422 = vmatpush.xpose.msra.mxu0 0.0
        %1423 = vmatpush.xpose.msra.mxu0 0.0
        %1424 = vmatpush.xpose.msra.mxu0 0.0
        %1425 = vmatpush.xpose.msra.mxu0 0.0
        %1426 = vmatpush.xpose.msra.mxu0 0.0
        %1427 = vmatpush.xpose.msra.mxu0 0.0
        %1428 = vmatpush.xpose.msra.mxu0 0.0
        %1429 = vmatpush.xpose.msra.mxu0 0.0
        %1430 = vmatpush.xpose.msra.mxu0 0.0
        %1431 = vmatpush.xpose.msra.mxu0 0.0
        %1432 = vmatpush.xpose.msra.mxu0 0.0
        %1433 = vmatpush.xpose.msra.mxu0 0.0
        %1434 = vmatpush.xpose.msra.mxu0 0.0
        %1435 = vmatpush.xpose.msra.mxu0 %v1418
        %1436 = vmatmul.f32.gmra.mxu0 %v1416
        %v1437 = vpop.f32.mrf.mxu0
        %v1438 = vadd.f32 0.0, %v1437
        %1439 = vdwg.mxu0
        %1440 = vrot.lane.b32.xlu0 %v1384, 96
        %v1441 = vpop.permute.xlu0 %1440
        %v1442 = vsel %vm1389, %v1384, 0
        %v1444 = vsel %vm1389, %v1441, 0
        %1446 = vmatpush.xpose.msra.mxu0 0.0
        %1447 = vmatpush.xpose.msra.mxu0 0.0
        %1448 = vmatpush.xpose.msra.mxu0 0.0
        %1449 = vmatpush.xpose.msra.mxu0 0.0
        %1450 = vmatpush.xpose.msra.mxu0 0.0
        %1451 = vmatpush.xpose.msra.mxu0 0.0
        %1452 = vmatpush.xpose.msra.mxu0 0.0
        %1453 = vmatpush.xpose.msra.mxu0 0.0
        %1454 = vmatpush.xpose.msra.mxu0 0.0
        %1455 = vmatpush.xpose.msra.mxu0 0.0
        %1456 = vmatpush.xpose.msra.mxu0 0.0
        %1457 = vmatpush.xpose.msra.mxu0 0.0
        %1458 = vmatpush.xpose.msra.mxu0 0.0
        %1459 = vmatpush.xpose.msra.mxu0 0.0
        %1460 = vmatpush.xpose.msra.mxu0 0.0
        %1461 = vmatpush.xpose.msra.mxu0 %v1444
        %1462 = vmatmul.f32.gmra.mxu0 %v1442
        %v1463 = vpop.f32.mrf.mxu0
        %v1464 = vadd.f32 0.0, %v1463
        %1465 = vdwg.mxu0
        %1466 = vrot.lane.b32.xlu0 %v1386, 96
        %v1467 = vpop.permute.xlu0 %1466
        %v1468 = vsel %vm1389, %v1386, 0
        %v1470 = vsel %vm1389, %v1467, 0
        %1472 = vmatpush.xpose.msra.mxu0 0.0
        %1473 = vmatpush.xpose.msra.mxu0 0.0
        %1474 = vmatpush.xpose.msra.mxu0 0.0
        %1475 = vmatpush.xpose.msra.mxu0 0.0
        %1476 = vmatpush.xpose.msra.mxu0 0.0
        %1477 = vmatpush.xpose.msra.mxu0 0.0
        %1478 = vmatpush.xpose.msra.mxu0 0.0
        %1479 = vmatpush.xpose.msra.mxu0 0.0
        %1480 = vmatpush.xpose.msra.mxu0 0.0
        %1481 = vmatpush.xpose.msra.mxu0 0.0
        %1482 = vmatpush.xpose.msra.mxu0 0.0
        %1483 = vmatpush.xpose.msra.mxu0 0.0
        %1484 = vmatpush.xpose.msra.mxu0 0.0
        %1485 = vmatpush.xpose.msra.mxu0 0.0
        %1486 = vmatpush.xpose.msra.mxu0 0.0
        %1487 = vmatpush.xpose.msra.mxu0 %v1470
        %1488 = vmatmul.f32.gmra.mxu0 %v1468
        %v1489 = vpop.f32.mrf.mxu0
        %v1490 = vadd.f32 0.0, %v1489
        %1491 = vdwg.mxu0
        %v1492 = vmul.f32 %v1412, 0.35355338
        %v1493 = vmul.f32 %v1438, 0.35355338
        %v1494 = vmul.f32 %v1464, 0.35355338
        %v1495 = vmul.f32 %v1490, 0.35355338
        %v1496 = vadd.f32 %v1492, %v1302
        %v1497 = vadd.f32 %v1493, %v1302
        %v1498 = vadd.f32 %v1494, %v1302
        %v1499 = vadd.f32 %v1495, %v1302
        %v1500 = vsel %vm1389, %v1496, -inf
        %1501 = vmax.xlane.f32.xlu0 %v1500
        %v1502 = vpop.xlane.xlu0 %1501
        %v1503 = vsel %vm1389, %v1497, -inf
        %1504 = vmax.xlane.f32.xlu0 %v1503
        %v1505 = vpop.xlane.xlu0 %1504
        %v1506 = vsel %vm1389, %v1498, -inf
        %1507 = vmax.xlane.f32.xlu0 %v1506
        %v1508 = vpop.xlane.xlu0 %1507
        %v1509 = vsel %vm1389, %v1499, -inf
        %1510 = vmax.xlane.f32.xlu0 %v1509
        %v1511 = vpop.xlane.xlu0 %1510
        %v1512 = vsub.f32 %v1496, %v1502
        %v1513 = vsub.f32 %v1497, %v1505
        %v1514 = vsub.f32 %v1498, %v1508
        %v1515 = vsub.f32 %v1499, %v1511
        %v1516 = vmul.f32 %v1512, 1.442695
        %v1517 = vpow.pop %v1516
        %v1518 = vmul.f32 %v1513, 1.442695
        %v1519 = vpow.pop %v1518
        %v1520 = vmul.f32 %v1514, 1.442695
        %v1521 = vpow.pop %v1520
        %v1522 = vmul.f32 %v1515, 1.442695
        %v1523 = vpow.pop %v1522
        %v1524 = vsel %vm1389, %v1517, 0.0
        %1525 = vadd.xlane.f32.xlu0 %v1524
        %v1526 = vpop.xlane.xlu0 %1525
        %v1527 = vsel %vm1389, %v1519, 0.0
        %1528 = vadd.xlane.f32.xlu0 %v1527
        %v1529 = vpop.xlane.xlu0 %1528
        %v1530 = vsel %vm1389, %v1521, 0.0
        %1531 = vadd.xlane.f32.xlu0 %v1530
        %v1532 = vpop.xlane.xlu0 %1531
        %v1533 = vsel %vm1389, %v1523, 0.0
        %1534 = vadd.xlane.f32.xlu0 %v1533
        %v1535 = vpop.xlane.xlu0 %1534
        %v1536 = vrcp.pop %v1526
        %v1537 = vrcp.pop %v1529
        %v1538 = vrcp.pop %v1532
        %v1539 = vrcp.pop %v1535
        %v1540 = vmul.f32 %v1517, %v1536
        %v1541 = vmul.f32 %v1519, %v1537
        %v1542 = vmul.f32 %v1521, %v1538
        %v1543 = vmul.f32 %v1523, %v1539
        %1544 = vrot.lane.b32.xlu0 %v1378, 64
        %v1545 = vpop.permute.xlu0 %1544
        %v1548 = vsel %vm1389, %v1540, 0
        %1550 = vmatpush.msra.mxu0 0.0
        %1551 = vmatpush.msra.mxu0 0.0
        %1552 = vmatpush.msra.mxu0 0.0
        %1553 = vmatpush.msra.mxu0 0.0
        %1554 = vmatpush.msra.mxu0 0.0
        %1555 = vmatpush.msra.mxu0 0.0
        %1556 = vmatpush.msra.mxu0 0.0
        %1557 = vmatpush.msra.mxu0 0.0
        %1558 = vmatpush.msra.mxu0 0.0
        %1559 = vmatpush.msra.mxu0 0.0
        %1560 = vmatpush.msra.mxu0 0.0
        %1561 = vmatpush.msra.mxu0 0.0
        %1562 = vmatpush.msra.mxu0 0.0
        %1563 = vmatpush.msra.mxu0 0.0
        %1564 = vmatpush.msra.mxu0 0.0
        %1565 = vmatpush.msra.mxu0 %v1545
        %1566 = vmatmul.f32.gmra.mxu0 %v1548
        %v1567 = vpop.f32.mrf.mxu0
        %v1568 = vadd.f32 0.0, %v1567
        %1569 = vdwg.mxu0
        %1570 = vrot.lane.b32.xlu0 %v1382, 64
        %v1571 = vpop.permute.xlu0 %1570
        %v1574 = vsel %vm1389, %v1541, 0
        %1576 = vmatpush.msra.mxu0 0.0
        %1577 = vmatpush.msra.mxu0 0.0
        %1578 = vmatpush.msra.mxu0 0.0
        %1579 = vmatpush.msra.mxu0 0.0
        %1580 = vmatpush.msra.mxu0 0.0
        %1581 = vmatpush.msra.mxu0 0.0
        %1582 = vmatpush.msra.mxu0 0.0
        %1583 = vmatpush.msra.mxu0 0.0
        %1584 = vmatpush.msra.mxu0 0.0
        %1585 = vmatpush.msra.mxu0 0.0
        %1586 = vmatpush.msra.mxu0 0.0
        %1587 = vmatpush.msra.mxu0 0.0
        %1588 = vmatpush.msra.mxu0 0.0
        %1589 = vmatpush.msra.mxu0 0.0
        %1590 = vmatpush.msra.mxu0 0.0
        %1591 = vmatpush.msra.mxu0 %v1571
        %1592 = vmatmul.f32.gmra.mxu0 %v1574
        %v1593 = vpop.f32.mrf.mxu0
        %v1594 = vadd.f32 0.0, %v1593
        %1595 = vdwg.mxu0
        %1596 = vrot.lane.b32.xlu0 %v1384, 64
        %v1597 = vpop.permute.xlu0 %1596
        %v1600 = vsel %vm1389, %v1542, 0
        %1602 = vmatpush.msra.mxu0 0.0
        %1603 = vmatpush.msra.mxu0 0.0
        %1604 = vmatpush.msra.mxu0 0.0
        %1605 = vmatpush.msra.mxu0 0.0
        %1606 = vmatpush.msra.mxu0 0.0
        %1607 = vmatpush.msra.mxu0 0.0
        %1608 = vmatpush.msra.mxu0 0.0
        %1609 = vmatpush.msra.mxu0 0.0
        %1610 = vmatpush.msra.mxu0 0.0
        %1611 = vmatpush.msra.mxu0 0.0
        %1612 = vmatpush.msra.mxu0 0.0
        %1613 = vmatpush.msra.mxu0 0.0
        %1614 = vmatpush.msra.mxu0 0.0
        %1615 = vmatpush.msra.mxu0 0.0
        %1616 = vmatpush.msra.mxu0 0.0
        %1617 = vmatpush.msra.mxu0 %v1597
        %1618 = vmatmul.f32.gmra.mxu0 %v1600
        %v1619 = vpop.f32.mrf.mxu0
        %v1620 = vadd.f32 0.0, %v1619
        %1621 = vdwg.mxu0
        %1622 = vrot.lane.b32.xlu0 %v1386, 64
        %v1623 = vpop.permute.xlu0 %1622
        %v1626 = vsel %vm1389, %v1543, 0
        %1628 = vmatpush.msra.mxu0 0.0
        %1629 = vmatpush.msra.mxu0 0.0
        %1630 = vmatpush.msra.mxu0 0.0
        %1631 = vmatpush.msra.mxu0 0.0
        %1632 = vmatpush.msra.mxu0 0.0
        %1633 = vmatpush.msra.mxu0 0.0
        %1634 = vmatpush.msra.mxu0 0.0
        %1635 = vmatpush.msra.mxu0 0.0
        %1636 = vmatpush.msra.mxu0 0.0
        %1637 = vmatpush.msra.mxu0 0.0
        %1638 = vmatpush.msra.mxu0 0.0
        %1639 = vmatpush.msra.mxu0 0.0
        %1640 = vmatpush.msra.mxu0 0.0
        %1641 = vmatpush.msra.mxu0 0.0
        %1642 = vmatpush.msra.mxu0 0.0
        %1643 = vmatpush.msra.mxu0 %v1623
        %1644 = vmatmul.f32.gmra.mxu0 %v1626
        %v1645 = vpop.f32.mrf.mxu0
        %v1646 = vadd.f32 0.0, %v1645
        %1647 = vdwg.mxu0
        %1649 = vrot.lane.b32.xlu0 %v1594, 8
        %v1650 = vpop.permute.xlu0 %1649
        %1653 = vrot.lane.b32.xlu0 %v1620, 16
        %v1654 = vpop.permute.xlu0 %1653
        %1657 = vrot.lane.b32.xlu0 %v1646, 24
        %v1658 = vpop.permute.xlu0 %1657
        %v1660 = vsel %vm1389, %v1568, %v1650
        %vm1661 = vcmask 130048
        %v1662 = vsel %vm1661, %v1660, %v1654
        %vm1663 = vcmask 195584
        %v1664 = vsel %vm1663, %v1662, %v1658
        %v1665 = vld [vmem:[%s19] sm:$0xff]
        %v1666 = vld [vmem:[%s19 + $0x8] sm:$0xff]
        %v1667 = vld [vmem:[%s19 + $0x10] sm:$0xff]
        %v1668 = vld [vmem:[%s19 + $0x18] sm:$0xff]
        %v1669 = vld [vmem:[%s21] sm:$0x1]
        %v1671 = vperm.slane %v1669, 0
        %v1674 = vsel %vm1308, %v1664, 0
        %1676 = vmatpush.msra.mxu0 0.0
        %1677 = vmatpush.msra.mxu0 0.0
        %1678 = vmatpush.msra.mxu0 0.0
        %1679 = vmatpush.msra.mxu0 0.0
        %1680 = vmatpush.msra.mxu0 0.0
        %1681 = vmatpush.msra.mxu0 0.0
        %1682 = vmatpush.msra.mxu0 0.0
        %1683 = vmatpush.msra.mxu0 0.0
        %1684 = vmatpush.msra.mxu0 0.0
        %1685 = vmatpush.msra.mxu0 0.0
        %1686 = vmatpush.msra.mxu0 0.0
        %1687 = vmatpush.msra.mxu0 0.0
        %1688 = vmatpush.msra.mxu0 %v1668
        %1689 = vmatpush.msra.mxu0 %v1667
        %1690 = vmatpush.msra.mxu0 %v1666
        %1691 = vmatpush.msra.mxu0 %v1665
        %1692 = vmatmul.f32.gmra.mxu0 %v1674
        %v1693 = vpop.f32.mrf.mxu0
        %v1694 = vadd.f32 %v1671, %v1693
        %1695 = vdwg.mxu0
        %v1696 = vadd.f32 %v1305, %v1694
        %v1697 = vld [vmem:[%s23] sm:$0x1]
        %v1698 = vld [vmem:[%s25] sm:$0x1]
        %v1699 = vsel %vm1308, %v1696, 0.0
        %1700 = vadd.xlane.f32.xlu0 %v1699
        %v1701 = vpop.xlane.xlu0 %1700
        %v1702 = vmul.f32 %v1701, %v1318
        %v1703 = vsub.f32 %v1696, %v1702
        %v1704 = vmul.f32 %v1703, %v1703
        %v1705 = vsel %vm1308, %v1704, 0.0
        %1706 = vadd.xlane.f32.xlu0 %v1705
        %v1707 = vpop.xlane.xlu0 %1706
        %v1708 = vmul.f32 %v1707, 0.032258064
        %v1709 = vrsqrt.pop %v1708
        %v1710 = vmul.f32 %v1709, %v1708
        %v1711 = vmul.f32 %v1710, %v1709
        %v1712 = vmul.f32 0.5, %v1711
        %v1713 = vsub.f32 1.5, %v1712
        %v1714 = vmul.f32 %v1709, %v1713
        %v1715 = vmul.f32 %v1708, %v1714
        %vm1716 = vcmp.eq.f32.partialorder %v1708, inf
        %v1717 = vsel %vm1716, %v1708, %v1715
        %vm1718 = vcmp.eq.f32.partialorder %v1708, 0.0
        %v1719 = vand.u32 %v1708, 2147483648
        %v1720 = vsel %vm1718, %v1719, %v1717
        %v1721 = vadd.f32 %v1720, 1e-06
        %v1722 = vrcp.pop %v1721
        %v1723 = vmul.f32 %v1703, %v1722
        %v1725 = vperm.slane %v1697, 0
        %v1727 = vmul.f32 %v1725, %v1723
        %v1729 = vperm.slane %v1698, 0
        %v1731 = vadd.f32 %v1727, %v1729
        %v1732 = vld [vmem:[%s27] sm:$0xff]
        %v1733 = vld [vmem:[%s27 + $0x8] sm:$0xff]
        %v1734 = vld [vmem:[%s27 + $0x10] sm:$0xff]
        %v1735 = vld [vmem:[%s27 + $0x18] sm:$0xff]
        %v1736 = vld [vmem:[%s29] sm:$0x1]
        %v1738 = vperm.slane %v1736, 0
        %v1741 = vsel %vm1308, %v1731, 0
        %1743 = vmatpush.msra.mxu0 0.0
        %1744 = vmatpush.msra.mxu0 0.0
        %1745 = vmatpush.msra.mxu0 0.0
        %1746 = vmatpush.msra.mxu0 0.0
        %1747 = vmatpush.msra.mxu0 0.0
        %1748 = vmatpush.msra.mxu0 0.0
        %1749 = vmatpush.msra.mxu0 0.0
        %1750 = vmatpush.msra.mxu0 0.0
        %1751 = vmatpush.msra.mxu0 0.0
        %1752 = vmatpush.msra.mxu0 0.0
        %1753 = vmatpush.msra.mxu0 0.0
        %1754 = vmatpush.msra.mxu0 0.0
        %1755 = vmatpush.msra.mxu0 %v1735
        %1756 = vmatpush.msra.mxu0 %v1734
        %1757 = vmatpush.msra.mxu0 %v1733
        %1758 = vmatpush.msra.mxu0 %v1732
        %1759 = vmatmul.f32.gmra.mxu0 %v1741
        %v1760 = vpop.f32.mrf.mxu0
        %v1761 = vadd.f32 %v1738, %v1760
        %1762 = vdwg.mxu0
        %v1763 = vmax.f32 %v1761, 0.0
        %v1764 = vld [vmem:[%s31] sm:$0xff]
        %v1765 = vld [vmem:[%s31 + $0x8] sm:$0xff]
        %v1766 = vld [vmem:[%s31 + $0x10] sm:$0xff]
        %v1767 = vld [vmem:[%s31 + $0x18] sm:$0xff]
        %v1768 = vld [vmem:[%s31 + $0x20] sm:$0xff]
        %v1769 = vld [vmem:[%s31 + $0x28] sm:$0xff]
        %v1770 = vld [vmem:[%s31 + $0x30] sm:$0xff]
        %v1771 = vld [vmem:[%s31 + $0x38] sm:$0xff]
        %v1772 = vld [vmem:[%s33] sm:$0x1]
        %v1774 = vperm.slane %v1772, 0
        %vm1776 = vcmask 523264
        %v1778 = vsel %vm1776, %v1763, 0
        %1780 = vmatpush.msra.mxu0 0.0
        %1781 = vmatpush.msra.mxu0 0.0
        %1782 = vmatpush.msra.mxu0 0.0
        %1783 = vmatpush.msra.mxu0 0.0
        %1784 = vmatpush.msra.mxu0 0.0
        %1785 = vmatpush.msra.mxu0 0.0
        %1786 = vmatpush.msra.mxu0 0.0
        %1787 = vmatpush.msra.mxu0 0.0
        %1788 = vmatpush.msra.mxu0 %v1771
        %1789 = vmatpush.msra.mxu0 %v1770
        %1790 = vmatpush.msra.mxu0 %v1769
        %1791 = vmatpush.msra.mxu0 %v1768
        %1792 = vmatpush.msra.mxu0 %v1767
        %1793 = vmatpush.msra.mxu0 %v1766
        %1794 = vmatpush.msra.mxu0 %v1765
        %1795 = vmatpush.msra.mxu0 %v1764
        %1796 = vmatmul.f32.gmra.mxu0 %v1778
        %v1797 = vpop.f32.mrf.mxu0
        %v1798 = vadd.f32 %v1774, %v1797
        %1799 = vdwg.mxu0
        %v1800 = vadd.f32 %v1696, %v1798
        %s1801 = scalar_lea.vmem %s11, 1
        %v1802 = vld [vmem:[%s1801] sm:$0x1]
        %s1803 = scalar_lea.vmem %s13, 1
        %v1804 = vld [vmem:[%s1803] sm:$0x1]
        %v1805 = vsel %vm1308, %v1800, 0.0
        %1806 = vadd.xlane.f32.xlu0 %v1805
        %v1807 = vpop.xlane.xlu0 %1806
        %v1808 = vmul.f32 %v1807, %v1318
        %v1809 = vsub.f32 %v1800, %v1808
        %v1810 = vmul.f32 %v1809, %v1809
        %v1811 = vsel %vm1308, %v1810, 0.0
        %1812 = vadd.xlane.f32.xlu0 %v1811
        %v1813 = vpop.xlane.xlu0 %1812
        %v1814 = vmul.f32 %v1813, 0.032258064
        %v1815 = vrsqrt.pop %v1814
        %v1816 = vmul.f32 %v1815, %v1814
        %v1817 = vmul.f32 %v1816, %v1815
        %v1818 = vmul.f32 0.5, %v1817
        %v1819 = vsub.f32 1.5, %v1818
        %v1820 = vmul.f32 %v1815, %v1819
        %v1821 = vmul.f32 %v1814, %v1820
        %vm1822 = vcmp.eq.f32.partialorder %v1814, inf
        %v1823 = vsel %vm1822, %v1814, %v1821
        %vm1824 = vcmp.eq.f32.partialorder %v1814, 0.0
        %v1825 = vand.u32 %v1814, 2147483648
        %v1826 = vsel %vm1824, %v1825, %v1823
        %v1827 = vadd.f32 %v1826, 1e-06
        %v1828 = vrcp.pop %v1827
        %v1829 = vmul.f32 %v1809, %v1828
        %v1831 = vperm.slane %v1802, 0
        %v1833 = vmul.f32 %v1831, %v1829
        %v1835 = vperm.slane %v1804, 0
        %v1837 = vadd.f32 %v1833, %v1835
        %s1838 = scalar_lea.vmem %s15, 32
        %v1839 = vld [vmem:[%s1838] sm:$0xff]
        %v1840 = vld [vmem:[%s1838 + $0x8] sm:$0xff]
        %v1841 = vld [vmem:[%s1838 + $0x10] sm:$0xff]
        %v1842 = vld [vmem:[%s1838 + $0x18] sm:$0xff]
        %s1843 = scalar_lea.vmem %s17, 1
        %v1844 = vld [vmem:[%s1843] sm:$0x1]
        %v1846 = vperm.slane %v1844, 0
        %v1849 = vsel %vm1308, %v1837, 0
        %1851 = vmatpush.msra.mxu0 0.0
        %1852 = vmatpush.msra.mxu0 0.0
        %1853 = vmatpush.msra.mxu0 0.0
        %1854 = vmatpush.msra.mxu0 0.0
        %1855 = vmatpush.msra.mxu0 0.0
        %1856 = vmatpush.msra.mxu0 0.0
        %1857 = vmatpush.msra.mxu0 0.0
        %1858 = vmatpush.msra.mxu0 0.0
        %1859 = vmatpush.msra.mxu0 0.0
        %1860 = vmatpush.msra.mxu0 0.0
        %1861 = vmatpush.msra.mxu0 0.0
        %1862 = vmatpush.msra.mxu0 0.0
        %1863 = vmatpush.msra.mxu0 %v1842
        %1864 = vmatpush.msra.mxu0 %v1841
        %1865 = vmatpush.msra.mxu0 %v1840
        %1866 = vmatpush.msra.mxu0 %v1839
        %1867 = vmatmul.f32.gmra.mxu0 %v1849
        %v1868 = vpop.f32.mrf.mxu0
        %v1869 = vadd.f32 %v1846, %v1868
        %1870 = vdwg.mxu0
        %1872 = vrot.lane.b32.xlu0 %v1869, 120
        %v1873 = vpop.permute.xlu0 %1872
        %1874 = vrot.lane.b32.xlu0 %v1869, 112
        %v1875 = vpop.permute.xlu0 %1874
        %1876 = vrot.lane.b32.xlu0 %v1869, 104
        %v1877 = vpop.permute.xlu0 %1876
        %1878 = vrot.lane.b32.xlu0 %v1869, 96
        %v1879 = vpop.permute.xlu0 %1878
        %v1880 = vsel %vm1389, %v1869, 0
        %v1882 = vsel %vm1389, %v1879, 0
        %1884 = vmatpush.xpose.msra.mxu0 0.0
        %1885 = vmatpush.xpose.msra.mxu0 0.0
        %1886 = vmatpush.xpose.msra.mxu0 0.0
        %1887 = vmatpush.xpose.msra.mxu0 0.0
        %1888 = vmatpush.xpose.msra.mxu0 0.0
        %1889 = vmatpush.xpose.msra.mxu0 0.0
        %1890 = vmatpush.xpose.msra.mxu0 0.0
        %1891 = vmatpush.xpose.msra.mxu0 0.0
        %1892 = vmatpush.xpose.msra.mxu0 0.0
        %1893 = vmatpush.xpose.msra.mxu0 0.0
        %1894 = vmatpush.xpose.msra.mxu0 0.0
        %1895 = vmatpush.xpose.msra.mxu0 0.0
        %1896 = vmatpush.xpose.msra.mxu0 0.0
        %1897 = vmatpush.xpose.msra.mxu0 0.0
        %1898 = vmatpush.xpose.msra.mxu0 0.0
        %1899 = vmatpush.xpose.msra.mxu0 %v1882
        %1900 = vmatmul.f32.gmra.mxu0 %v1880
        %v1901 = vpop.f32.mrf.mxu0
        %v1902 = vadd.f32 0.0, %v1901
        %1903 = vdwg.mxu0
        %1904 = vrot.lane.b32.xlu0 %v1873, 96
        %v1905 = vpop.permute.xlu0 %1904
        %v1906 = vsel %vm1389, %v1873, 0
        %v1908 = vsel %vm1389, %v1905, 0
        %1910 = vmatpush.xpose.msra.mxu0 0.0
        %1911 = vmatpush.xpose.msra.mxu0 0.0
        %1912 = vmatpush.xpose.msra.mxu0 0.0
        %1913 = vmatpush.xpose.msra.mxu0 0.0
        %1914 = vmatpush.xpose.msra.mxu0 0.0
        %1915 = vmatpush.xpose.msra.mxu0 0.0
        %1916 = vmatpush.xpose.msra.mxu0 0.0
        %1917 = vmatpush.xpose.msra.mxu0 0.0
        %1918 = vmatpush.xpose.msra.mxu0 0.0
        %1919 = vmatpush.xpose.msra.mxu0 0.0
        %1920 = vmatpush.xpose.msra.mxu0 0.0
        %1921 = vmatpush.xpose.msra.mxu0 0.0
        %1922 = vmatpush.xpose.msra.mxu0 0.0
        %1923 = vmatpush.xpose.msra.mxu0 0.0
        %1924 = vmatpush.xpose.msra.mxu0 0.0
        %1925 = vmatpush.xpose.msra.mxu0 %v1908
        %1926 = vmatmul.f32.gmra.mxu0 %v1906
        %v1927 = vpop.f32.mrf.mxu0
        %v1928 = vadd.f32 0.0, %v1927
        %1929 = vdwg.mxu0
        %1930 = vrot.lane.b32.xlu0 %v1875, 96
        %v1931 = vpop.permute.xlu0 %1930
        %v1932 = vsel %vm1389, %v1875, 0
        %v1934 = vsel %vm1389, %v1931, 0
        %1936 = vmatpush.xpose.msra.mxu0 0.0
        %1937 = vmatpush.xpose.msra.mxu0 0.0
        %1938 = vmatpush.xpose.msra.mxu0 0.0
        %1939 = vmatpush.xpose.msra.mxu0 0.0
        %1940 = vmatpush.xpose.msra.mxu0 0.0
        %1941 = vmatpush.xpose.msra.mxu0 0.0
        %1942 = vmatpush.xpose.msra.mxu0 0.0
        %1943 = vmatpush.xpose.msra.mxu0 0.0
        %1944 = vmatpush.xpose.msra.mxu0 0.0
        %1945 = vmatpush.xpose.msra.mxu0 0.0
        %1946 = vmatpush.xpose.msra.mxu0 0.0
        %1947 = vmatpush.xpose.msra.mxu0 0.0
        %1948 = vmatpush.xpose.msra.mxu0 0.0
        %1949 = vmatpush.xpose.msra.mxu0 0.0
        %1950 = vmatpush.xpose.msra.mxu0 0.0
        %1951 = vmatpush.xpose.msra.mxu0 %v1934
        %1952 = vmatmul.f32.gmra.mxu0 %v1932
        %v1953 = vpop.f32.mrf.mxu0
        %v1954 = vadd.f32 0.0, %v1953
        %1955 = vdwg.mxu0
        %1956 = vrot.lane.b32.xlu0 %v1877, 96
        %v1957 = vpop.permute.xlu0 %1956
        %v1958 = vsel %vm1389, %v1877, 0
        %v1960 = vsel %vm1389, %v1957, 0
        %1962 = vmatpush.xpose.msra.mxu0 0.0
        %1963 = vmatpush.xpose.msra.mxu0 0.0
        %1964 = vmatpush.xpose.msra.mxu0 0.0
        %1965 = vmatpush.xpose.msra.mxu0 0.0
        %1966 = vmatpush.xpose.msra.mxu0 0.0
        %1967 = vmatpush.xpose.msra.mxu0 0.0
        %1968 = vmatpush.xpose.msra.mxu0 0.0
        %1969 = vmatpush.xpose.msra.mxu0 0.0
        %1970 = vmatpush.xpose.msra.mxu0 0.0
        %1971 = vmatpush.xpose.msra.mxu0 0.0
        %1972 = vmatpush.xpose.msra.mxu0 0.0
        %1973 = vmatpush.xpose.msra.mxu0 0.0
        %1974 = vmatpush.xpose.msra.mxu0 0.0
        %1975 = vmatpush.xpose.msra.mxu0 0.0
        %1976 = vmatpush.xpose.msra.mxu0 0.0
        %1977 = vmatpush.xpose.msra.mxu0 %v1960
        %1978 = vmatmul.f32.gmra.mxu0 %v1958
        %v1979 = vpop.f32.mrf.mxu0
        %v1980 = vadd.f32 0.0, %v1979
        %1981 = vdwg.mxu0
        %v1982 = vmul.f32 %v1902, 0.35355338
        %v1983 = vmul.f32 %v1928, 0.35355338
        %v1984 = vmul.f32 %v1954, 0.35355338
        %v1985 = vmul.f32 %v1980, 0.35355338
        %v1986 = vadd.f32 %v1982, %v1302
        %v1987 = vadd.f32 %v1983, %v1302
        %v1988 = vadd.f32 %v1984, %v1302
        %v1989 = vadd.f32 %v1985, %v1302
        %v1990 = vsel %vm1389, %v1986, -inf
        %1991 = vmax.xlane.f32.xlu0 %v1990
        %v1992 = vpop.xlane.xlu0 %1991
        %v1993 = vsel %vm1389, %v1987, -inf
        %1994 = vmax.xlane.f32.xlu0 %v1993
        %v1995 = vpop.xlane.xlu0 %1994
        %v1996 = vsel %vm1389, %v1988, -inf
        %1997 = vmax.xlane.f32.xlu0 %v1996
        %v1998 = vpop.xlane.xlu0 %1997
        %v1999 = vsel %vm1389, %v1989, -inf
        %2000 = vmax.xlane.f32.xlu0 %v1999
        %v2001 = vpop.xlane.xlu0 %2000
        %v2002 = vsub.f32 %v1986, %v1992
        %v2003 = vsub.f32 %v1987, %v1995
        %v2004 = vsub.f32 %v1988, %v1998
        %v2005 = vsub.f32 %v1989, %v2001
        %v2006 = vmul.f32 %v2002, 1.442695
        %v2007 = vpow.pop %v2006
        %v2008 = vmul.f32 %v2003, 1.442695
        %v2009 = vpow.pop %v2008
        %v2010 = vmul.f32 %v2004, 1.442695
        %v2011 = vpow.pop %v2010
        %v2012 = vmul.f32 %v2005, 1.442695
        %v2013 = vpow.pop %v2012
        %v2014 = vsel %vm1389, %v2007, 0.0
        %2015 = vadd.xlane.f32.xlu0 %v2014
        %v2016 = vpop.xlane.xlu0 %2015
        %v2017 = vsel %vm1389, %v2009, 0.0
        %2018 = vadd.xlane.f32.xlu0 %v2017
        %v2019 = vpop.xlane.xlu0 %2018
        %v2020 = vsel %vm1389, %v2011, 0.0
        %2021 = vadd.xlane.f32.xlu0 %v2020
        %v2022 = vpop.xlane.xlu0 %2021
        %v2023 = vsel %vm1389, %v2013, 0.0
        %2024 = vadd.xlane.f32.xlu0 %v2023
        %v2025 = vpop.xlane.xlu0 %2024
        %v2026 = vrcp.pop %v2016
        %v2027 = vrcp.pop %v2019
        %v2028 = vrcp.pop %v2022
        %v2029 = vrcp.pop %v2025
        %v2030 = vmul.f32 %v2007, %v2026
        %v2031 = vmul.f32 %v2009, %v2027
        %v2032 = vmul.f32 %v2011, %v2028
        %v2033 = vmul.f32 %v2013, %v2029
        %2034 = vrot.lane.b32.xlu0 %v1869, 64
        %v2035 = vpop.permute.xlu0 %2034
        %v2038 = vsel %vm1389, %v2030, 0
        %2040 = vmatpush.msra.mxu0 0.0
        %2041 = vmatpush.msra.mxu0 0.0
        %2042 = vmatpush.msra.mxu0 0.0
        %2043 = vmatpush.msra.mxu0 0.0
        %2044 = vmatpush.msra.mxu0 0.0
        %2045 = vmatpush.msra.mxu0 0.0
        %2046 = vmatpush.msra.mxu0 0.0
        %2047 = vmatpush.msra.mxu0 0.0
        %2048 = vmatpush.msra.mxu0 0.0
        %2049 = vmatpush.msra.mxu0 0.0
        %2050 = vmatpush.msra.mxu0 0.0
        %2051 = vmatpush.msra.mxu0 0.0
        %2052 = vmatpush.msra.mxu0 0.0
        %2053 = vmatpush.msra.mxu0 0.0
        %2054 = vmatpush.msra.mxu0 0.0
        %2055 = vmatpush.msra.mxu0 %v2035
        %2056 = vmatmul.f32.gmra.mxu0 %v2038
        %v2057 = vpop.f32.mrf.mxu0
        %v2058 = vadd.f32 0.0, %v2057
        %2059 = vdwg.mxu0
        %2060 = vrot.lane.b32.xlu0 %v1873, 64
        %v2061 = vpop.permute.xlu0 %2060
        %v2064 = vsel %vm1389, %v2031, 0
        %2066 = vmatpush.msra.mxu0 0.0
        %2067 = vmatpush.msra.mxu0 0.0
        %2068 = vmatpush.msra.mxu0 0.0
        %2069 = vmatpush.msra.mxu0 0.0
        %2070 = vmatpush.msra.mxu0 0.0
        %2071 = vmatpush.msra.mxu0 0.0
        %2072 = vmatpush.msra.mxu0 0.0
        %2073 = vmatpush.msra.mxu0 0.0
        %2074 = vmatpush.msra.mxu0 0.0
        %2075 = vmatpush.msra.mxu0 0.0
        %2076 = vmatpush.msra.mxu0 0.0
        %2077 = vmatpush.msra.mxu0 0.0
        %2078 = vmatpush.msra.mxu0 0.0
        %2079 = vmatpush.msra.mxu0 0.0
        %2080 = vmatpush.msra.mxu0 0.0
        %2081 = vmatpush.msra.mxu0 %v2061
        %2082 = vmatmul.f32.gmra.mxu0 %v2064
        %v2083 = vpop.f32.mrf.mxu0
        %v2084 = vadd.f32 0.0, %v2083
        %2085 = vdwg.mxu0
        %2086 = vrot.lane.b32.xlu0 %v1875, 64
        %v2087 = vpop.permute.xlu0 %2086
        %v2090 = vsel %vm1389, %v2032, 0
        %2092 = vmatpush.msra.mxu0 0.0
        %2093 = vmatpush.msra.mxu0 0.0
        %2094 = vmatpush.msra.mxu0 0.0
        %2095 = vmatpush.msra.mxu0 0.0
        %2096 = vmatpush.msra.mxu0 0.0
        %2097 = vmatpush.msra.mxu0 0.0
        %2098 = vmatpush.msra.mxu0 0.0
        %2099 = vmatpush.msra.mxu0 0.0
        %2100 = vmatpush.msra.mxu0 0.0
        %2101 = vmatpush.msra.mxu0 0.0
        %2102 = vmatpush.msra.mxu0 0.0
        %2103 = vmatpush.msra.mxu0 0.0
        %2104 = vmatpush.msra.mxu0 0.0
        %2105 = vmatpush.msra.mxu0 0.0
        %2106 = vmatpush.msra.mxu0 0.0
        %2107 = vmatpush.msra.mxu0 %v2087
        %2108 = vmatmul.f32.gmra.mxu0 %v2090
        %v2109 = vpop.f32.mrf.mxu0
        %v2110 = vadd.f32 0.0, %v2109
        %2111 = vdwg.mxu0
        %2112 = vrot.lane.b32.xlu0 %v1877, 64
        %v2113 = vpop.permute.xlu0 %2112
        %v2116 = vsel %vm1389, %v2033, 0
        %2118 = vmatpush.msra.mxu0 0.0
        %2119 = vmatpush.msra.mxu0 0.0
        %2120 = vmatpush.msra.mxu0 0.0
        %2121 = vmatpush.msra.mxu0 0.0
        %2122 = vmatpush.msra.mxu0 0.0
        %2123 = vmatpush.msra.mxu0 0.0
        %2124 = vmatpush.msra.mxu0 0.0
        %2125 = vmatpush.msra.mxu0 0.0
        %2126 = vmatpush.msra.mxu0 0.0
        %2127 = vmatpush.msra.mxu0 0.0
        %2128 = vmatpush.msra.mxu0 0.0
        %2129 = vmatpush.msra.mxu0 0.0
        %2130 = vmatpush.msra.mxu0 0.0
        %2131 = vmatpush.msra.mxu0 0.0
        %2132 = vmatpush.msra.mxu0 0.0
        %2133 = vmatpush.msra.mxu0 %v2113
        %2134 = vmatmul.f32.gmra.mxu0 %v2116
        %v2135 = vpop.f32.mrf.mxu0
        %v2136 = vadd.f32 0.0, %v2135
        %2137 = vdwg.mxu0
        %2139 = vrot.lane.b32.xlu0 %v2084, 8
        %v2140 = vpop.permute.xlu0 %2139
        %2143 = vrot.lane.b32.xlu0 %v2110, 16
        %v2144 = vpop.permute.xlu0 %2143
        %2147 = vrot.lane.b32.xlu0 %v2136, 24
        %v2148 = vpop.permute.xlu0 %2147
        %v2150 = vsel %vm1389, %v2058, %v2140
        %v2151 = vsel %vm1661, %v2150, %v2144
        %v2152 = vsel %vm1663, %v2151, %v2148
        %s2153 = scalar_lea.vmem %s19, 32
        %v2154 = vld [vmem:[%s2153] sm:$0xff]
        %v2155 = vld [vmem:[%s2153 + $0x8] sm:$0xff]
        %v2156 = vld [vmem:[%s2153 + $0x10] sm:$0xff]
        %v2157 = vld [vmem:[%s2153 + $0x18] sm:$0xff]
        %s2158 = scalar_lea.vmem %s21, 1
        %v2159 = vld [vmem:[%s2158] sm:$0x1]
        %v2161 = vperm.slane %v2159, 0
        %v2164 = vsel %vm1308, %v2152, 0
        %2166 = vmatpush.msra.mxu0 0.0
        %2167 = vmatpush.msra.mxu0 0.0
        %2168 = vmatpush.msra.mxu0 0.0
        %2169 = vmatpush.msra.mxu0 0.0
        %2170 = vmatpush.msra.mxu0 0.0
        %2171 = vmatpush.msra.mxu0 0.0
        %2172 = vmatpush.msra.mxu0 0.0
        %2173 = vmatpush.msra.mxu0 0.0
        %2174 = vmatpush.msra.mxu0 0.0
        %2175 = vmatpush.msra.mxu0 0.0
        %2176 = vmatpush.msra.mxu0 0.0
        %2177 = vmatpush.msra.mxu0 0.0
        %2178 = vmatpush.msra.mxu0 %v2157
        %2179 = vmatpush.msra.mxu0 %v2156
        %2180 = vmatpush.msra.mxu0 %v2155
        %2181 = vmatpush.msra.mxu0 %v2154
        %2182 = vmatmul.f32.gmra.mxu0 %v2164
        %v2183 = vpop.f32.mrf.mxu0
        %v2184 = vadd.f32 %v2161, %v2183
        %2185 = vdwg.mxu0
        %v2186 = vadd.f32 %v1800, %v2184
        %s2187 = scalar_lea.vmem %s23, 1
        %v2188 = vld [vmem:[%s2187] sm:$0x1]
        %s2189 = scalar_lea.vmem %s25, 1
        %v2190 = vld [vmem:[%s2189] sm:$0x1]
        %v2191 = vsel %vm1308, %v2186, 0.0
        %2192 = vadd.xlane.f32.xlu0 %v2191
        %v2193 = vpop.xlane.xlu0 %2192
        %v2194 = vmul.f32 %v2193, %v1318
        %v2195 = vsub.f32 %v2186, %v2194
        %v2196 = vmul.f32 %v2195, %v2195
        %v2197 = vsel %vm1308, %v2196, 0.0
        %2198 = vadd.xlane.f32.xlu0 %v2197
        %v2199 = vpop.xlane.xlu0 %2198
        %v2200 = vmul.f32 %v2199, 0.032258064
        %v2201 = vrsqrt.pop %v2200
        %v2202 = vmul.f32 %v2201, %v2200
        %v2203 = vmul.f32 %v2202, %v2201
        %v2204 = vmul.f32 0.5, %v2203
        %v2205 = vsub.f32 1.5, %v2204
        %v2206 = vmul.f32 %v2201, %v2205
        %v2207 = vmul.f32 %v2200, %v2206
        %vm2208 = vcmp.eq.f32.partialorder %v2200, inf
        %v2209 = vsel %vm2208, %v2200, %v2207
        %vm2210 = vcmp.eq.f32.partialorder %v2200, 0.0
        %v2211 = vand.u32 %v2200, 2147483648
        %v2212 = vsel %vm2210, %v2211, %v2209
        %v2213 = vadd.f32 %v2212, 1e-06
        %v2214 = vrcp.pop %v2213
        %v2215 = vmul.f32 %v2195, %v2214
        %v2217 = vperm.slane %v2188, 0
        %v2219 = vmul.f32 %v2217, %v2215
        %v2221 = vperm.slane %v2190, 0
        %v2223 = vadd.f32 %v2219, %v2221
        %s2224 = scalar_lea.vmem %s27, 32
        %v2225 = vld [vmem:[%s2224] sm:$0xff]
        %v2226 = vld [vmem:[%s2224 + $0x8] sm:$0xff]
        %v2227 = vld [vmem:[%s2224 + $0x10] sm:$0xff]
        %v2228 = vld [vmem:[%s2224 + $0x18] sm:$0xff]
        %s2229 = scalar_lea.vmem %s29, 1
        %v2230 = vld [vmem:[%s2229] sm:$0x1]
        %v2232 = vperm.slane %v2230, 0
        %v2235 = vsel %vm1308, %v2223, 0
        %2237 = vmatpush.msra.mxu0 0.0
        %2238 = vmatpush.msra.mxu0 0.0
        %2239 = vmatpush.msra.mxu0 0.0
        %2240 = vmatpush.msra.mxu0 0.0
        %2241 = vmatpush.msra.mxu0 0.0
        %2242 = vmatpush.msra.mxu0 0.0
        %2243 = vmatpush.msra.mxu0 0.0
        %2244 = vmatpush.msra.mxu0 0.0
        %2245 = vmatpush.msra.mxu0 0.0
        %2246 = vmatpush.msra.mxu0 0.0
        %2247 = vmatpush.msra.mxu0 0.0
        %2248 = vmatpush.msra.mxu0 0.0
        %2249 = vmatpush.msra.mxu0 %v2228
        %2250 = vmatpush.msra.mxu0 %v2227
        %2251 = vmatpush.msra.mxu0 %v2226
        %2252 = vmatpush.msra.mxu0 %v2225
        %2253 = vmatmul.f32.gmra.mxu0 %v2235
        %v2254 = vpop.f32.mrf.mxu0
        %v2255 = vadd.f32 %v2232, %v2254
        %2256 = vdwg.mxu0
        %v2257 = vmax.f32 %v2255, 0.0
        %s2258 = scalar_lea.vmem %s31, 64
        %v2259 = vld [vmem:[%s2258] sm:$0xff]
        %v2260 = vld [vmem:[%s2258 + $0x8] sm:$0xff]
        %v2261 = vld [vmem:[%s2258 + $0x10] sm:$0xff]
        %v2262 = vld [vmem:[%s2258 + $0x18] sm:$0xff]
        %v2263 = vld [vmem:[%s2258 + $0x20] sm:$0xff]
        %v2264 = vld [vmem:[%s2258 + $0x28] sm:$0xff]
        %v2265 = vld [vmem:[%s2258 + $0x30] sm:$0xff]
        %v2266 = vld [vmem:[%s2258 + $0x38] sm:$0xff]
        %s2267 = scalar_lea.vmem %s33, 1
        %v2268 = vld [vmem:[%s2267] sm:$0x1]
        %v2270 = vperm.slane %v2268, 0
        %v2273 = vsel %vm1776, %v2257, 0
        %2275 = vmatpush.msra.mxu0 0.0
        %2276 = vmatpush.msra.mxu0 0.0
        %2277 = vmatpush.msra.mxu0 0.0
        %2278 = vmatpush.msra.mxu0 0.0
        %2279 = vmatpush.msra.mxu0 0.0
        %2280 = vmatpush.msra.mxu0 0.0
        %2281 = vmatpush.msra.mxu0 0.0
        %2282 = vmatpush.msra.mxu0 0.0
        %2283 = vmatpush.msra.mxu0 %v2266
        %2284 = vmatpush.msra.mxu0 %v2265
        %2285 = vmatpush.msra.mxu0 %v2264
        %2286 = vmatpush.msra.mxu0 %v2263
        %2287 = vmatpush.msra.mxu0 %v2262
        %2288 = vmatpush.msra.mxu0 %v2261
        %2289 = vmatpush.msra.mxu0 %v2260
        %2290 = vmatpush.msra.mxu0 %v2259
        %2291 = vmatmul.f32.gmra.mxu0 %v2273
        %v2292 = vpop.f32.mrf.mxu0
        %v2293 = vadd.f32 %v2270, %v2292
        %2294 = vdwg.mxu0
        %v2295 = vadd.f32 %v2186, %v2293
        %v2296 = vld [vmem:[%s35] sm:$0x1]
        %v2297 = vld [vmem:[%s37] sm:$0x1]
        %v2298 = vsel %vm1308, %v2295, 0.0
        %2299 = vadd.xlane.f32.xlu0 %v2298
        %v2300 = vpop.xlane.xlu0 %2299
        %v2301 = vmul.f32 %v2300, %v1318
        %v2302 = vsub.f32 %v2295, %v2301
        %v2303 = vmul.f32 %v2302, %v2302
        %v2304 = vsel %vm1308, %v2303, 0.0
        %2305 = vadd.xlane.f32.xlu0 %v2304
        %v2306 = vpop.xlane.xlu0 %2305
        %v2307 = vmul.f32 %v2306, 0.032258064
        %v2308 = vrsqrt.pop %v2307
        %v2309 = vmul.f32 %v2308, %v2307
        %v2310 = vmul.f32 %v2309, %v2308
        %v2311 = vmul.f32 0.5, %v2310
        %v2312 = vsub.f32 1.5, %v2311
        %v2313 = vmul.f32 %v2308, %v2312
        %v2314 = vmul.f32 %v2307, %v2313
        %vm2315 = vcmp.eq.f32.partialorder %v2307, inf
        %v2316 = vsel %vm2315, %v2307, %v2314
        %vm2317 = vcmp.eq.f32.partialorder %v2307, 0.0
        %v2318 = vand.u32 %v2307, 2147483648
        %v2319 = vsel %vm2317, %v2318, %v2316
        %v2320 = vadd.f32 %v2319, 1e-06
        %v2321 = vrcp.pop %v2320
        %v2322 = vmul.f32 %v2302, %v2321
        %v2324 = vperm.slane %v2296, 0
        %v2326 = vmul.f32 %v2324, %v2322
        %v2328 = vperm.slane %v2297, 0
        %v2330 = vadd.f32 %v2326, %v2328
        %v2331 = vld [vmem:[%s1289] sm:$0xff]
        %v2332 = vld [vmem:[%s39] sm:$0x1]
        %v2333 = vld [vmem:[%s41] sm:$0x1]
        %v2334 = vsel %vm1308, %v2331, 0.0
        %2335 = vadd.xlane.f32.xlu0 %v2334
        %v2336 = vpop.xlane.xlu0 %2335
        %v2337 = vmul.f32 %v2336, %v1318
        %v2338 = vsub.f32 %v2331, %v2337
        %v2339 = vmul.f32 %v2338, %v2338
        %v2340 = vsel %vm1308, %v2339, 0.0
        %2341 = vadd.xlane.f32.xlu0 %v2340
        %v2342 = vpop.xlane.xlu0 %2341
        %v2343 = vmul.f32 %v2342, 0.032258064
        %v2344 = vrsqrt.pop %v2343
        %v2345 = vmul.f32 %v2344, %v2343
        %v2346 = vmul.f32 %v2345, %v2344
        %v2347 = vmul.f32 0.5, %v2346
        %v2348 = vsub.f32 1.5, %v2347
        %v2349 = vmul.f32 %v2344, %v2348
        %v2350 = vmul.f32 %v2343, %v2349
        %vm2351 = vcmp.eq.f32.partialorder %v2343, inf
        %v2352 = vsel %vm2351, %v2343, %v2350
        %vm2353 = vcmp.eq.f32.partialorder %v2343, 0.0
        %v2354 = vand.u32 %v2343, 2147483648
        %v2355 = vsel %vm2353, %v2354, %v2352
        %v2356 = vadd.f32 %v2355, 1e-06
        %v2357 = vrcp.pop %v2356
        %v2358 = vmul.f32 %v2338, %v2357
        %v2360 = vperm.slane %v2332, 0
        %v2362 = vmul.f32 %v2360, %v2358
        %v2364 = vperm.slane %v2333, 0
        %v2366 = vadd.f32 %v2362, %v2364
        %v2367 = vld [vmem:[%s43] sm:$0xff]
        %v2368 = vld [vmem:[%s43 + $0x8] sm:$0xff]
        %v2369 = vld [vmem:[%s43 + $0x10] sm:$0xff]
        %v2370 = vld [vmem:[%s43 + $0x18] sm:$0xff]
        %v2371 = vld [vmem:[%s45] sm:$0x1]
        %v2373 = vperm.slane %v2371, 0
        %v2376 = vsel %vm1308, %v2366, 0
        %2378 = vmatpush.msra.mxu0 0.0
        %2379 = vmatpush.msra.mxu0 0.0
        %2380 = vmatpush.msra.mxu0 0.0
        %2381 = vmatpush.msra.mxu0 0.0
        %2382 = vmatpush.msra.mxu0 0.0
        %2383 = vmatpush.msra.mxu0 0.0
        %2384 = vmatpush.msra.mxu0 0.0
        %2385 = vmatpush.msra.mxu0 0.0
        %2386 = vmatpush.msra.mxu0 0.0
        %2387 = vmatpush.msra.mxu0 0.0
        %2388 = vmatpush.msra.mxu0 0.0
        %2389 = vmatpush.msra.mxu0 0.0
        %2390 = vmatpush.msra.mxu0 %v2370
        %2391 = vmatpush.msra.mxu0 %v2369
        %2392 = vmatpush.msra.mxu0 %v2368
        %2393 = vmatpush.msra.mxu0 %v2367
        %2394 = vmatmul.f32.gmra.mxu0 %v2376
        %v2395 = vpop.f32.mrf.mxu0
        %v2396 = vadd.f32 %v2373, %v2395
        %2397 = vdwg.mxu0
        %2399 = vrot.lane.b32.xlu0 %v2396, 120
        %v2400 = vpop.permute.xlu0 %2399
        %2401 = vrot.lane.b32.xlu0 %v2396, 112
        %v2402 = vpop.permute.xlu0 %2401
        %2403 = vrot.lane.b32.xlu0 %v2396, 104
        %v2404 = vpop.permute.xlu0 %2403
        %2405 = vrot.lane.b32.xlu0 %v2396, 96
        %v2406 = vpop.permute.xlu0 %2405
        %v2407 = vsel %vm1389, %v2396, 0
        %v2409 = vsel %vm1389, %v2406, 0
        %2411 = vmatpush.xpose.msra.mxu0 0.0
        %2412 = vmatpush.xpose.msra.mxu0 0.0
        %2413 = vmatpush.xpose.msra.mxu0 0.0
        %2414 = vmatpush.xpose.msra.mxu0 0.0
        %2415 = vmatpush.xpose.msra.mxu0 0.0
        %2416 = vmatpush.xpose.msra.mxu0 0.0
        %2417 = vmatpush.xpose.msra.mxu0 0.0
        %2418 = vmatpush.xpose.msra.mxu0 0.0
        %2419 = vmatpush.xpose.msra.mxu0 0.0
        %2420 = vmatpush.xpose.msra.mxu0 0.0
        %2421 = vmatpush.xpose.msra.mxu0 0.0
        %2422 = vmatpush.xpose.msra.mxu0 0.0
        %2423 = vmatpush.xpose.msra.mxu0 0.0
        %2424 = vmatpush.xpose.msra.mxu0 0.0
        %2425 = vmatpush.xpose.msra.mxu0 0.0
        %2426 = vmatpush.xpose.msra.mxu0 %v2409
        %2427 = vmatmul.f32.gmra.mxu0 %v2407
        %v2428 = vpop.f32.mrf.mxu0
        %v2429 = vadd.f32 0.0, %v2428
        %2430 = vdwg.mxu0
        %2431 = vrot.lane.b32.xlu0 %v2400, 96
        %v2432 = vpop.permute.xlu0 %2431
        %v2433 = vsel %vm1389, %v2400, 0
        %v2435 = vsel %vm1389, %v2432, 0
        %2437 = vmatpush.xpose.msra.mxu0 0.0
        %2438 = vmatpush.xpose.msra.mxu0 0.0
        %2439 = vmatpush.xpose.msra.mxu0 0.0
        %2440 = vmatpush.xpose.msra.mxu0 0.0
        %2441 = vmatpush.xpose.msra.mxu0 0.0
        %2442 = vmatpush.xpose.msra.mxu0 0.0
        %2443 = vmatpush.xpose.msra.mxu0 0.0
        %2444 = vmatpush.xpose.msra.mxu0 0.0
        %2445 = vmatpush.xpose.msra.mxu0 0.0
        %2446 = vmatpush.xpose.msra.mxu0 0.0
        %2447 = vmatpush.xpose.msra.mxu0 0.0
        %2448 = vmatpush.xpose.msra.mxu0 0.0
        %2449 = vmatpush.xpose.msra.mxu0 0.0
        %2450 = vmatpush.xpose.msra.mxu0 0.0
        %2451 = vmatpush.xpose.msra.mxu0 0.0
        %2452 = vmatpush.xpose.msra.mxu0 %v2435
        %2453 = vmatmul.f32.gmra.mxu0 %v2433
        %v2454 = vpop.f32.mrf.mxu0
        %v2455 = vadd.f32 0.0, %v2454
        %2456 = vdwg.mxu0
        %2457 = vrot.lane.b32.xlu0 %v2402, 96
        %v2458 = vpop.permute.xlu0 %2457
        %v2459 = vsel %vm1389, %v2402, 0
        %v2461 = vsel %vm1389, %v2458, 0
        %2463 = vmatpush.xpose.msra.mxu0 0.0
        %2464 = vmatpush.xpose.msra.mxu0 0.0
        %2465 = vmatpush.xpose.msra.mxu0 0.0
        %2466 = vmatpush.xpose.msra.mxu0 0.0
        %2467 = vmatpush.xpose.msra.mxu0 0.0
        %2468 = vmatpush.xpose.msra.mxu0 0.0
        %2469 = vmatpush.xpose.msra.mxu0 0.0
        %2470 = vmatpush.xpose.msra.mxu0 0.0
        %2471 = vmatpush.xpose.msra.mxu0 0.0
        %2472 = vmatpush.xpose.msra.mxu0 0.0
        %2473 = vmatpush.xpose.msra.mxu0 0.0
        %2474 = vmatpush.xpose.msra.mxu0 0.0
        %2475 = vmatpush.xpose.msra.mxu0 0.0
        %2476 = vmatpush.xpose.msra.mxu0 0.0
        %2477 = vmatpush.xpose.msra.mxu0 0.0
        %2478 = vmatpush.xpose.msra.mxu0 %v2461
        %2479 = vmatmul.f32.gmra.mxu0 %v2459
        %v2480 = vpop.f32.mrf.mxu0
        %v2481 = vadd.f32 0.0, %v2480
        %2482 = vdwg.mxu0
        %2483 = vrot.lane.b32.xlu0 %v2404, 96
        %v2484 = vpop.permute.xlu0 %2483
        %v2485 = vsel %vm1389, %v2404, 0
        %v2487 = vsel %vm1389, %v2484, 0
        %2489 = vmatpush.xpose.msra.mxu0 0.0
        %2490 = vmatpush.xpose.msra.mxu0 0.0
        %2491 = vmatpush.xpose.msra.mxu0 0.0
        %2492 = vmatpush.xpose.msra.mxu0 0.0
        %2493 = vmatpush.xpose.msra.mxu0 0.0
        %2494 = vmatpush.xpose.msra.mxu0 0.0
        %2495 = vmatpush.xpose.msra.mxu0 0.0
        %2496 = vmatpush.xpose.msra.mxu0 0.0
        %2497 = vmatpush.xpose.msra.mxu0 0.0
        %2498 = vmatpush.xpose.msra.mxu0 0.0
        %2499 = vmatpush.xpose.msra.mxu0 0.0
        %2500 = vmatpush.xpose.msra.mxu0 0.0
        %2501 = vmatpush.xpose.msra.mxu0 0.0
        %2502 = vmatpush.xpose.msra.mxu0 0.0
        %2503 = vmatpush.xpose.msra.mxu0 0.0
        %2504 = vmatpush.xpose.msra.mxu0 %v2487
        %2505 = vmatmul.f32.gmra.mxu0 %v2485
        %v2506 = vpop.f32.mrf.mxu0
        %v2507 = vadd.f32 0.0, %v2506
        %2508 = vdwg.mxu0
        %v2509 = vmul.f32 %v2429, 0.35355338
        %v2510 = vmul.f32 %v2455, 0.35355338
        %v2511 = vmul.f32 %v2481, 0.35355338
        %v2512 = vmul.f32 %v2507, 0.35355338
        %v2513 = vadd.f32 %v2509, %v1303
        %v2514 = vadd.f32 %v2510, %v1303
        %v2515 = vadd.f32 %v2511, %v1303
        %v2516 = vadd.f32 %v2512, %v1303
        %v2517 = vsel %vm1389, %v2513, -inf
        %2518 = vmax.xlane.f32.xlu0 %v2517
        %v2519 = vpop.xlane.xlu0 %2518
        %v2520 = vsel %vm1389, %v2514, -inf
        %2521 = vmax.xlane.f32.xlu0 %v2520
        %v2522 = vpop.xlane.xlu0 %2521
        %v2523 = vsel %vm1389, %v2515, -inf
        %2524 = vmax.xlane.f32.xlu0 %v2523
        %v2525 = vpop.xlane.xlu0 %2524
        %v2526 = vsel %vm1389, %v2516, -inf
        %2527 = vmax.xlane.f32.xlu0 %v2526
        %v2528 = vpop.xlane.xlu0 %2527
        %v2529 = vsub.f32 %v2513, %v2519
        %v2530 = vsub.f32 %v2514, %v2522
        %v2531 = vsub.f32 %v2515, %v2525
        %v2532 = vsub.f32 %v2516, %v2528
        %v2533 = vmul.f32 %v2529, 1.442695
        %v2534 = vpow.pop %v2533
        %v2535 = vmul.f32 %v2530, 1.442695
        %v2536 = vpow.pop %v2535
        %v2537 = vmul.f32 %v2531, 1.442695
        %v2538 = vpow.pop %v2537
        %v2539 = vmul.f32 %v2532, 1.442695
        %v2540 = vpow.pop %v2539
        %v2541 = vsel %vm1389, %v2534, 0.0
        %2542 = vadd.xlane.f32.xlu0 %v2541
        %v2543 = vpop.xlane.xlu0 %2542
        %v2544 = vsel %vm1389, %v2536, 0.0
        %2545 = vadd.xlane.f32.xlu0 %v2544
        %v2546 = vpop.xlane.xlu0 %2545
        %v2547 = vsel %vm1389, %v2538, 0.0
        %2548 = vadd.xlane.f32.xlu0 %v2547
        %v2549 = vpop.xlane.xlu0 %2548
        %v2550 = vsel %vm1389, %v2540, 0.0
        %2551 = vadd.xlane.f32.xlu0 %v2550
        %v2552 = vpop.xlane.xlu0 %2551
        %v2553 = vrcp.pop %v2543
        %v2554 = vrcp.pop %v2546
        %v2555 = vrcp.pop %v2549
        %v2556 = vrcp.pop %v2552
        %v2557 = vmul.f32 %v2534, %v2553
        %v2558 = vmul.f32 %v2536, %v2554
        %v2559 = vmul.f32 %v2538, %v2555
        %v2560 = vmul.f32 %v2540, %v2556
        %2561 = vrot.lane.b32.xlu0 %v2396, 64
        %v2562 = vpop.permute.xlu0 %2561
        %v2565 = vsel %vm1389, %v2557, 0
        %2567 = vmatpush.msra.mxu0 0.0
        %2568 = vmatpush.msra.mxu0 0.0
        %2569 = vmatpush.msra.mxu0 0.0
        %2570 = vmatpush.msra.mxu0 0.0
        %2571 = vmatpush.msra.mxu0 0.0
        %2572 = vmatpush.msra.mxu0 0.0
        %2573 = vmatpush.msra.mxu0 0.0
        %2574 = vmatpush.msra.mxu0 0.0
        %2575 = vmatpush.msra.mxu0 0.0
        %2576 = vmatpush.msra.mxu0 0.0
        %2577 = vmatpush.msra.mxu0 0.0
        %2578 = vmatpush.msra.mxu0 0.0
        %2579 = vmatpush.msra.mxu0 0.0
        %2580 = vmatpush.msra.mxu0 0.0
        %2581 = vmatpush.msra.mxu0 0.0
        %2582 = vmatpush.msra.mxu0 %v2562
        %2583 = vmatmul.f32.gmra.mxu0 %v2565
        %v2584 = vpop.f32.mrf.mxu0
        %v2585 = vadd.f32 0.0, %v2584
        %2586 = vdwg.mxu0
        %2587 = vrot.lane.b32.xlu0 %v2400, 64
        %v2588 = vpop.permute.xlu0 %2587
        %v2591 = vsel %vm1389, %v2558, 0
        %2593 = vmatpush.msra.mxu0 0.0
        %2594 = vmatpush.msra.mxu0 0.0
        %2595 = vmatpush.msra.mxu0 0.0
        %2596 = vmatpush.msra.mxu0 0.0
        %2597 = vmatpush.msra.mxu0 0.0
        %2598 = vmatpush.msra.mxu0 0.0
        %2599 = vmatpush.msra.mxu0 0.0
        %2600 = vmatpush.msra.mxu0 0.0
        %2601 = vmatpush.msra.mxu0 0.0
        %2602 = vmatpush.msra.mxu0 0.0
        %2603 = vmatpush.msra.mxu0 0.0
        %2604 = vmatpush.msra.mxu0 0.0
        %2605 = vmatpush.msra.mxu0 0.0
        %2606 = vmatpush.msra.mxu0 0.0
        %2607 = vmatpush.msra.mxu0 0.0
        %2608 = vmatpush.msra.mxu0 %v2588
        %2609 = vmatmul.f32.gmra.mxu0 %v2591
        %v2610 = vpop.f32.mrf.mxu0
        %v2611 = vadd.f32 0.0, %v2610
        %2612 = vdwg.mxu0
        %2613 = vrot.lane.b32.xlu0 %v2402, 64
        %v2614 = vpop.permute.xlu0 %2613
        %v2617 = vsel %vm1389, %v2559, 0
        %2619 = vmatpush.msra.mxu0 0.0
        %2620 = vmatpush.msra.mxu0 0.0
        %2621 = vmatpush.msra.mxu0 0.0
        %2622 = vmatpush.msra.mxu0 0.0
        %2623 = vmatpush.msra.mxu0 0.0
        %2624 = vmatpush.msra.mxu0 0.0
        %2625 = vmatpush.msra.mxu0 0.0
        %2626 = vmatpush.msra.mxu0 0.0
        %2627 = vmatpush.msra.mxu0 0.0
        %2628 = vmatpush.msra.mxu0 0.0
        %2629 = vmatpush.msra.mxu0 0.0
        %2630 = vmatpush.msra.mxu0 0.0
        %2631 = vmatpush.msra.mxu0 0.0
        %2632 = vmatpush.msra.mxu0 0.0
        %2633 = vmatpush.msra.mxu0 0.0
        %2634 = vmatpush.msra.mxu0 %v2614
        %2635 = vmatmul.f32.gmra.mxu0 %v2617
        %v2636 = vpop.f32.mrf.mxu0
        %v2637 = vadd.f32 0.0, %v2636
        %2638 = vdwg.mxu0
        %2639 = vrot.lane.b32.xlu0 %v2404, 64
        %v2640 = vpop.permute.xlu0 %2639
        %v2643 = vsel %vm1389, %v2560, 0
        %2645 = vmatpush.msra.mxu0 0.0
        %2646 = vmatpush.msra.mxu0 0.0
        %2647 = vmatpush.msra.mxu0 0.0
        %2648 = vmatpush.msra.mxu0 0.0
        %2649 = vmatpush.msra.mxu0 0.0
        %2650 = vmatpush.msra.mxu0 0.0
        %2651 = vmatpush.msra.mxu0 0.0
        %2652 = vmatpush.msra.mxu0 0.0
        %2653 = vmatpush.msra.mxu0 0.0
        %2654 = vmatpush.msra.mxu0 0.0
        %2655 = vmatpush.msra.mxu0 0.0
        %2656 = vmatpush.msra.mxu0 0.0
        %2657 = vmatpush.msra.mxu0 0.0
        %2658 = vmatpush.msra.mxu0 0.0
        %2659 = vmatpush.msra.mxu0 0.0
        %2660 = vmatpush.msra.mxu0 %v2640
        %2661 = vmatmul.f32.gmra.mxu0 %v2643
        %v2662 = vpop.f32.mrf.mxu0
        %v2663 = vadd.f32 0.0, %v2662
        %2664 = vdwg.mxu0
        %2666 = vrot.lane.b32.xlu0 %v2611, 8
        %v2667 = vpop.permute.xlu0 %2666
        %2670 = vrot.lane.b32.xlu0 %v2637, 16
        %v2671 = vpop.permute.xlu0 %2670
        %2674 = vrot.lane.b32.xlu0 %v2663, 24
        %v2675 = vpop.permute.xlu0 %2674
        %v2677 = vsel %vm1389, %v2585, %v2667
        %v2678 = vsel %vm1661, %v2677, %v2671
        %v2679 = vsel %vm1663, %v2678, %v2675
        %v2680 = vld [vmem:[%s47] sm:$0xff]
        %v2681 = vld [vmem:[%s47 + $0x8] sm:$0xff]
        %v2682 = vld [vmem:[%s47 + $0x10] sm:$0xff]
        %v2683 = vld [vmem:[%s47 + $0x18] sm:$0xff]
        %v2684 = vld [vmem:[%s49] sm:$0x1]
        %v2686 = vperm.slane %v2684, 0
        %v2689 = vsel %vm1308, %v2679, 0
        %2691 = vmatpush.msra.mxu0 0.0
        %2692 = vmatpush.msra.mxu0 0.0
        %2693 = vmatpush.msra.mxu0 0.0
        %2694 = vmatpush.msra.mxu0 0.0
        %2695 = vmatpush.msra.mxu0 0.0
        %2696 = vmatpush.msra.mxu0 0.0
        %2697 = vmatpush.msra.mxu0 0.0
        %2698 = vmatpush.msra.mxu0 0.0
        %2699 = vmatpush.msra.mxu0 0.0
        %2700 = vmatpush.msra.mxu0 0.0
        %2701 = vmatpush.msra.mxu0 0.0
        %2702 = vmatpush.msra.mxu0 0.0
        %2703 = vmatpush.msra.mxu0 %v2683
        %2704 = vmatpush.msra.mxu0 %v2682
        %2705 = vmatpush.msra.mxu0 %v2681
        %2706 = vmatpush.msra.mxu0 %v2680
        %2707 = vmatmul.f32.gmra.mxu0 %v2689
        %v2708 = vpop.f32.mrf.mxu0
        %v2709 = vadd.f32 %v2686, %v2708
        %2710 = vdwg.mxu0
        %v2711 = vadd.f32 %v2331, %v2709
        %v2712 = vld [vmem:[%s51] sm:$0x1]
        %v2713 = vld [vmem:[%s53] sm:$0x1]
        %v2714 = vsel %vm1308, %v2711, 0.0
        %2715 = vadd.xlane.f32.xlu0 %v2714
        %v2716 = vpop.xlane.xlu0 %2715
        %v2717 = vmul.f32 %v2716, %v1318
        %v2718 = vsub.f32 %v2711, %v2717
        %v2719 = vmul.f32 %v2718, %v2718
        %v2720 = vsel %vm1308, %v2719, 0.0
        %2721 = vadd.xlane.f32.xlu0 %v2720
        %v2722 = vpop.xlane.xlu0 %2721
        %v2723 = vmul.f32 %v2722, 0.032258064
        %v2724 = vrsqrt.pop %v2723
        %v2725 = vmul.f32 %v2724, %v2723
        %v2726 = vmul.f32 %v2725, %v2724
        %v2727 = vmul.f32 0.5, %v2726
        %v2728 = vsub.f32 1.5, %v2727
        %v2729 = vmul.f32 %v2724, %v2728
        %v2730 = vmul.f32 %v2723, %v2729
        %vm2731 = vcmp.eq.f32.partialorder %v2723, inf
        %v2732 = vsel %vm2731, %v2723, %v2730
        %vm2733 = vcmp.eq.f32.partialorder %v2723, 0.0
        %v2734 = vand.u32 %v2723, 2147483648
        %v2735 = vsel %vm2733, %v2734, %v2732
        %v2736 = vadd.f32 %v2735, 1e-06
        %v2737 = vrcp.pop %v2736
        %v2738 = vmul.f32 %v2718, %v2737
        %v2740 = vperm.slane %v2712, 0
        %v2742 = vmul.f32 %v2740, %v2738
        %v2744 = vperm.slane %v2713, 0
        %v2746 = vadd.f32 %v2742, %v2744
        %v2747 = vld [vmem:[%s55] sm:$0xff]
        %v2748 = vld [vmem:[%s55 + $0x8] sm:$0xff]
        %v2749 = vld [vmem:[%s55 + $0x10] sm:$0xff]
        %v2750 = vld [vmem:[%s55 + $0x18] sm:$0xff]
        %v2751 = vld [vmem:[%s57] sm:$0x1]
        %v2753 = vperm.slane %v2751, 0
        %v2756 = vsel %vm1308, %v2746, 0
        %2758 = vmatpush.msra.mxu0 0.0
        %2759 = vmatpush.msra.mxu0 0.0
        %2760 = vmatpush.msra.mxu0 0.0
        %2761 = vmatpush.msra.mxu0 0.0
        %2762 = vmatpush.msra.mxu0 0.0
        %2763 = vmatpush.msra.mxu0 0.0
        %2764 = vmatpush.msra.mxu0 0.0
        %2765 = vmatpush.msra.mxu0 0.0
        %2766 = vmatpush.msra.mxu0 0.0
        %2767 = vmatpush.msra.mxu0 0.0
        %2768 = vmatpush.msra.mxu0 0.0
        %2769 = vmatpush.msra.mxu0 0.0
        %2770 = vmatpush.msra.mxu0 %v2750
        %2771 = vmatpush.msra.mxu0 %v2749
        %2772 = vmatpush.msra.mxu0 %v2748
        %2773 = vmatpush.msra.mxu0 %v2747
        %2774 = vmatmul.f32.gmra.mxu0 %v2756
        %v2775 = vpop.f32.mrf.mxu0
        %v2776 = vadd.f32 %v2753, %v2775
        %2777 = vdwg.mxu0
        %v2778 = vld [vmem:[%s59] sm:$0xff]
        %v2779 = vld [vmem:[%s59 + $0x8] sm:$0xff]
        %v2780 = vld [vmem:[%s59 + $0x10] sm:$0xff]
        %v2781 = vld [vmem:[%s59 + $0x18] sm:$0xff]
        %v2782 = vld [vmem:[%s61] sm:$0x1]
        %v2784 = vperm.slane %v2782, 0
        %v2787 = vsel %vm1308, %v2330, 0
        %2789 = vmatpush.msra.mxu0 0.0
        %2790 = vmatpush.msra.mxu0 0.0
        %2791 = vmatpush.msra.mxu0 0.0
        %2792 = vmatpush.msra.mxu0 0.0
        %2793 = vmatpush.msra.mxu0 0.0
        %2794 = vmatpush.msra.mxu0 0.0
        %2795 = vmatpush.msra.mxu0 0.0
        %2796 = vmatpush.msra.mxu0 0.0
        %2797 = vmatpush.msra.mxu0 0.0
        %2798 = vmatpush.msra.mxu0 0.0
        %2799 = vmatpush.msra.mxu0 0.0
        %2800 = vmatpush.msra.mxu0 0.0
        %2801 = vmatpush.msra.mxu0 %v2781
        %2802 = vmatpush.msra.mxu0 %v2780
        %2803 = vmatpush.msra.mxu0 %v2779
        %2804 = vmatpush.msra.mxu0 %v2778
        %2805 = vmatmul.f32.gmra.mxu0 %v2787
        %v2806 = vpop.f32.mrf.mxu0
        %v2807 = vadd.f32 %v2784, %v2806
        %2808 = vdwg.mxu0
        %2810 = vrot.lane.b32.xlu0 %v2776, 120
        %v2811 = vpop.permute.xlu0 %2810
        %2812 = vrot.lane.b32.xlu0 %v2776, 112
        %v2813 = vpop.permute.xlu0 %2812
        %2814 = vrot.lane.b32.xlu0 %v2776, 104
        %v2815 = vpop.permute.xlu0 %2814
        %2817 = vrot.lane.b32.xlu0 %v2807, 120
        %v2818 = vpop.permute.xlu0 %2817
        %2819 = vrot.lane.b32.xlu0 %v2807, 112
        %v2820 = vpop.permute.xlu0 %2819
        %2821 = vrot.lane.b32.xlu0 %v2807, 104
        %v2822 = vpop.permute.xlu0 %2821
        %v2823 = vsel %vm1389, %v2776, 0
        %v2825 = vsel %vm1389, %v2807, 0
        %2827 = vmatpush.xpose.msra.mxu0 0.0
        %2828 = vmatpush.xpose.msra.mxu0 0.0
        %2829 = vmatpush.xpose.msra.mxu0 0.0
        %2830 = vmatpush.xpose.msra.mxu0 0.0
        %2831 = vmatpush.xpose.msra.mxu0 0.0
        %2832 = vmatpush.xpose.msra.mxu0 0.0
        %2833 = vmatpush.xpose.msra.mxu0 0.0
        %2834 = vmatpush.xpose.msra.mxu0 0.0
        %2835 = vmatpush.xpose.msra.mxu0 0.0
        %2836 = vmatpush.xpose.msra.mxu0 0.0
        %2837 = vmatpush.xpose.msra.mxu0 0.0
        %2838 = vmatpush.xpose.msra.mxu0 0.0
        %2839 = vmatpush.xpose.msra.mxu0 0.0
        %2840 = vmatpush.xpose.msra.mxu0 0.0
        %2841 = vmatpush.xpose.msra.mxu0 0.0
        %2842 = vmatpush.xpose.msra.mxu0 %v2825
        %2843 = vmatmul.f32.gmra.mxu0 %v2823
        %v2844 = vpop.f32.mrf.mxu0
        %v2845 = vadd.f32 0.0, %v2844
        %2846 = vdwg.mxu0
        %v2847 = vsel %vm1389, %v2811, 0
        %v2849 = vsel %vm1389, %v2818, 0
        %2851 = vmatpush.xpose.msra.mxu0 0.0
        %2852 = vmatpush.xpose.msra.mxu0 0.0
        %2853 = vmatpush.xpose.msra.mxu0 0.0
        %2854 = vmatpush.xpose.msra.mxu0 0.0
        %2855 = vmatpush.xpose.msra.mxu0 0.0
        %2856 = vmatpush.xpose.msra.mxu0 0.0
        %2857 = vmatpush.xpose.msra.mxu0 0.0
        %2858 = vmatpush.xpose.msra.mxu0 0.0
        %2859 = vmatpush.xpose.msra.mxu0 0.0
        %2860 = vmatpush.xpose.msra.mxu0 0.0
        %2861 = vmatpush.xpose.msra.mxu0 0.0
        %2862 = vmatpush.xpose.msra.mxu0 0.0
        %2863 = vmatpush.xpose.msra.mxu0 0.0
        %2864 = vmatpush.xpose.msra.mxu0 0.0
        %2865 = vmatpush.xpose.msra.mxu0 0.0
        %2866 = vmatpush.xpose.msra.mxu0 %v2849
        %2867 = vmatmul.f32.gmra.mxu0 %v2847
        %v2868 = vpop.f32.mrf.mxu0
        %v2869 = vadd.f32 0.0, %v2868
        %2870 = vdwg.mxu0
        %v2871 = vsel %vm1389, %v2813, 0
        %v2873 = vsel %vm1389, %v2820, 0
        %2875 = vmatpush.xpose.msra.mxu0 0.0
        %2876 = vmatpush.xpose.msra.mxu0 0.0
        %2877 = vmatpush.xpose.msra.mxu0 0.0
        %2878 = vmatpush.xpose.msra.mxu0 0.0
        %2879 = vmatpush.xpose.msra.mxu0 0.0
        %2880 = vmatpush.xpose.msra.mxu0 0.0
        %2881 = vmatpush.xpose.msra.mxu0 0.0
        %2882 = vmatpush.xpose.msra.mxu0 0.0
        %2883 = vmatpush.xpose.msra.mxu0 0.0
        %2884 = vmatpush.xpose.msra.mxu0 0.0
        %2885 = vmatpush.xpose.msra.mxu0 0.0
        %2886 = vmatpush.xpose.msra.mxu0 0.0
        %2887 = vmatpush.xpose.msra.mxu0 0.0
        %2888 = vmatpush.xpose.msra.mxu0 0.0
        %2889 = vmatpush.xpose.msra.mxu0 0.0
        %2890 = vmatpush.xpose.msra.mxu0 %v2873
        %2891 = vmatmul.f32.gmra.mxu0 %v2871
        %v2892 = vpop.f32.mrf.mxu0
        %v2893 = vadd.f32 0.0, %v2892
        %2894 = vdwg.mxu0
        %v2895 = vsel %vm1389, %v2815, 0
        %v2897 = vsel %vm1389, %v2822, 0
        %2899 = vmatpush.xpose.msra.mxu0 0.0
        %2900 = vmatpush.xpose.msra.mxu0 0.0
        %2901 = vmatpush.xpose.msra.mxu0 0.0
        %2902 = vmatpush.xpose.msra.mxu0 0.0
        %2903 = vmatpush.xpose.msra.mxu0 0.0
        %2904 = vmatpush.xpose.msra.mxu0 0.0
        %2905 = vmatpush.xpose.msra.mxu0 0.0
        %2906 = vmatpush.xpose.msra.mxu0 0.0
        %2907 = vmatpush.xpose.msra.mxu0 0.0
        %2908 = vmatpush.xpose.msra.mxu0 0.0
        %2909 = vmatpush.xpose.msra.mxu0 0.0
        %2910 = vmatpush.xpose.msra.mxu0 0.0
        %2911 = vmatpush.xpose.msra.mxu0 0.0
        %2912 = vmatpush.xpose.msra.mxu0 0.0
        %2913 = vmatpush.xpose.msra.mxu0 0.0
        %2914 = vmatpush.xpose.msra.mxu0 %v2897
        %2915 = vmatmul.f32.gmra.mxu0 %v2895
        %v2916 = vpop.f32.mrf.mxu0
        %v2917 = vadd.f32 0.0, %v2916
        %2918 = vdwg.mxu0
        %v2919 = vmul.f32 %v2845, 0.35355338
        %v2920 = vmul.f32 %v2869, 0.35355338
        %v2921 = vmul.f32 %v2893, 0.35355338
        %v2922 = vmul.f32 %v2917, 0.35355338
        %v2923 = vadd.f32 %v2919, %v1304
        %v2924 = vadd.f32 %v2920, %v1304
        %v2925 = vadd.f32 %v2921, %v1304
        %v2926 = vadd.f32 %v2922, %v1304
        %v2927 = vsel %vm1389, %v2923, -inf
        %2928 = vmax.xlane.f32.xlu0 %v2927
        %v2929 = vpop.xlane.xlu0 %2928
        %v2930 = vsel %vm1389, %v2924, -inf
        %2931 = vmax.xlane.f32.xlu0 %v2930
        %v2932 = vpop.xlane.xlu0 %2931
        %v2933 = vsel %vm1389, %v2925, -inf
        %2934 = vmax.xlane.f32.xlu0 %v2933
        %v2935 = vpop.xlane.xlu0 %2934
        %v2936 = vsel %vm1389, %v2926, -inf
        %2937 = vmax.xlane.f32.xlu0 %v2936
        %v2938 = vpop.xlane.xlu0 %2937
        %v2939 = vsub.f32 %v2923, %v2929
        %v2940 = vsub.f32 %v2924, %v2932
        %v2941 = vsub.f32 %v2925, %v2935
        %v2942 = vsub.f32 %v2926, %v2938
        %v2943 = vmul.f32 %v2939, 1.442695
        %v2944 = vpow.pop %v2943
        %v2945 = vmul.f32 %v2940, 1.442695
        %v2946 = vpow.pop %v2945
        %v2947 = vmul.f32 %v2941, 1.442695
        %v2948 = vpow.pop %v2947
        %v2949 = vmul.f32 %v2942, 1.442695
        %v2950 = vpow.pop %v2949
        %v2951 = vsel %vm1389, %v2944, 0.0
        %2952 = vadd.xlane.f32.xlu0 %v2951
        %v2953 = vpop.xlane.xlu0 %2952
        %v2954 = vsel %vm1389, %v2946, 0.0
        %2955 = vadd.xlane.f32.xlu0 %v2954
        %v2956 = vpop.xlane.xlu0 %2955
        %v2957 = vsel %vm1389, %v2948, 0.0
        %2958 = vadd.xlane.f32.xlu0 %v2957
        %v2959 = vpop.xlane.xlu0 %2958
        %v2960 = vsel %vm1389, %v2950, 0.0
        %2961 = vadd.xlane.f32.xlu0 %v2960
        %v2962 = vpop.xlane.xlu0 %2961
        %v2963 = vrcp.pop %v2953
        %v2964 = vrcp.pop %v2956
        %v2965 = vrcp.pop %v2959
        %v2966 = vrcp.pop %v2962
        %v2967 = vmul.f32 %v2944, %v2963
        %v2968 = vmul.f32 %v2946, %v2964
        %v2969 = vmul.f32 %v2948, %v2965
        %v2970 = vmul.f32 %v2950, %v2966
        %2971 = vrot.lane.b32.xlu0 %v2807, 96
        %v2972 = vpop.permute.xlu0 %2971
        %v2975 = vsel %vm1389, %v2967, 0
        %2977 = vmatpush.msra.mxu0 0.0
        %2978 = vmatpush.msra.mxu0 0.0
        %2979 = vmatpush.msra.mxu0 0.0
        %2980 = vmatpush.msra.mxu0 0.0
        %2981 = vmatpush.msra.mxu0 0.0
        %2982 = vmatpush.msra.mxu0 0.0
        %2983 = vmatpush.msra.mxu0 0.0
        %2984 = vmatpush.msra.mxu0 0.0
        %2985 = vmatpush.msra.mxu0 0.0
        %2986 = vmatpush.msra.mxu0 0.0
        %2987 = vmatpush.msra.mxu0 0.0
        %2988 = vmatpush.msra.mxu0 0.0
        %2989 = vmatpush.msra.mxu0 0.0
        %2990 = vmatpush.msra.mxu0 0.0
        %2991 = vmatpush.msra.mxu0 0.0
        %2992 = vmatpush.msra.mxu0 %v2972
        %2993 = vmatmul.f32.gmra.mxu0 %v2975
        %v2994 = vpop.f32.mrf.mxu0
        %v2995 = vadd.f32 0.0, %v2994
        %2996 = vdwg.mxu0
        %2997 = vrot.lane.b32.xlu0 %v2818, 96
        %v2998 = vpop.permute.xlu0 %2997
        %v3001 = vsel %vm1389, %v2968, 0
        %3003 = vmatpush.msra.mxu0 0.0
        %3004 = vmatpush.msra.mxu0 0.0
        %3005 = vmatpush.msra.mxu0 0.0
        %3006 = vmatpush.msra.mxu0 0.0
        %3007 = vmatpush.msra.mxu0 0.0
        %3008 = vmatpush.msra.mxu0 0.0
        %3009 = vmatpush.msra.mxu0 0.0
        %3010 = vmatpush.msra.mxu0 0.0
        %3011 = vmatpush.msra.mxu0 0.0
        %3012 = vmatpush.msra.mxu0 0.0
        %3013 = vmatpush.msra.mxu0 0.0
        %3014 = vmatpush.msra.mxu0 0.0
        %3015 = vmatpush.msra.mxu0 0.0
        %3016 = vmatpush.msra.mxu0 0.0
        %3017 = vmatpush.msra.mxu0 0.0
        %3018 = vmatpush.msra.mxu0 %v2998
        %3019 = vmatmul.f32.gmra.mxu0 %v3001
        %v3020 = vpop.f32.mrf.mxu0
        %v3021 = vadd.f32 0.0, %v3020
        %3022 = vdwg.mxu0
        %3023 = vrot.lane.b32.xlu0 %v2820, 96
        %v3024 = vpop.permute.xlu0 %3023
        %v3027 = vsel %vm1389, %v2969, 0
        %3029 = vmatpush.msra.mxu0 0.0
        %3030 = vmatpush.msra.mxu0 0.0
        %3031 = vmatpush.msra.mxu0 0.0
        %3032 = vmatpush.msra.mxu0 0.0
        %3033 = vmatpush.msra.mxu0 0.0
        %3034 = vmatpush.msra.mxu0 0.0
        %3035 = vmatpush.msra.mxu0 0.0
        %3036 = vmatpush.msra.mxu0 0.0
        %3037 = vmatpush.msra.mxu0 0.0
        %3038 = vmatpush.msra.mxu0 0.0
        %3039 = vmatpush.msra.mxu0 0.0
        %3040 = vmatpush.msra.mxu0 0.0
        %3041 = vmatpush.msra.mxu0 0.0
        %3042 = vmatpush.msra.mxu0 0.0
        %3043 = vmatpush.msra.mxu0 0.0
        %3044 = vmatpush.msra.mxu0 %v3024
        %3045 = vmatmul.f32.gmra.mxu0 %v3027
        %v3046 = vpop.f32.mrf.mxu0
        %v3047 = vadd.f32 0.0, %v3046
        %3048 = vdwg.mxu0
        %3049 = vrot.lane.b32.xlu0 %v2822, 96
        %v3050 = vpop.permute.xlu0 %3049
        %v3053 = vsel %vm1389, %v2970, 0
        %3055 = vmatpush.msra.mxu0 0.0
        %3056 = vmatpush.msra.mxu0 0.0
        %3057 = vmatpush.msra.mxu0 0.0
        %3058 = vmatpush.msra.mxu0 0.0
        %3059 = vmatpush.msra.mxu0 0.0
        %3060 = vmatpush.msra.mxu0 0.0
        %3061 = vmatpush.msra.mxu0 0.0
        %3062 = vmatpush.msra.mxu0 0.0
        %3063 = vmatpush.msra.mxu0 0.0
        %3064 = vmatpush.msra.mxu0 0.0
        %3065 = vmatpush.msra.mxu0 0.0
        %3066 = vmatpush.msra.mxu0 0.0
        %3067 = vmatpush.msra.mxu0 0.0
        %3068 = vmatpush.msra.mxu0 0.0
        %3069 = vmatpush.msra.mxu0 0.0
        %3070 = vmatpush.msra.mxu0 %v3050
        %3071 = vmatmul.f32.gmra.mxu0 %v3053
        %v3072 = vpop.f32.mrf.mxu0
        %v3073 = vadd.f32 0.0, %v3072
        %3074 = vdwg.mxu0
        %3076 = vrot.lane.b32.xlu0 %v3021, 8
        %v3077 = vpop.permute.xlu0 %3076
        %3080 = vrot.lane.b32.xlu0 %v3047, 16
        %v3081 = vpop.permute.xlu0 %3080
        %3084 = vrot.lane.b32.xlu0 %v3073, 24
        %v3085 = vpop.permute.xlu0 %3084
        %v3087 = vsel %vm1389, %v2995, %v3077
        %v3088 = vsel %vm1661, %v3087, %v3081
        %v3089 = vsel %vm1663, %v3088, %v3085
        %v3090 = vld [vmem:[%s63] sm:$0xff]
        %v3091 = vld [vmem:[%s63 + $0x8] sm:$0xff]
        %v3092 = vld [vmem:[%s63 + $0x10] sm:$0xff]
        %v3093 = vld [vmem:[%s63 + $0x18] sm:$0xff]
        %v3094 = vld [vmem:[%s65] sm:$0x1]
        %v3096 = vperm.slane %v3094, 0
        %v3099 = vsel %vm1308, %v3089, 0
        %3101 = vmatpush.msra.mxu0 0.0
        %3102 = vmatpush.msra.mxu0 0.0
        %3103 = vmatpush.msra.mxu0 0.0
        %3104 = vmatpush.msra.mxu0 0.0
        %3105 = vmatpush.msra.mxu0 0.0
        %3106 = vmatpush.msra.mxu0 0.0
        %3107 = vmatpush.msra.mxu0 0.0
        %3108 = vmatpush.msra.mxu0 0.0
        %3109 = vmatpush.msra.mxu0 0.0
        %3110 = vmatpush.msra.mxu0 0.0
        %3111 = vmatpush.msra.mxu0 0.0
        %3112 = vmatpush.msra.mxu0 0.0
        %3113 = vmatpush.msra.mxu0 %v3093
        %3114 = vmatpush.msra.mxu0 %v3092
        %3115 = vmatpush.msra.mxu0 %v3091
        %3116 = vmatpush.msra.mxu0 %v3090
        %3117 = vmatmul.f32.gmra.mxu0 %v3099
        %v3118 = vpop.f32.mrf.mxu0
        %v3119 = vadd.f32 %v3096, %v3118
        %3120 = vdwg.mxu0
        %v3121 = vadd.f32 %v2711, %v3119
        %v3122 = vld [vmem:[%s67] sm:$0x1]
        %v3123 = vld [vmem:[%s69] sm:$0x1]
        %v3124 = vsel %vm1308, %v3121, 0.0
        %3125 = vadd.xlane.f32.xlu0 %v3124
        %v3126 = vpop.xlane.xlu0 %3125
        %v3127 = vmul.f32 %v3126, %v1318
        %v3128 = vsub.f32 %v3121, %v3127
        %v3129 = vmul.f32 %v3128, %v3128
        %v3130 = vsel %vm1308, %v3129, 0.0
        %3131 = vadd.xlane.f32.xlu0 %v3130
        %v3132 = vpop.xlane.xlu0 %3131
        %v3133 = vmul.f32 %v3132, 0.032258064
        %v3134 = vrsqrt.pop %v3133
        %v3135 = vmul.f32 %v3134, %v3133
        %v3136 = vmul.f32 %v3135, %v3134
        %v3137 = vmul.f32 0.5, %v3136
        %v3138 = vsub.f32 1.5, %v3137
        %v3139 = vmul.f32 %v3134, %v3138
        %v3140 = vmul.f32 %v3133, %v3139
        %vm3141 = vcmp.eq.f32.partialorder %v3133, inf
        %v3142 = vsel %vm3141, %v3133, %v3140
        %vm3143 = vcmp.eq.f32.partialorder %v3133, 0.0
        %v3144 = vand.u32 %v3133, 2147483648
        %v3145 = vsel %vm3143, %v3144, %v3142
        %v3146 = vadd.f32 %v3145, 1e-06
        %v3147 = vrcp.pop %v3146
        %v3148 = vmul.f32 %v3128, %v3147
        %v3150 = vperm.slane %v3122, 0
        %v3152 = vmul.f32 %v3150, %v3148
        %v3154 = vperm.slane %v3123, 0
        %v3156 = vadd.f32 %v3152, %v3154
        %v3157 = vld [vmem:[%s71] sm:$0xff]
        %v3158 = vld [vmem:[%s71 + $0x8] sm:$0xff]
        %v3159 = vld [vmem:[%s71 + $0x10] sm:$0xff]
        %v3160 = vld [vmem:[%s71 + $0x18] sm:$0xff]
        %v3161 = vld [vmem:[%s73] sm:$0x1]
        %v3163 = vperm.slane %v3161, 0
        %v3166 = vsel %vm1308, %v3156, 0
        %3168 = vmatpush.msra.mxu0 0.0
        %3169 = vmatpush.msra.mxu0 0.0
        %3170 = vmatpush.msra.mxu0 0.0
        %3171 = vmatpush.msra.mxu0 0.0
        %3172 = vmatpush.msra.mxu0 0.0
        %3173 = vmatpush.msra.mxu0 0.0
        %3174 = vmatpush.msra.mxu0 0.0
        %3175 = vmatpush.msra.mxu0 0.0
        %3176 = vmatpush.msra.mxu0 0.0
        %3177 = vmatpush.msra.mxu0 0.0
        %3178 = vmatpush.msra.mxu0 0.0
        %3179 = vmatpush.msra.mxu0 0.0
        %3180 = vmatpush.msra.mxu0 %v3160
        %3181 = vmatpush.msra.mxu0 %v3159
        %3182 = vmatpush.msra.mxu0 %v3158
        %3183 = vmatpush.msra.mxu0 %v3157
        %3184 = vmatmul.f32.gmra.mxu0 %v3166
        %v3185 = vpop.f32.mrf.mxu0
        %v3186 = vadd.f32 %v3163, %v3185
        %3187 = vdwg.mxu0
        %v3188 = vmax.f32 %v3186, 0.0
        %v3189 = vld [vmem:[%s75] sm:$0xff]
        %v3190 = vld [vmem:[%s75 + $0x8] sm:$0xff]
        %v3191 = vld [vmem:[%s75 + $0x10] sm:$0xff]
        %v3192 = vld [vmem:[%s75 + $0x18] sm:$0xff]
        %v3193 = vld [vmem:[%s75 + $0x20] sm:$0xff]
        %v3194 = vld [vmem:[%s75 + $0x28] sm:$0xff]
        %v3195 = vld [vmem:[%s75 + $0x30] sm:$0xff]
        %v3196 = vld [vmem:[%s75 + $0x38] sm:$0xff]
        %v3197 = vld [vmem:[%s77] sm:$0x1]
        %v3199 = vperm.slane %v3197, 0
        %v3202 = vsel %vm1776, %v3188, 0
        %3204 = vmatpush.msra.mxu0 0.0
        %3205 = vmatpush.msra.mxu0 0.0
        %3206 = vmatpush.msra.mxu0 0.0
        %3207 = vmatpush.msra.mxu0 0.0
        %3208 = vmatpush.msra.mxu0 0.0
        %3209 = vmatpush.msra.mxu0 0.0
        %3210 = vmatpush.msra.mxu0 0.0
        %3211 = vmatpush.msra.mxu0 0.0
        %3212 = vmatpush.msra.mxu0 %v3196
        %3213 = vmatpush.msra.mxu0 %v3195
        %3214 = vmatpush.msra.mxu0 %v3194
        %3215 = vmatpush.msra.mxu0 %v3193
        %3216 = vmatpush.msra.mxu0 %v3192
        %3217 = vmatpush.msra.mxu0 %v3191
        %3218 = vmatpush.msra.mxu0 %v3190
        %3219 = vmatpush.msra.mxu0 %v3189
        %3220 = vmatmul.f32.gmra.mxu0 %v3202
        %v3221 = vpop.f32.mrf.mxu0
        %v3222 = vadd.f32 %v3199, %v3221
        %3223 = vdwg.mxu0
        %v3224 = vadd.f32 %v3121, %v3222
        %s3225 = scalar_lea.vmem %s39, 1
        %v3226 = vld [vmem:[%s3225] sm:$0x1]
        %s3227 = scalar_lea.vmem %s41, 1
        %v3228 = vld [vmem:[%s3227] sm:$0x1]
        %v3229 = vsel %vm1308, %v3224, 0.0
        %3230 = vadd.xlane.f32.xlu0 %v3229
        %v3231 = vpop.xlane.xlu0 %3230
        %v3232 = vmul.f32 %v3231, %v1318
        %v3233 = vsub.f32 %v3224, %v3232
        %v3234 = vmul.f32 %v3233, %v3233
        %v3235 = vsel %vm1308, %v3234, 0.0
        %3236 = vadd.xlane.f32.xlu0 %v3235
        %v3237 = vpop.xlane.xlu0 %3236
        %v3238 = vmul.f32 %v3237, 0.032258064
        %v3239 = vrsqrt.pop %v3238
        %v3240 = vmul.f32 %v3239, %v3238
        %v3241 = vmul.f32 %v3240, %v3239
        %v3242 = vmul.f32 0.5, %v3241
        %v3243 = vsub.f32 1.5, %v3242
        %v3244 = vmul.f32 %v3239, %v3243
        %v3245 = vmul.f32 %v3238, %v3244
        %vm3246 = vcmp.eq.f32.partialorder %v3238, inf
        %v3247 = vsel %vm3246, %v3238, %v3245
        %vm3248 = vcmp.eq.f32.partialorder %v3238, 0.0
        %v3249 = vand.u32 %v3238, 2147483648
        %v3250 = vsel %vm3248, %v3249, %v3247
        %v3251 = vadd.f32 %v3250, 1e-06
        %v3252 = vrcp.pop %v3251
        %v3253 = vmul.f32 %v3233, %v3252
        %v3255 = vperm.slane %v3226, 0
        %v3257 = vmul.f32 %v3255, %v3253
        %v3259 = vperm.slane %v3228, 0
        %v3261 = vadd.f32 %v3257, %v3259
        %s3262 = scalar_lea.vmem %s43, 32
        %v3263 = vld [vmem:[%s3262] sm:$0xff]
        %v3264 = vld [vmem:[%s3262 + $0x8] sm:$0xff]
        %v3265 = vld [vmem:[%s3262 + $0x10] sm:$0xff]
        %v3266 = vld [vmem:[%s3262 + $0x18] sm:$0xff]
        %s3267 = scalar_lea.vmem %s45, 1
        %v3268 = vld [vmem:[%s3267] sm:$0x1]
        %v3270 = vperm.slane %v3268, 0
        %v3273 = vsel %vm1308, %v3261, 0
        %3275 = vmatpush.msra.mxu0 0.0
        %3276 = vmatpush.msra.mxu0 0.0
        %3277 = vmatpush.msra.mxu0 0.0
        %3278 = vmatpush.msra.mxu0 0.0
        %3279 = vmatpush.msra.mxu0 0.0
        %3280 = vmatpush.msra.mxu0 0.0
        %3281 = vmatpush.msra.mxu0 0.0
        %3282 = vmatpush.msra.mxu0 0.0
        %3283 = vmatpush.msra.mxu0 0.0
        %3284 = vmatpush.msra.mxu0 0.0
        %3285 = vmatpush.msra.mxu0 0.0
        %3286 = vmatpush.msra.mxu0 0.0
        %3287 = vmatpush.msra.mxu0 %v3266
        %3288 = vmatpush.msra.mxu0 %v3265
        %3289 = vmatpush.msra.mxu0 %v3264
        %3290 = vmatpush.msra.mxu0 %v3263
        %3291 = vmatmul.f32.gmra.mxu0 %v3273
        %v3292 = vpop.f32.mrf.mxu0
        %v3293 = vadd.f32 %v3270, %v3292
        %3294 = vdwg.mxu0
        %3296 = vrot.lane.b32.xlu0 %v3293, 120
        %v3297 = vpop.permute.xlu0 %3296
        %3298 = vrot.lane.b32.xlu0 %v3293, 112
        %v3299 = vpop.permute.xlu0 %3298
        %3300 = vrot.lane.b32.xlu0 %v3293, 104
        %v3301 = vpop.permute.xlu0 %3300
        %3302 = vrot.lane.b32.xlu0 %v3293, 96
        %v3303 = vpop.permute.xlu0 %3302
        %v3304 = vsel %vm1389, %v3293, 0
        %v3306 = vsel %vm1389, %v3303, 0
        %3308 = vmatpush.xpose.msra.mxu0 0.0
        %3309 = vmatpush.xpose.msra.mxu0 0.0
        %3310 = vmatpush.xpose.msra.mxu0 0.0
        %3311 = vmatpush.xpose.msra.mxu0 0.0
        %3312 = vmatpush.xpose.msra.mxu0 0.0
        %3313 = vmatpush.xpose.msra.mxu0 0.0
        %3314 = vmatpush.xpose.msra.mxu0 0.0
        %3315 = vmatpush.xpose.msra.mxu0 0.0
        %3316 = vmatpush.xpose.msra.mxu0 0.0
        %3317 = vmatpush.xpose.msra.mxu0 0.0
        %3318 = vmatpush.xpose.msra.mxu0 0.0
        %3319 = vmatpush.xpose.msra.mxu0 0.0
        %3320 = vmatpush.xpose.msra.mxu0 0.0
        %3321 = vmatpush.xpose.msra.mxu0 0.0
        %3322 = vmatpush.xpose.msra.mxu0 0.0
        %3323 = vmatpush.xpose.msra.mxu0 %v3306
        %3324 = vmatmul.f32.gmra.mxu0 %v3304
        %v3325 = vpop.f32.mrf.mxu0
        %v3326 = vadd.f32 0.0, %v3325
        %3327 = vdwg.mxu0
        %3328 = vrot.lane.b32.xlu0 %v3297, 96
        %v3329 = vpop.permute.xlu0 %3328
        %v3330 = vsel %vm1389, %v3297, 0
        %v3332 = vsel %vm1389, %v3329, 0
        %3334 = vmatpush.xpose.msra.mxu0 0.0
        %3335 = vmatpush.xpose.msra.mxu0 0.0
        %3336 = vmatpush.xpose.msra.mxu0 0.0
        %3337 = vmatpush.xpose.msra.mxu0 0.0
        %3338 = vmatpush.xpose.msra.mxu0 0.0
        %3339 = vmatpush.xpose.msra.mxu0 0.0
        %3340 = vmatpush.xpose.msra.mxu0 0.0
        %3341 = vmatpush.xpose.msra.mxu0 0.0
        %3342 = vmatpush.xpose.msra.mxu0 0.0
        %3343 = vmatpush.xpose.msra.mxu0 0.0
        %3344 = vmatpush.xpose.msra.mxu0 0.0
        %3345 = vmatpush.xpose.msra.mxu0 0.0
        %3346 = vmatpush.xpose.msra.mxu0 0.0
        %3347 = vmatpush.xpose.msra.mxu0 0.0
        %3348 = vmatpush.xpose.msra.mxu0 0.0
        %3349 = vmatpush.xpose.msra.mxu0 %v3332
        %3350 = vmatmul.f32.gmra.mxu0 %v3330
        %v3351 = vpop.f32.mrf.mxu0
        %v3352 = vadd.f32 0.0, %v3351
        %3353 = vdwg.mxu0
        %3354 = vrot.lane.b32.xlu0 %v3299, 96
        %v3355 = vpop.permute.xlu0 %3354
        %v3356 = vsel %vm1389, %v3299, 0
        %v3358 = vsel %vm1389, %v3355, 0
        %3360 = vmatpush.xpose.msra.mxu0 0.0
        %3361 = vmatpush.xpose.msra.mxu0 0.0
        %3362 = vmatpush.xpose.msra.mxu0 0.0
        %3363 = vmatpush.xpose.msra.mxu0 0.0
        %3364 = vmatpush.xpose.msra.mxu0 0.0
        %3365 = vmatpush.xpose.msra.mxu0 0.0
        %3366 = vmatpush.xpose.msra.mxu0 0.0
        %3367 = vmatpush.xpose.msra.mxu0 0.0
        %3368 = vmatpush.xpose.msra.mxu0 0.0
        %3369 = vmatpush.xpose.msra.mxu0 0.0
        %3370 = vmatpush.xpose.msra.mxu0 0.0
        %3371 = vmatpush.xpose.msra.mxu0 0.0
        %3372 = vmatpush.xpose.msra.mxu0 0.0
        %3373 = vmatpush.xpose.msra.mxu0 0.0
        %3374 = vmatpush.xpose.msra.mxu0 0.0
        %3375 = vmatpush.xpose.msra.mxu0 %v3358
        %3376 = vmatmul.f32.gmra.mxu0 %v3356
        %v3377 = vpop.f32.mrf.mxu0
        %v3378 = vadd.f32 0.0, %v3377
        %3379 = vdwg.mxu0
        %3380 = vrot.lane.b32.xlu0 %v3301, 96
        %v3381 = vpop.permute.xlu0 %3380
        %v3382 = vsel %vm1389, %v3301, 0
        %v3384 = vsel %vm1389, %v3381, 0
        %3386 = vmatpush.xpose.msra.mxu0 0.0
        %3387 = vmatpush.xpose.msra.mxu0 0.0
        %3388 = vmatpush.xpose.msra.mxu0 0.0
        %3389 = vmatpush.xpose.msra.mxu0 0.0
        %3390 = vmatpush.xpose.msra.mxu0 0.0
        %3391 = vmatpush.xpose.msra.mxu0 0.0
        %3392 = vmatpush.xpose.msra.mxu0 0.0
        %3393 = vmatpush.xpose.msra.mxu0 0.0
        %3394 = vmatpush.xpose.msra.mxu0 0.0
        %3395 = vmatpush.xpose.msra.mxu0 0.0
        %3396 = vmatpush.xpose.msra.mxu0 0.0
        %3397 = vmatpush.xpose.msra.mxu0 0.0
        %3398 = vmatpush.xpose.msra.mxu0 0.0
        %3399 = vmatpush.xpose.msra.mxu0 0.0
        %3400 = vmatpush.xpose.msra.mxu0 0.0
        %3401 = vmatpush.xpose.msra.mxu0 %v3384
        %3402 = vmatmul.f32.gmra.mxu0 %v3382
        %v3403 = vpop.f32.mrf.mxu0
        %v3404 = vadd.f32 0.0, %v3403
        %3405 = vdwg.mxu0
        %v3406 = vmul.f32 %v3326, 0.35355338
        %v3407 = vmul.f32 %v3352, 0.35355338
        %v3408 = vmul.f32 %v3378, 0.35355338
        %v3409 = vmul.f32 %v3404, 0.35355338
        %v3410 = vadd.f32 %v3406, %v1303
        %v3411 = vadd.f32 %v3407, %v1303
        %v3412 = vadd.f32 %v3408, %v1303
        %v3413 = vadd.f32 %v3409, %v1303
        %v3414 = vsel %vm1389, %v3410, -inf
        %3415 = vmax.xlane.f32.xlu0 %v3414
        %v3416 = vpop.xlane.xlu0 %3415
        %v3417 = vsel %vm1389, %v3411, -inf
        %3418 = vmax.xlane.f32.xlu0 %v3417
        %v3419 = vpop.xlane.xlu0 %3418
        %v3420 = vsel %vm1389, %v3412, -inf
        %3421 = vmax.xlane.f32.xlu0 %v3420
        %v3422 = vpop.xlane.xlu0 %3421
        %v3423 = vsel %vm1389, %v3413, -inf
        %3424 = vmax.xlane.f32.xlu0 %v3423
        %v3425 = vpop.xlane.xlu0 %3424
        %v3426 = vsub.f32 %v3410, %v3416
        %v3427 = vsub.f32 %v3411, %v3419
        %v3428 = vsub.f32 %v3412, %v3422
        %v3429 = vsub.f32 %v3413, %v3425
        %v3430 = vmul.f32 %v3426, 1.442695
        %v3431 = vpow.pop %v3430
        %v3432 = vmul.f32 %v3427, 1.442695
        %v3433 = vpow.pop %v3432
        %v3434 = vmul.f32 %v3428, 1.442695
        %v3435 = vpow.pop %v3434
        %v3436 = vmul.f32 %v3429, 1.442695
        %v3437 = vpow.pop %v3436
        %v3438 = vsel %vm1389, %v3431, 0.0
        %3439 = vadd.xlane.f32.xlu0 %v3438
        %v3440 = vpop.xlane.xlu0 %3439
        %v3441 = vsel %vm1389, %v3433, 0.0
        %3442 = vadd.xlane.f32.xlu0 %v3441
        %v3443 = vpop.xlane.xlu0 %3442
        %v3444 = vsel %vm1389, %v3435, 0.0
        %3445 = vadd.xlane.f32.xlu0 %v3444
        %v3446 = vpop.xlane.xlu0 %3445
        %v3447 = vsel %vm1389, %v3437, 0.0
        %3448 = vadd.xlane.f32.xlu0 %v3447
        %v3449 = vpop.xlane.xlu0 %3448
        %v3450 = vrcp.pop %v3440
        %v3451 = vrcp.pop %v3443
        %v3452 = vrcp.pop %v3446
        %v3453 = vrcp.pop %v3449
        %v3454 = vmul.f32 %v3431, %v3450
        %v3455 = vmul.f32 %v3433, %v3451
        %v3456 = vmul.f32 %v3435, %v3452
        %v3457 = vmul.f32 %v3437, %v3453
        %3458 = vrot.lane.b32.xlu0 %v3293, 64
        %v3459 = vpop.permute.xlu0 %3458
        %v3462 = vsel %vm1389, %v3454, 0
        %3464 = vmatpush.msra.mxu0 0.0
        %3465 = vmatpush.msra.mxu0 0.0
        %3466 = vmatpush.msra.mxu0 0.0
        %3467 = vmatpush.msra.mxu0 0.0
        %3468 = vmatpush.msra.mxu0 0.0
        %3469 = vmatpush.msra.mxu0 0.0
        %3470 = vmatpush.msra.mxu0 0.0
        %3471 = vmatpush.msra.mxu0 0.0
        %3472 = vmatpush.msra.mxu0 0.0
        %3473 = vmatpush.msra.mxu0 0.0
        %3474 = vmatpush.msra.mxu0 0.0
        %3475 = vmatpush.msra.mxu0 0.0
        %3476 = vmatpush.msra.mxu0 0.0
        %3477 = vmatpush.msra.mxu0 0.0
        %3478 = vmatpush.msra.mxu0 0.0
        %3479 = vmatpush.msra.mxu0 %v3459
        %3480 = vmatmul.f32.gmra.mxu0 %v3462
        %v3481 = vpop.f32.mrf.mxu0
        %v3482 = vadd.f32 0.0, %v3481
        %3483 = vdwg.mxu0
        %3484 = vrot.lane.b32.xlu0 %v3297, 64
        %v3485 = vpop.permute.xlu0 %3484
        %v3488 = vsel %vm1389, %v3455, 0
        %3490 = vmatpush.msra.mxu0 0.0
        %3491 = vmatpush.msra.mxu0 0.0
        %3492 = vmatpush.msra.mxu0 0.0
        %3493 = vmatpush.msra.mxu0 0.0
        %3494 = vmatpush.msra.mxu0 0.0
        %3495 = vmatpush.msra.mxu0 0.0
        %3496 = vmatpush.msra.mxu0 0.0
        %3497 = vmatpush.msra.mxu0 0.0
        %3498 = vmatpush.msra.mxu0 0.0
        %3499 = vmatpush.msra.mxu0 0.0
        %3500 = vmatpush.msra.mxu0 0.0
        %3501 = vmatpush.msra.mxu0 0.0
        %3502 = vmatpush.msra.mxu0 0.0
        %3503 = vmatpush.msra.mxu0 0.0
        %3504 = vmatpush.msra.mxu0 0.0
        %3505 = vmatpush.msra.mxu0 %v3485
        %3506 = vmatmul.f32.gmra.mxu0 %v3488
        %v3507 = vpop.f32.mrf.mxu0
        %v3508 = vadd.f32 0.0, %v3507
        %3509 = vdwg.mxu0
        %3510 = vrot.lane.b32.xlu0 %v3299, 64
        %v3511 = vpop.permute.xlu0 %3510
        %v3514 = vsel %vm1389, %v3456, 0
        %3516 = vmatpush.msra.mxu0 0.0
        %3517 = vmatpush.msra.mxu0 0.0
        %3518 = vmatpush.msra.mxu0 0.0
        %3519 = vmatpush.msra.mxu0 0.0
        %3520 = vmatpush.msra.mxu0 0.0
        %3521 = vmatpush.msra.mxu0 0.0
        %3522 = vmatpush.msra.mxu0 0.0
        %3523 = vmatpush.msra.mxu0 0.0
        %3524 = vmatpush.msra.mxu0 0.0
        %3525 = vmatpush.msra.mxu0 0.0
        %3526 = vmatpush.msra.mxu0 0.0
        %3527 = vmatpush.msra.mxu0 0.0
        %3528 = vmatpush.msra.mxu0 0.0
        %3529 = vmatpush.msra.mxu0 0.0
        %3530 = vmatpush.msra.mxu0 0.0
        %3531 = vmatpush.msra.mxu0 %v3511
        %3532 = vmatmul.f32.gmra.mxu0 %v3514
        %v3533 = vpop.f32.mrf.mxu0
        %v3534 = vadd.f32 0.0, %v3533
        %3535 = vdwg.mxu0
        %3536 = vrot.lane.b32.xlu0 %v3301, 64
        %v3537 = vpop.permute.xlu0 %3536
        %v3540 = vsel %vm1389, %v3457, 0
        %3542 = vmatpush.msra.mxu0 0.0
        %3543 = vmatpush.msra.mxu0 0.0
        %3544 = vmatpush.msra.mxu0 0.0
        %3545 = vmatpush.msra.mxu0 0.0
        %3546 = vmatpush.msra.mxu0 0.0
        %3547 = vmatpush.msra.mxu0 0.0
        %3548 = vmatpush.msra.mxu0 0.0
        %3549 = vmatpush.msra.mxu0 0.0
        %3550 = vmatpush.msra.mxu0 0.0
        %3551 = vmatpush.msra.mxu0 0.0
        %3552 = vmatpush.msra.mxu0 0.0
        %3553 = vmatpush.msra.mxu0 0.0
        %3554 = vmatpush.msra.mxu0 0.0
        %3555 = vmatpush.msra.mxu0 0.0
        %3556 = vmatpush.msra.mxu0 0.0
        %3557 = vmatpush.msra.mxu0 %v3537
        %3558 = vmatmul.f32.gmra.mxu0 %v3540
        %v3559 = vpop.f32.mrf.mxu0
        %v3560 = vadd.f32 0.0, %v3559
        %3561 = vdwg.mxu0
        %3563 = vrot.lane.b32.xlu0 %v3508, 8
        %v3564 = vpop.permute.xlu0 %3563
        %3567 = vrot.lane.b32.xlu0 %v3534, 16
        %v3568 = vpop.permute.xlu0 %3567
        %3571 = vrot.lane.b32.xlu0 %v3560, 24
        %v3572 = vpop.permute.xlu0 %3571
        %v3574 = vsel %vm1389, %v3482, %v3564
        %v3575 = vsel %vm1661, %v3574, %v3568
        %v3576 = vsel %vm1663, %v3575, %v3572
        %s3577 = scalar_lea.vmem %s47, 32
        %v3578 = vld [vmem:[%s3577] sm:$0xff]
        %v3579 = vld [vmem:[%s3577 + $0x8] sm:$0xff]
        %v3580 = vld [vmem:[%s3577 + $0x10] sm:$0xff]
        %v3581 = vld [vmem:[%s3577 + $0x18] sm:$0xff]
        %s3582 = scalar_lea.vmem %s49, 1
        %v3583 = vld [vmem:[%s3582] sm:$0x1]
        %v3585 = vperm.slane %v3583, 0
        %v3588 = vsel %vm1308, %v3576, 0
        %3590 = vmatpush.msra.mxu0 0.0
        %3591 = vmatpush.msra.mxu0 0.0
        %3592 = vmatpush.msra.mxu0 0.0
        %3593 = vmatpush.msra.mxu0 0.0
        %3594 = vmatpush.msra.mxu0 0.0
        %3595 = vmatpush.msra.mxu0 0.0
        %3596 = vmatpush.msra.mxu0 0.0
        %3597 = vmatpush.msra.mxu0 0.0
        %3598 = vmatpush.msra.mxu0 0.0
        %3599 = vmatpush.msra.mxu0 0.0
        %3600 = vmatpush.msra.mxu0 0.0
        %3601 = vmatpush.msra.mxu0 0.0
        %3602 = vmatpush.msra.mxu0 %v3581
        %3603 = vmatpush.msra.mxu0 %v3580
        %3604 = vmatpush.msra.mxu0 %v3579
        %3605 = vmatpush.msra.mxu0 %v3578
        %3606 = vmatmul.f32.gmra.mxu0 %v3588
        %v3607 = vpop.f32.mrf.mxu0
        %v3608 = vadd.f32 %v3585, %v3607
        %3609 = vdwg.mxu0
        %v3610 = vadd.f32 %v3224, %v3608
        %s3611 = scalar_lea.vmem %s51, 1
        %v3612 = vld [vmem:[%s3611] sm:$0x1]
        %s3613 = scalar_lea.vmem %s53, 1
        %v3614 = vld [vmem:[%s3613] sm:$0x1]
        %v3615 = vsel %vm1308, %v3610, 0.0
        %3616 = vadd.xlane.f32.xlu0 %v3615
        %v3617 = vpop.xlane.xlu0 %3616
        %v3618 = vmul.f32 %v3617, %v1318
        %v3619 = vsub.f32 %v3610, %v3618
        %v3620 = vmul.f32 %v3619, %v3619
        %v3621 = vsel %vm1308, %v3620, 0.0
        %3622 = vadd.xlane.f32.xlu0 %v3621
        %v3623 = vpop.xlane.xlu0 %3622
        %v3624 = vmul.f32 %v3623, 0.032258064
        %v3625 = vrsqrt.pop %v3624
        %v3626 = vmul.f32 %v3625, %v3624
        %v3627 = vmul.f32 %v3626, %v3625
        %v3628 = vmul.f32 0.5, %v3627
        %v3629 = vsub.f32 1.5, %v3628
        %v3630 = vmul.f32 %v3625, %v3629
        %v3631 = vmul.f32 %v3624, %v3630
        %vm3632 = vcmp.eq.f32.partialorder %v3624, inf
        %v3633 = vsel %vm3632, %v3624, %v3631
        %vm3634 = vcmp.eq.f32.partialorder %v3624, 0.0
        %v3635 = vand.u32 %v3624, 2147483648
        %v3636 = vsel %vm3634, %v3635, %v3633
        %v3637 = vadd.f32 %v3636, 1e-06
        %v3638 = vrcp.pop %v3637
        %v3639 = vmul.f32 %v3619, %v3638
        %v3641 = vperm.slane %v3612, 0
        %v3643 = vmul.f32 %v3641, %v3639
        %v3645 = vperm.slane %v3614, 0
        %v3647 = vadd.f32 %v3643, %v3645
        %s3648 = scalar_lea.vmem %s55, 32
        %v3649 = vld [vmem:[%s3648] sm:$0xff]
        %v3650 = vld [vmem:[%s3648 + $0x8] sm:$0xff]
        %v3651 = vld [vmem:[%s3648 + $0x10] sm:$0xff]
        %v3652 = vld [vmem:[%s3648 + $0x18] sm:$0xff]
        %s3653 = scalar_lea.vmem %s57, 1
        %v3654 = vld [vmem:[%s3653] sm:$0x1]
        %v3656 = vperm.slane %v3654, 0
        %v3659 = vsel %vm1308, %v3647, 0
        %3661 = vmatpush.msra.mxu0 0.0
        %3662 = vmatpush.msra.mxu0 0.0
        %3663 = vmatpush.msra.mxu0 0.0
        %3664 = vmatpush.msra.mxu0 0.0
        %3665 = vmatpush.msra.mxu0 0.0
        %3666 = vmatpush.msra.mxu0 0.0
        %3667 = vmatpush.msra.mxu0 0.0
        %3668 = vmatpush.msra.mxu0 0.0
        %3669 = vmatpush.msra.mxu0 0.0
        %3670 = vmatpush.msra.mxu0 0.0
        %3671 = vmatpush.msra.mxu0 0.0
        %3672 = vmatpush.msra.mxu0 0.0
        %3673 = vmatpush.msra.mxu0 %v3652
        %3674 = vmatpush.msra.mxu0 %v3651
        %3675 = vmatpush.msra.mxu0 %v3650
        %3676 = vmatpush.msra.mxu0 %v3649
        %3677 = vmatmul.f32.gmra.mxu0 %v3659
        %v3678 = vpop.f32.mrf.mxu0
        %v3679 = vadd.f32 %v3656, %v3678
        %3680 = vdwg.mxu0
        %s3681 = scalar_lea.vmem %s59, 32
        %v3682 = vld [vmem:[%s3681] sm:$0xff]
        %v3683 = vld [vmem:[%s3681 + $0x8] sm:$0xff]
        %v3684 = vld [vmem:[%s3681 + $0x10] sm:$0xff]
        %v3685 = vld [vmem:[%s3681 + $0x18] sm:$0xff]
        %s3686 = scalar_lea.vmem %s61, 1
        %v3687 = vld [vmem:[%s3686] sm:$0x1]
        %v3689 = vperm.slane %v3687, 0
        %3691 = vmatpush.msra.mxu0 0.0
        %3692 = vmatpush.msra.mxu0 0.0
        %3693 = vmatpush.msra.mxu0 0.0
        %3694 = vmatpush.msra.mxu0 0.0
        %3695 = vmatpush.msra.mxu0 0.0
        %3696 = vmatpush.msra.mxu0 0.0
        %3697 = vmatpush.msra.mxu0 0.0
        %3698 = vmatpush.msra.mxu0 0.0
        %3699 = vmatpush.msra.mxu0 0.0
        %3700 = vmatpush.msra.mxu0 0.0
        %3701 = vmatpush.msra.mxu0 0.0
        %3702 = vmatpush.msra.mxu0 0.0
        %3703 = vmatpush.msra.mxu0 %v3685
        %3704 = vmatpush.msra.mxu0 %v3684
        %3705 = vmatpush.msra.mxu0 %v3683
        %3706 = vmatpush.msra.mxu0 %v3682
        %3707 = vmatmul.f32.gmra.mxu0 %v2787
        %v3708 = vpop.f32.mrf.mxu0
        %v3709 = vadd.f32 %v3689, %v3708
        %3710 = vdwg.mxu0
        %3712 = vrot.lane.b32.xlu0 %v3679, 120
        %v3713 = vpop.permute.xlu0 %3712
        %3714 = vrot.lane.b32.xlu0 %v3679, 112
        %v3715 = vpop.permute.xlu0 %3714
        %3716 = vrot.lane.b32.xlu0 %v3679, 104
        %v3717 = vpop.permute.xlu0 %3716
        %3719 = vrot.lane.b32.xlu0 %v3709, 120
        %v3720 = vpop.permute.xlu0 %3719
        %3721 = vrot.lane.b32.xlu0 %v3709, 112
        %v3722 = vpop.permute.xlu0 %3721
        %3723 = vrot.lane.b32.xlu0 %v3709, 104
        %v3724 = vpop.permute.xlu0 %3723
        %v3725 = vsel %vm1389, %v3679, 0
        %v3727 = vsel %vm1389, %v3709, 0
        %3729 = vmatpush.xpose.msra.mxu0 0.0
        %3730 = vmatpush.xpose.msra.mxu0 0.0
        %3731 = vmatpush.xpose.msra.mxu0 0.0
        %3732 = vmatpush.xpose.msra.mxu0 0.0
        %3733 = vmatpush.xpose.msra.mxu0 0.0
        %3734 = vmatpush.xpose.msra.mxu0 0.0
        %3735 = vmatpush.xpose.msra.mxu0 0.0
        %3736 = vmatpush.xpose.msra.mxu0 0.0
        %3737 = vmatpush.xpose.msra.mxu0 0.0
        %3738 = vmatpush.xpose.msra.mxu0 0.0
        %3739 = vmatpush.xpose.msra.mxu0 0.0
        %3740 = vmatpush.xpose.msra.mxu0 0.0
        %3741 = vmatpush.xpose.msra.mxu0 0.0
        %3742 = vmatpush.xpose.msra.mxu0 0.0
        %3743 = vmatpush.xpose.msra.mxu0 0.0
        %3744 = vmatpush.xpose.msra.mxu0 %v3727
        %3745 = vmatmul.f32.gmra.mxu0 %v3725
        %v3746 = vpop.f32.mrf.mxu0
        %v3747 = vadd.f32 0.0, %v3746
        %3748 = vdwg.mxu0
        %v3749 = vsel %vm1389, %v3713, 0
        %v3751 = vsel %vm1389, %v3720, 0
        %3753 = vmatpush.xpose.msra.mxu0 0.0
        %3754 = vmatpush.xpose.msra.mxu0 0.0
        %3755 = vmatpush.xpose.msra.mxu0 0.0
        %3756 = vmatpush.xpose.msra.mxu0 0.0
        %3757 = vmatpush.xpose.msra.mxu0 0.0
        %3758 = vmatpush.xpose.msra.mxu0 0.0
        %3759 = vmatpush.xpose.msra.mxu0 0.0
        %3760 = vmatpush.xpose.msra.mxu0 0.0
        %3761 = vmatpush.xpose.msra.mxu0 0.0
        %3762 = vmatpush.xpose.msra.mxu0 0.0
        %3763 = vmatpush.xpose.msra.mxu0 0.0
        %3764 = vmatpush.xpose.msra.mxu0 0.0
        %3765 = vmatpush.xpose.msra.mxu0 0.0
        %3766 = vmatpush.xpose.msra.mxu0 0.0
        %3767 = vmatpush.xpose.msra.mxu0 0.0
        %3768 = vmatpush.xpose.msra.mxu0 %v3751
        %3769 = vmatmul.f32.gmra.mxu0 %v3749
        %v3770 = vpop.f32.mrf.mxu0
        %v3771 = vadd.f32 0.0, %v3770
        %3772 = vdwg.mxu0
        %v3773 = vsel %vm1389, %v3715, 0
        %v3775 = vsel %vm1389, %v3722, 0
        %3777 = vmatpush.xpose.msra.mxu0 0.0
        %3778 = vmatpush.xpose.msra.mxu0 0.0
        %3779 = vmatpush.xpose.msra.mxu0 0.0
        %3780 = vmatpush.xpose.msra.mxu0 0.0
        %3781 = vmatpush.xpose.msra.mxu0 0.0
        %3782 = vmatpush.xpose.msra.mxu0 0.0
        %3783 = vmatpush.xpose.msra.mxu0 0.0
        %3784 = vmatpush.xpose.msra.mxu0 0.0
        %3785 = vmatpush.xpose.msra.mxu0 0.0
        %3786 = vmatpush.xpose.msra.mxu0 0.0
        %3787 = vmatpush.xpose.msra.mxu0 0.0
        %3788 = vmatpush.xpose.msra.mxu0 0.0
        %3789 = vmatpush.xpose.msra.mxu0 0.0
        %3790 = vmatpush.xpose.msra.mxu0 0.0
        %3791 = vmatpush.xpose.msra.mxu0 0.0
        %3792 = vmatpush.xpose.msra.mxu0 %v3775
        %3793 = vmatmul.f32.gmra.mxu0 %v3773
        %v3794 = vpop.f32.mrf.mxu0
        %v3795 = vadd.f32 0.0, %v3794
        %3796 = vdwg.mxu0
        %v3797 = vsel %vm1389, %v3717, 0
        %v3799 = vsel %vm1389, %v3724, 0
        %3801 = vmatpush.xpose.msra.mxu0 0.0
        %3802 = vmatpush.xpose.msra.mxu0 0.0
        %3803 = vmatpush.xpose.msra.mxu0 0.0
        %3804 = vmatpush.xpose.msra.mxu0 0.0
        %3805 = vmatpush.xpose.msra.mxu0 0.0
        %3806 = vmatpush.xpose.msra.mxu0 0.0
        %3807 = vmatpush.xpose.msra.mxu0 0.0
        %3808 = vmatpush.xpose.msra.mxu0 0.0
        %3809 = vmatpush.xpose.msra.mxu0 0.0
        %3810 = vmatpush.xpose.msra.mxu0 0.0
        %3811 = vmatpush.xpose.msra.mxu0 0.0
        %3812 = vmatpush.xpose.msra.mxu0 0.0
        %3813 = vmatpush.xpose.msra.mxu0 0.0
        %3814 = vmatpush.xpose.msra.mxu0 0.0
        %3815 = vmatpush.xpose.msra.mxu0 0.0
        %3816 = vmatpush.xpose.msra.mxu0 %v3799
        %3817 = vmatmul.f32.gmra.mxu0 %v3797
        %v3818 = vpop.f32.mrf.mxu0
        %v3819 = vadd.f32 0.0, %v3818
        %3820 = vdwg.mxu0
        %v3821 = vmul.f32 %v3747, 0.35355338
        %v3822 = vmul.f32 %v3771, 0.35355338
        %v3823 = vmul.f32 %v3795, 0.35355338
        %v3824 = vmul.f32 %v3819, 0.35355338
        %v3825 = vadd.f32 %v3821, %v1304
        %v3826 = vadd.f32 %v3822, %v1304
        %v3827 = vadd.f32 %v3823, %v1304
        %v3828 = vadd.f32 %v3824, %v1304
        %v3829 = vsel %vm1389, %v3825, -inf
        %3830 = vmax.xlane.f32.xlu0 %v3829
        %v3831 = vpop.xlane.xlu0 %3830
        %v3832 = vsel %vm1389, %v3826, -inf
        %3833 = vmax.xlane.f32.xlu0 %v3832
        %v3834 = vpop.xlane.xlu0 %3833
        %v3835 = vsel %vm1389, %v3827, -inf
        %3836 = vmax.xlane.f32.xlu0 %v3835
        %v3837 = vpop.xlane.xlu0 %3836
        %v3838 = vsel %vm1389, %v3828, -inf
        %3839 = vmax.xlane.f32.xlu0 %v3838
        %v3840 = vpop.xlane.xlu0 %3839
        %v3841 = vsub.f32 %v3825, %v3831
        %v3842 = vsub.f32 %v3826, %v3834
        %v3843 = vsub.f32 %v3827, %v3837
        %v3844 = vsub.f32 %v3828, %v3840
        %v3845 = vmul.f32 %v3841, 1.442695
        %v3846 = vpow.pop %v3845
        %v3847 = vmul.f32 %v3842, 1.442695
        %v3848 = vpow.pop %v3847
        %v3849 = vmul.f32 %v3843, 1.442695
        %v3850 = vpow.pop %v3849
        %v3851 = vmul.f32 %v3844, 1.442695
        %v3852 = vpow.pop %v3851
        %v3853 = vsel %vm1389, %v3846, 0.0
        %3854 = vadd.xlane.f32.xlu0 %v3853
        %v3855 = vpop.xlane.xlu0 %3854
        %v3856 = vsel %vm1389, %v3848, 0.0
        %3857 = vadd.xlane.f32.xlu0 %v3856
        %v3858 = vpop.xlane.xlu0 %3857
        %v3859 = vsel %vm1389, %v3850, 0.0
        %3860 = vadd.xlane.f32.xlu0 %v3859
        %v3861 = vpop.xlane.xlu0 %3860
        %v3862 = vsel %vm1389, %v3852, 0.0
        %3863 = vadd.xlane.f32.xlu0 %v3862
        %v3864 = vpop.xlane.xlu0 %3863
        %v3865 = vrcp.pop %v3855
        %v3866 = vrcp.pop %v3858
        %v3867 = vrcp.pop %v3861
        %v3868 = vrcp.pop %v3864
        %v3869 = vmul.f32 %v3846, %v3865
        %v3870 = vmul.f32 %v3848, %v3866
        %v3871 = vmul.f32 %v3850, %v3867
        %v3872 = vmul.f32 %v3852, %v3868
        %3873 = vrot.lane.b32.xlu0 %v3709, 96
        %v3874 = vpop.permute.xlu0 %3873
        %v3877 = vsel %vm1389, %v3869, 0
        %3879 = vmatpush.msra.mxu0 0.0
        %3880 = vmatpush.msra.mxu0 0.0
        %3881 = vmatpush.msra.mxu0 0.0
        %3882 = vmatpush.msra.mxu0 0.0
        %3883 = vmatpush.msra.mxu0 0.0
        %3884 = vmatpush.msra.mxu0 0.0
        %3885 = vmatpush.msra.mxu0 0.0
        %3886 = vmatpush.msra.mxu0 0.0
        %3887 = vmatpush.msra.mxu0 0.0
        %3888 = vmatpush.msra.mxu0 0.0
        %3889 = vmatpush.msra.mxu0 0.0
        %3890 = vmatpush.msra.mxu0 0.0
        %3891 = vmatpush.msra.mxu0 0.0
        %3892 = vmatpush.msra.mxu0 0.0
        %3893 = vmatpush.msra.mxu0 0.0
        %3894 = vmatpush.msra.mxu0 %v3874
        %3895 = vmatmul.f32.gmra.mxu0 %v3877
        %v3896 = vpop.f32.mrf.mxu0
        %v3897 = vadd.f32 0.0, %v3896
        %3898 = vdwg.mxu0
        %3899 = vrot.lane.b32.xlu0 %v3720, 96
        %v3900 = vpop.permute.xlu0 %3899
        %v3903 = vsel %vm1389, %v3870, 0
        %3905 = vmatpush.msra.mxu0 0.0
        %3906 = vmatpush.msra.mxu0 0.0
        %3907 = vmatpush.msra.mxu0 0.0
        %3908 = vmatpush.msra.mxu0 0.0
        %3909 = vmatpush.msra.mxu0 0.0
        %3910 = vmatpush.msra.mxu0 0.0
        %3911 = vmatpush.msra.mxu0 0.0
        %3912 = vmatpush.msra.mxu0 0.0
        %3913 = vmatpush.msra.mxu0 0.0
        %3914 = vmatpush.msra.mxu0 0.0
        %3915 = vmatpush.msra.mxu0 0.0
        %3916 = vmatpush.msra.mxu0 0.0
        %3917 = vmatpush.msra.mxu0 0.0
        %3918 = vmatpush.msra.mxu0 0.0
        %3919 = vmatpush.msra.mxu0 0.0
        %3920 = vmatpush.msra.mxu0 %v3900
        %3921 = vmatmul.f32.gmra.mxu0 %v3903
        %v3922 = vpop.f32.mrf.mxu0
        %v3923 = vadd.f32 0.0, %v3922
        %3924 = vdwg.mxu0
        %3925 = vrot.lane.b32.xlu0 %v3722, 96
        %v3926 = vpop.permute.xlu0 %3925
        %v3929 = vsel %vm1389, %v3871, 0
        %3931 = vmatpush.msra.mxu0 0.0
        %3932 = vmatpush.msra.mxu0 0.0
        %3933 = vmatpush.msra.mxu0 0.0
        %3934 = vmatpush.msra.mxu0 0.0
        %3935 = vmatpush.msra.mxu0 0.0
        %3936 = vmatpush.msra.mxu0 0.0
        %3937 = vmatpush.msra.mxu0 0.0
        %3938 = vmatpush.msra.mxu0 0.0
        %3939 = vmatpush.msra.mxu0 0.0
        %3940 = vmatpush.msra.mxu0 0.0
        %3941 = vmatpush.msra.mxu0 0.0
        %3942 = vmatpush.msra.mxu0 0.0
        %3943 = vmatpush.msra.mxu0 0.0
        %3944 = vmatpush.msra.mxu0 0.0
        %3945 = vmatpush.msra.mxu0 0.0
        %3946 = vmatpush.msra.mxu0 %v3926
        %3947 = vmatmul.f32.gmra.mxu0 %v3929
        %v3948 = vpop.f32.mrf.mxu0
        %v3949 = vadd.f32 0.0, %v3948
        %3950 = vdwg.mxu0
        %3951 = vrot.lane.b32.xlu0 %v3724, 96
        %v3952 = vpop.permute.xlu0 %3951
        %v3955 = vsel %vm1389, %v3872, 0
        %3957 = vmatpush.msra.mxu0 0.0
        %3958 = vmatpush.msra.mxu0 0.0
        %3959 = vmatpush.msra.mxu0 0.0
        %3960 = vmatpush.msra.mxu0 0.0
        %3961 = vmatpush.msra.mxu0 0.0
        %3962 = vmatpush.msra.mxu0 0.0
        %3963 = vmatpush.msra.mxu0 0.0
        %3964 = vmatpush.msra.mxu0 0.0
        %3965 = vmatpush.msra.mxu0 0.0
        %3966 = vmatpush.msra.mxu0 0.0
        %3967 = vmatpush.msra.mxu0 0.0
        %3968 = vmatpush.msra.mxu0 0.0
        %3969 = vmatpush.msra.mxu0 0.0
        %3970 = vmatpush.msra.mxu0 0.0
        %3971 = vmatpush.msra.mxu0 0.0
        %3972 = vmatpush.msra.mxu0 %v3952
        %3973 = vmatmul.f32.gmra.mxu0 %v3955
        %v3974 = vpop.f32.mrf.mxu0
        %v3975 = vadd.f32 0.0, %v3974
        %3976 = vdwg.mxu0
        %3978 = vrot.lane.b32.xlu0 %v3923, 8
        %v3979 = vpop.permute.xlu0 %3978
        %3982 = vrot.lane.b32.xlu0 %v3949, 16
        %v3983 = vpop.permute.xlu0 %3982
        %3986 = vrot.lane.b32.xlu0 %v3975, 24
        %v3987 = vpop.permute.xlu0 %3986
        %v3989 = vsel %vm1389, %v3897, %v3979
        %v3990 = vsel %vm1661, %v3989, %v3983
        %v3991 = vsel %vm1663, %v3990, %v3987
        %s3992 = scalar_lea.vmem %s63, 32
        %v3993 = vld [vmem:[%s3992] sm:$0xff]
        %v3994 = vld [vmem:[%s3992 + $0x8] sm:$0xff]
        %v3995 = vld [vmem:[%s3992 + $0x10] sm:$0xff]
        %v3996 = vld [vmem:[%s3992 + $0x18] sm:$0xff]
        %s3997 = scalar_lea.vmem %s65, 1
        %v3998 = vld [vmem:[%s3997] sm:$0x1]
        %v4000 = vperm.slane %v3998, 0
        %v4003 = vsel %vm1308, %v3991, 0
        %4005 = vmatpush.msra.mxu0 0.0
        %4006 = vmatpush.msra.mxu0 0.0
        %4007 = vmatpush.msra.mxu0 0.0
        %4008 = vmatpush.msra.mxu0 0.0
        %4009 = vmatpush.msra.mxu0 0.0
        %4010 = vmatpush.msra.mxu0 0.0
        %4011 = vmatpush.msra.mxu0 0.0
        %4012 = vmatpush.msra.mxu0 0.0
        %4013 = vmatpush.msra.mxu0 0.0
        %4014 = vmatpush.msra.mxu0 0.0
        %4015 = vmatpush.msra.mxu0 0.0
        %4016 = vmatpush.msra.mxu0 0.0
        %4017 = vmatpush.msra.mxu0 %v3996
        %4018 = vmatpush.msra.mxu0 %v3995
        %4019 = vmatpush.msra.mxu0 %v3994
        %4020 = vmatpush.msra.mxu0 %v3993
        %4021 = vmatmul.f32.gmra.mxu0 %v4003
        %v4022 = vpop.f32.mrf.mxu0
        %v4023 = vadd.f32 %v4000, %v4022
        %4024 = vdwg.mxu0
        %v4025 = vadd.f32 %v3610, %v4023
        %s4026 = scalar_lea.vmem %s67, 1
        %v4027 = vld [vmem:[%s4026] sm:$0x1]
        %s4028 = scalar_lea.vmem %s69, 1
        %v4029 = vld [vmem:[%s4028] sm:$0x1]
        %v4030 = vsel %vm1308, %v4025, 0.0
        %4031 = vadd.xlane.f32.xlu0 %v4030
        %v4032 = vpop.xlane.xlu0 %4031
        %v4033 = vmul.f32 %v4032, %v1318
        %v4034 = vsub.f32 %v4025, %v4033
        %v4035 = vmul.f32 %v4034, %v4034
        %v4036 = vsel %vm1308, %v4035, 0.0
        %4037 = vadd.xlane.f32.xlu0 %v4036
        %v4038 = vpop.xlane.xlu0 %4037
        %v4039 = vmul.f32 %v4038, 0.032258064
        %v4040 = vrsqrt.pop %v4039
        %v4041 = vmul.f32 %v4040, %v4039
        %v4042 = vmul.f32 %v4041, %v4040
        %v4043 = vmul.f32 0.5, %v4042
        %v4044 = vsub.f32 1.5, %v4043
        %v4045 = vmul.f32 %v4040, %v4044
        %v4046 = vmul.f32 %v4039, %v4045
        %vm4047 = vcmp.eq.f32.partialorder %v4039, inf
        %v4048 = vsel %vm4047, %v4039, %v4046
        %vm4049 = vcmp.eq.f32.partialorder %v4039, 0.0
        %v4050 = vand.u32 %v4039, 2147483648
        %v4051 = vsel %vm4049, %v4050, %v4048
        %v4052 = vadd.f32 %v4051, 1e-06
        %v4053 = vrcp.pop %v4052
        %v4054 = vmul.f32 %v4034, %v4053
        %v4056 = vperm.slane %v4027, 0
        %v4058 = vmul.f32 %v4056, %v4054
        %v4060 = vperm.slane %v4029, 0
        %v4062 = vadd.f32 %v4058, %v4060
        %s4063 = scalar_lea.vmem %s71, 32
        %v4064 = vld [vmem:[%s4063] sm:$0xff]
        %v4065 = vld [vmem:[%s4063 + $0x8] sm:$0xff]
        %v4066 = vld [vmem:[%s4063 + $0x10] sm:$0xff]
        %v4067 = vld [vmem:[%s4063 + $0x18] sm:$0xff]
        %s4068 = scalar_lea.vmem %s73, 1
        %v4069 = vld [vmem:[%s4068] sm:$0x1]
        %v4071 = vperm.slane %v4069, 0
        %v4074 = vsel %vm1308, %v4062, 0
        %4076 = vmatpush.msra.mxu0 0.0
        %4077 = vmatpush.msra.mxu0 0.0
        %4078 = vmatpush.msra.mxu0 0.0
        %4079 = vmatpush.msra.mxu0 0.0
        %4080 = vmatpush.msra.mxu0 0.0
        %4081 = vmatpush.msra.mxu0 0.0
        %4082 = vmatpush.msra.mxu0 0.0
        %4083 = vmatpush.msra.mxu0 0.0
        %4084 = vmatpush.msra.mxu0 0.0
        %4085 = vmatpush.msra.mxu0 0.0
        %4086 = vmatpush.msra.mxu0 0.0
        %4087 = vmatpush.msra.mxu0 0.0
        %4088 = vmatpush.msra.mxu0 %v4067
        %4089 = vmatpush.msra.mxu0 %v4066
        %4090 = vmatpush.msra.mxu0 %v4065
        %4091 = vmatpush.msra.mxu0 %v4064
        %4092 = vmatmul.f32.gmra.mxu0 %v4074
        %v4093 = vpop.f32.mrf.mxu0
        %v4094 = vadd.f32 %v4071, %v4093
        %4095 = vdwg.mxu0
        %v4096 = vmax.f32 %v4094, 0.0
        %s4097 = scalar_lea.vmem %s75, 64
        %v4098 = vld [vmem:[%s4097] sm:$0xff]
        %v4099 = vld [vmem:[%s4097 + $0x8] sm:$0xff]
        %v4100 = vld [vmem:[%s4097 + $0x10] sm:$0xff]
        %v4101 = vld [vmem:[%s4097 + $0x18] sm:$0xff]
        %v4102 = vld [vmem:[%s4097 + $0x20] sm:$0xff]
        %v4103 = vld [vmem:[%s4097 + $0x28] sm:$0xff]
        %v4104 = vld [vmem:[%s4097 + $0x30] sm:$0xff]
        %v4105 = vld [vmem:[%s4097 + $0x38] sm:$0xff]
        %s4106 = scalar_lea.vmem %s77, 1
        %v4107 = vld [vmem:[%s4106] sm:$0x1]
        %v4109 = vperm.slane %v4107, 0
        %v4112 = vsel %vm1776, %v4096, 0
        %4114 = vmatpush.msra.mxu0 0.0
        %4115 = vmatpush.msra.mxu0 0.0
        %4116 = vmatpush.msra.mxu0 0.0
        %4117 = vmatpush.msra.mxu0 0.0
        %4118 = vmatpush.msra.mxu0 0.0
        %4119 = vmatpush.msra.mxu0 0.0
        %4120 = vmatpush.msra.mxu0 0.0
        %4121 = vmatpush.msra.mxu0 0.0
        %4122 = vmatpush.msra.mxu0 %v4105
        %4123 = vmatpush.msra.mxu0 %v4104
        %4124 = vmatpush.msra.mxu0 %v4103
        %4125 = vmatpush.msra.mxu0 %v4102
        %4126 = vmatpush.msra.mxu0 %v4101
        %4127 = vmatpush.msra.mxu0 %v4100
        %4128 = vmatpush.msra.mxu0 %v4099
        %4129 = vmatpush.msra.mxu0 %v4098
        %4130 = vmatmul.f32.gmra.mxu0 %v4112
        %v4131 = vpop.f32.mrf.mxu0
        %v4132 = vadd.f32 %v4109, %v4131
        %4133 = vdwg.mxu0
        %v4134 = vadd.f32 %v4025, %v4132
        %v4135 = vld [vmem:[%s79] sm:$0x1]
        %v4136 = vld [vmem:[%s81] sm:$0x1]
        %v4137 = vsel %vm1308, %v4134, 0.0
        %4138 = vadd.xlane.f32.xlu0 %v4137
        %v4139 = vpop.xlane.xlu0 %4138
        %v4140 = vmul.f32 %v4139, %v1318
        %v4141 = vsub.f32 %v4134, %v4140
        %v4142 = vmul.f32 %v4141, %v4141
        %v4143 = vsel %vm1308, %v4142, 0.0
        %4144 = vadd.xlane.f32.xlu0 %v4143
        %v4145 = vpop.xlane.xlu0 %4144
        %v4146 = vmul.f32 %v4145, 0.032258064
        %v4147 = vrsqrt.pop %v4146
        %v4148 = vmul.f32 %v4147, %v4146
        %v4149 = vmul.f32 %v4148, %v4147
        %v4150 = vmul.f32 0.5, %v4149
        %v4151 = vsub.f32 1.5, %v4150
        %v4152 = vmul.f32 %v4147, %v4151
        %v4153 = vmul.f32 %v4146, %v4152
        %vm4154 = vcmp.eq.f32.partialorder %v4146, inf
        %v4155 = vsel %vm4154, %v4146, %v4153
        %vm4156 = vcmp.eq.f32.partialorder %v4146, 0.0
        %v4157 = vand.u32 %v4146, 2147483648
        %v4158 = vsel %vm4156, %v4157, %v4155
        %v4159 = vadd.f32 %v4158, 1e-06
        %v4160 = vrcp.pop %v4159
        %v4161 = vmul.f32 %v4141, %v4160
        %v4163 = vperm.slane %v4135, 0
        %v4165 = vmul.f32 %v4163, %v4161
        %v4167 = vperm.slane %v4136, 0
        %v4169 = vadd.f32 %v4165, %v4167
        %4170 = vst.msk [vmem:[%s1281] sm:$0xff] %vm1308, %v4169
        %s4171 = sand.u32 %s991, 1
        %s4172 = scalar_lea.sflag [#allocation3], %s4171
        %s4173 = sand.u32 %s991, 1
        %s4174 = smul.addr %s4173, 8
        %s4175 = scalar_lea.vmem [#allocation2], %s4174
        // Predicated region
        $region185: #{encoder_decoder_forward.1} parent=183 // pred_check
          %p4176 = pneg %p1001
        $region186: #{encoder_decoder_forward.1} parent=183 // pred_check_branch
          %4178 = sbr.rel (%p4176) target = $region188
        $region187: #{encoder_decoder_forward.1} parent=183 // pred_region
          %4180 = vsyncadd %s4172, 0
          %s4181 = smul.addr %s97, 8
          %s4182 = scalar_lea.hbm %s83, %s4181
          %s4184 = sshll.u32 %s4175, 4
          %s4185 = int_to_ptr.vmem [resolvable:$true] %s4184
          %s4186 = sshll.u32 %s4182, 4
          %s4187 = int_to_ptr.hbm [resolvable:$true] %s4186
          %4189 = dma.vmem_to_hbm [thread:$0]  %s4185, 128, %s4187, %s4172
        $region188: #{encoder_decoder_forward.1} parent=183 // pred_fallthru
          _
      $region184: #{encoder_decoder_forward.1} parent=5 // pred_fallthru
        _
      %p4190 = scmp.le.s32.totalorder 2, %s92
      // Predicated region
      $region189: #{encoder_decoder_forward.1} parent=5 // pred_check
        %p4191 = pneg %p4190
      $region190: #{encoder_decoder_forward.1} parent=5 // pred_check_branch
        %4193 = sbr.rel (%p4191) target = $region192
      $region191: #{encoder_decoder_forward.1} parent=5 // pred_region
        %s4194 = ssub.s32 %s92, 2
        // Predicated region
        $region193: #{encoder_decoder_forward.1} parent=191 // pred_check
          %p4195 = pneg %p1007
        $region194: #{encoder_decoder_forward.1} parent=191 // pred_check_branch
          %4197 = sbr.rel (%p4195) target = $region196
        $region195: #{encoder_decoder_forward.1} parent=191 // pred_region
          %s4198 = sand.u32 %s992, 1
          %s4199 = scalar_lea.sflag [#allocation3], %s4198
          %s4200 = sand.u32 %s992, 1
          %s4201 = smul.addr %s4200, 8
          %s4202 = scalar_lea.vmem [#allocation2], %s4201
          %4204 = dma.done %s4199, 128
        $region196: #{encoder_decoder_forward.1} parent=191 // pred_fallthru
          _
      $region192: #{encoder_decoder_forward.1} parent=5 // pred_fallthru
        _
    $region6: #{encoder_decoder_forward.1} parent=1 // loop_footer
      %s96 = sadd.s32 1, %s92
    $region7: #{encoder_decoder_forward.1} parent=1 // loop_footer_branch
      %91 = sbr.rel target = $region3
    $region8: #{encoder_decoder_forward.1} parent=1 // loop_exit
      _
    %4205 = vsyncpa [#allocation3], 1
    %s4206 = scalar_lea.sflag [#allocation3], 1
    %4207 = vsyncpa %s4206, 1

</llo_original>
